<compile_context>
chip_gen: v7x
topology: tpu7x:2x2x1
jax: 0.10.0
libtpu: 0.0.40
codegen_flags: <defaults>
</compile_context>

<pallas_src>
import jax
import jax.numpy as jnp
from jax import lax
from jax.experimental import pallas as pl
from jax.experimental.pallas import tpu as pltpu

_PADL = 8     # left pad rows in the activation scratch (>= filter_size//2, multiple of 8)
_TL = 256     # output-row tile along the length axis (matches 256-row MXU on v6e/v7x)
_HALO = 16    # extra rows per halo slab so every tap slice stays inside one aligned load


def _make_kernel(L, NF, FS, LPBUF, ntiles):
    base = _PADL - FS // 2                  # scratch-row offset of conv tap 0
    RZ = ((_PADL + L) // 8) * 8             # aligned start of the right pad-fill region

    def kernel(aux_ref, x_ref,
               w1_ref, b1_ref, pad1_ref,
               w2_ref, b2_ref, pad2_ref,
               w3_ref, b3_ref, s3_ref, t3_ref,
               lw1m_ref, lw1a_ref, lb1_ref, lw2_ref, lb2_ref,
               out_ref, buf_a, buf_b):
        # Fill only the pad/halo rows with the per-buffer constant (-shift/scale) that
        # makes the host-side BatchNorm folding exact at the sequence boundaries.
        # Interior rows are always fully overwritten before the next layer reads them.
        for buf, pref in ((buf_a, pad1_ref), (buf_b, pad2_ref)):
            buf[0:_PADL, :] = jnp.broadcast_to(pref[...], (_PADL, NF))
            buf[RZ:LPBUF, :] = jnp.broadcast_to(pref[...], (LPBUF - RZ, NF))

        # ---- conv1: host-side im2col -> one (TL,K1)@(K1,NF) bf16 dot per tile -> ReLU
        for ti in range(ntiles):
            rs = ti * _TL
            rows = min(_TL, L - rs)
            acc = jnp.dot(x_ref[rs:rs + _TL, :], w1_ref[...],
                          preferred_element_type=jnp.float32)
            y = jnp.maximum(acc + b1_ref[...], 0.0)
            buf_a[_PADL + rs:_PADL + rs + rows, :] = y[:rows, :]

        def conv_fused(src, w_ref, b_ref, dst, s_ref=None, t_ref=None):
            """Conv1d('same', previous BN folded into weights/bias) -> ReLU.
            dst=None: apply BN3 affine and return the running length-max instead."""
            mx = jnp.full((1, NF), -jnp.inf, dtype=jnp.float32)
            for ti in range(ntiles):
                rs = ti * _TL
                rows = min(_TL, L - rs)
                v = src[rs:rs + _TL + _HALO, :]        # one aligned halo load per tile
                lhs = jnp.concatenate(                 # in-register im2col, K = FS*NF
                    [v[base + k:base + k + _TL, :].astype(jnp.bfloat16)
                     for k in range(FS)], axis=1)
                acc = jnp.dot(lhs, w_ref[...], preferred_element_type=jnp.float32)
                y = jnp.maximum(acc + b_ref[...], 0.0)
                if dst is None:
                    y = y * s_ref[...] + t_ref[...]    # BN3: max doesn't commute with it
                    mx = jnp.maximum(mx, jnp.max(y[:rows, :], axis=0, keepdims=True))
                else:
                    dst[_PADL + rs:_PADL + rs + rows, :] = y[:rows, :]
            return mx

        conv_fused(buf_a, w2_ref, b2_ref, buf_b)
        feat = conv_fused(buf_b, w3_ref, b3_ref, None, s3_ref, t3_ref)

        # ---- head: concat([max-pool, aux]) -> Linear(65,64) -> ReLU -> Linear(64,1)
        h = jnp.dot(feat, lw1m_ref[...], preferred_element_type=jnp.float32)
        h = h + aux_ref[...] * lw1a_ref[...] + lb1_ref[...]
        h = jnp.maximum(h, 0.0)
        out_ref[...] = jnp.sum(h * lw2_ref[...], axis=1, keepdims=True) + lb2_ref[...]

    return kernel


def pallas_net_forward(x, x_aux, noise, params, gauss_rate):
    """x, noise: (B, 2, L) NCL (PyTorch layout); x_aux: (B, 1)."""
    B, CIN, L = x.shape
    w1 = params["conv1_w"]
    NF, _, FS = w1.shape
    P = FS // 2
    assert FS % 2 == 1 and P <= _PADL
    assert (_PADL - P) + FS - 1 + _TL <= _TL + _HALO
    ntiles = -(-L // _TL)
    LP = ntiles * _TL
    LPBUF = LP + _HALO
    assert LPBUF >= _PADL + L + P
    K1 = -(-(FS * CIN) // 8) * 8
    eps = 1e-5
    f32, bf16 = jnp.float32, jnp.bfloat16

    def bn_affine(i):
        s = params[f"conv{i}_bn_g"].astype(f32) / jnp.sqrt(
            params[f"conv{i}_bn_v"].astype(f32) + eps)
        t = params[f"conv{i}_bn_b"].astype(f32) - params[f"conv{i}_bn_m"].astype(f32) * s
        return s, t

    s1, t1 = bn_affine(1)
    s2, t2 = bn_affine(2)
    s3, t3 = bn_affine(3)

    def edge_pad(s, t):   # pad value that makes the BN fold exact at sequence edges
        return (-(t / jnp.where(jnp.abs(s) < 1e-12, 1.0, s))).reshape(1, NF).astype(f32)

    # conv1: im2col weight layout (K1, NF); no preceding BN to fold.
    w1t = jnp.transpose(w1.astype(f32), (2, 1, 0)).reshape(FS * CIN, NF)
    w1p = jnp.pad(w1t, ((0, K1 - FS * CIN), (0, 0))).astype(bf16)
    b1 = params["conv1_b"].astype(f32).reshape(1, NF)

    # conv2/conv3: fold the previous layer's (eval-mode) BatchNorm affine into the conv
    # weights (scale per input channel) and bias (shift), flatten taps into one K=FS*NF.
    def prep_folded(prefix, s_prev, t_prev):
        w = params[f"{prefix}_w"].astype(f32)                       # (NF, NF_in, FS)
        bias = params[f"{prefix}_b"].astype(f32) + jnp.einsum("ock,c->o", w, t_prev)
        wt = jnp.transpose(w * s_prev[None, :, None], (2, 1, 0))    # (FS, NF_in, NF)
        return wt.reshape(FS * NF, NF).astype(bf16), bias.reshape(1, NF)

    w2p, b2p = prep_folded("conv2", s1, t1)
    w3p, b3p = prep_folded("conv3", s2, t2)
    pad1 = edge_pad(s1, t1)
    pad2 = edge_pad(s2, t2)

    # Gaussian noise fused host-side, then im2col so conv1 is a single dot per tile.
    xn = jnp.transpose((x + gauss_rate * noise).astype(f32), (0, 2, 1))    # (B, L, CIN)
    xz = jnp.pad(xn, ((0, 0), (P, P), (0, 0)))
    xim = jnp.concatenate([xz[:, k:k + L, :] for k in range(FS)], axis=2)  # (B, L, FS*CIN)
    xim = jnp.pad(xim, ((0, 0), (0, LP - L), (0, K1 - FS * CIN))).astype(bf16)

    aux = x_aux.astype(f32).reshape(B, 1, 1)
    lr1w = params["lr1_w"].astype(f32)                   # (64, NF + 1)
    lw1m = lr1w[:, :NF].T                                # (NF, 64)
    lw1a = lr1w[:, NF:].T                                # (1, 64)   aux column
    lb1 = params["lr1_b"].astype(f32).reshape(1, -1)
    lw2 = params["lr2_w"].astype(f32)                    # (1, 64)
    lb2 = params["lr2_b"].astype(f32).reshape(1, 1)

    weights = [w1p, b1, pad1, w2p, b2p, pad2, w3p, b3p,
               s3.reshape(1, NF), t3.reshape(1, NF), lw1m, lw1a, lb1, lw2, lb2]

    def const_spec(a):
        zeros = (0,) * a.ndim
        return pl.BlockSpec(a.shape, lambda b, z=zeros: z)

    kernel = _make_kernel(L, NF, FS, LPBUF, ntiles)

    out = pl.pallas_call(
        kernel,
        out_shape=jax.ShapeDtypeStruct((B, 1, 1), jnp.float32),
        grid=(B,),
        in_specs=[pl.BlockSpec((None, 1, 1), lambda b: (b, 0, 0)),     # x_aux
                  pl.BlockSpec((None, LP, K1), lambda b: (b, 0, 0))]   # im2col'd noisy x
                 + [const_spec(w) for w in weights],
        out_specs=pl.BlockSpec((None, 1, 1), lambda b: (b, 0, 0)),
        scratch_shapes=[pltpu.VMEM((LPBUF, NF), jnp.float32),          # conv1 output (ping)
                        pltpu.VMEM((LPBUF, NF), jnp.float32)],         # conv2 output (pong)
        compiler_params=pltpu.CompilerParams(
            dimension_semantics=("parallel",)),
    )(aux, xim, *weights)
    return out.reshape(B, 1)


def ref_forward(x, x_aux, noise, params, gauss_rate):
    """Pure-JAX reference of Net.forward (eval mode)."""
    a = x + gauss_rate * noise
    eps = 1e-5
    for i in (1, 2, 3):
        w, b = params[f"conv{i}_w"], params[f"conv{i}_b"]
        P = w.shape[2] // 2
        a = lax.conv_general_dilated(a, w, window_strides=(1,), padding=[(P, P)],
                                     dimension_numbers=("NCH", "OIH", "NCH"),
                                     precision=lax.Precision.HIGHEST)
        a = a + b[None, :, None]
        a = jnp.maximum(a, 0.0)
        g_, be = params[f"conv{i}_bn_g"], params[f"conv{i}_bn_b"]
        m, v = params[f"conv{i}_bn_m"], params[f"conv{i}_bn_v"]
        a = (a - m[None, :, None]) / jnp.sqrt(v[None, :, None] + eps) * g_[None, :, None] \
            + be[None, :, None]
    feat = jnp.max(a, axis=2)
    z = jnp.concatenate([feat, x_aux], axis=1)
    h = jnp.maximum(jnp.dot(z, params["lr1_w"].T, precision=lax.Precision.HIGHEST)
                    + params["lr1_b"], 0.0)
    return jnp.dot(h, params["lr2_w"].T, precision=lax.Precision.HIGHEST) + params["lr2_b"]


def init_params(key, n_filter, filter_size, aux_dim=1):
    ks = iter(jax.random.split(key, 32))
    nrm = lambda shape, scale: scale * jax.random.normal(next(ks), shape, jnp.float32)
    p = {}
    cin = 2
    for i in (1, 2, 3):
        p[f"conv{i}_w"] = nrm((n_filter, cin, filter_size), 0.15)
        p[f"conv{i}_b"] = nrm((n_filter,), 0.05)
        p[f"conv{i}_bn_g"] = 1.0 + nrm((n_filter,), 0.1)
        p[f"conv{i}_bn_b"] = nrm((n_filter,), 0.1)
        p[f"conv{i}_bn_m"] = nrm((n_filter,), 0.1)
        p[f"conv{i}_bn_v"] = 1.0 + 0.2 * jnp.abs(
            jax.random.normal(next(ks), (n_filter,), jnp.float32))
        cin = n_filter
    p["lr1_w"] = nrm((64, n_filter + aux_dim), 0.1)
    p["lr1_b"] = nrm((64,), 0.05)
    p["lr2_w"] = nrm((1, 64), 0.1)
    p["lr2_b"] = nrm((1,), 0.05)
    return p


if __name__ == "__main__":
    B, CIN, L = 2, 2, 511          # forward hard-codes (B, 2, 511)
    NF, FS = 64, 5                 # n_filter=64 + aux_dim=1 -> Linear(65, 64)
    GAUSS_RATE = 0.1

    key = jax.random.PRNGKey(0)
    kx, ka, kn, kp = jax.random.split(key, 4)
    x = jax.random.normal(kx, (B, CIN, L), jnp.float32)
    x_aux = jax.random.normal(ka, (B, 1), jnp.float32)
    noise = jax.random.normal(kn, (B, CIN, L), jnp.float32)   # stands in for torch.randn
    params = init_params(kp, NF, FS)

    out = jax.block_until_ready(pallas_net_forward(x, x_aux, noise, params, GAUSS_RATE))
    ref = ref_forward(x, x_aux, noise, params, GAUSS_RATE)
    assert out.shape == (B, 1)
    assert bool(jnp.all(jnp.isfinite(out)))
    assert bool(jnp.allclose(out, ref, rtol=2e-2, atol=2e-2)), (out, ref)
    print("KERNEL_OK")
</pallas_src>

<mosaic_0001>
module attributes {stable_mosaic.version = 11 : i64} {
  func.func @kernel(%arg0: i32, %arg1: memref<1x1x1xf32, #tpu.memory_space<vmem>>, %arg2: memref<1x512x16xbf16, #tpu.memory_space<vmem>>, %arg3: memref<16x64xbf16, #tpu.memory_space<vmem>>, %arg4: memref<1x64xf32, #tpu.memory_space<vmem>>, %arg5: memref<1x64xf32, #tpu.memory_space<vmem>>, %arg6: memref<320x64xbf16, #tpu.memory_space<vmem>>, %arg7: memref<1x64xf32, #tpu.memory_space<vmem>>, %arg8: memref<1x64xf32, #tpu.memory_space<vmem>>, %arg9: memref<320x64xbf16, #tpu.memory_space<vmem>>, %arg10: memref<1x64xf32, #tpu.memory_space<vmem>>, %arg11: memref<1x64xf32, #tpu.memory_space<vmem>>, %arg12: memref<1x64xf32, #tpu.memory_space<vmem>>, %arg13: memref<64x64xf32, #tpu.memory_space<vmem>>, %arg14: memref<1x64xf32, #tpu.memory_space<vmem>>, %arg15: memref<1x64xf32, #tpu.memory_space<vmem>>, %arg16: memref<1x64xf32, #tpu.memory_space<vmem>>, %arg17: memref<1x1xf32, #tpu.memory_space<vmem>>, %arg18: memref<1x1x1xf32, #tpu.memory_space<vmem>>, %arg19: memref<528x64xf32, #tpu.memory_space<vmem>>, %arg20: memref<528x64xf32, #tpu.memory_space<vmem>>) attributes {dimension_semantics = [#tpu.dimension_semantics<parallel>], iteration_bounds = array<i64: 2>, scalar_prefetch = 0 : i64, scratch_operands = 2 : i64, tpu.core_type = #tpu.core_type<tc>, window_params = [{transform_indices = @transform_0, window_bounds = array<i64: 1, 1, 1>}, {transform_indices = @transform_1, window_bounds = array<i64: 1, 512, 16>}, {pipeline_mode = #tpu.pipeline_mode<synchronous>, transform_indices = @transform_2, window_bounds = array<i64: 16, 64>}, {pipeline_mode = #tpu.pipeline_mode<synchronous>, transform_indices = @transform_3, window_bounds = array<i64: 1, 64>}, {pipeline_mode = #tpu.pipeline_mode<synchronous>, transform_indices = @transform_4, window_bounds = array<i64: 1, 64>}, {pipeline_mode = #tpu.pipeline_mode<synchronous>, transform_indices = @transform_5, window_bounds = array<i64: 320, 64>}, {pipeline_mode = #tpu.pipeline_mode<synchronous>, transform_indices = @transform_6, window_bounds = array<i64: 1, 64>}, {pipeline_mode = #tpu.pipeline_mode<synchronous>, transform_indices = @transform_7, window_bounds = array<i64: 1, 64>}, {pipeline_mode = #tpu.pipeline_mode<synchronous>, transform_indices = @transform_8, window_bounds = array<i64: 320, 64>}, {pipeline_mode = #tpu.pipeline_mode<synchronous>, transform_indices = @transform_9, window_bounds = array<i64: 1, 64>}, {pipeline_mode = #tpu.pipeline_mode<synchronous>, transform_indices = @transform_10, window_bounds = array<i64: 1, 64>}, {pipeline_mode = #tpu.pipeline_mode<synchronous>, transform_indices = @transform_11, window_bounds = array<i64: 1, 64>}, {pipeline_mode = #tpu.pipeline_mode<synchronous>, transform_indices = @transform_12, window_bounds = array<i64: 64, 64>}, {pipeline_mode = #tpu.pipeline_mode<synchronous>, transform_indices = @transform_13, window_bounds = array<i64: 1, 64>}, {pipeline_mode = #tpu.pipeline_mode<synchronous>, transform_indices = @transform_14, window_bounds = array<i64: 1, 64>}, {pipeline_mode = #tpu.pipeline_mode<synchronous>, transform_indices = @transform_15, window_bounds = array<i64: 1, 64>}, {pipeline_mode = #tpu.pipeline_mode<synchronous>, transform_indices = @transform_16, window_bounds = array<i64: 1, 1>}, {transform_indices = @transform_17, window_bounds = array<i64: 1, 1, 1>}]} {
    %c0 = arith.constant 0 : index
    %c0_0 = arith.constant 0 : index
    %0 = vector.load %arg5[%c0, %c0_0] : memref<1x64xf32, #tpu.memory_space<vmem>>, vector<1x64xf32>
    %1 = vector.shape_cast %0 : vector<1x64xf32> to vector<1x64xf32>
    %2 = vector.broadcast %1 : vector<1x64xf32> to vector<8x64xf32>
    %c0_1 = arith.constant 0 : index
    %c0_2 = arith.constant 0 : index
    %3 = vector.load %arg19[%c0_1, %c0_2] : memref<528x64xf32, #tpu.memory_space<vmem>>, vector<8x64xf32>
    tpu.vector_store %arg19[%c0_1, %c0_2], %2 {strides = array<i32>} : memref<528x64xf32, #tpu.memory_space<vmem>>, vector<8x64xf32>,
    %c0_3 = arith.constant 0 : index
    %c0_4 = arith.constant 0 : index
    %4 = vector.load %arg5[%c0_3, %c0_4] : memref<1x64xf32, #tpu.memory_space<vmem>>, vector<1x64xf32>
    %5 = vector.shape_cast %4 : vector<1x64xf32> to vector<1x64xf32>
    %6 = vector.broadcast %5 : vector<1x64xf32> to vector<16x64xf32>
    %c512 = arith.constant 512 : index
    %c0_5 = arith.constant 0 : index
    %7 = vector.load %arg19[%c512, %c0_5] : memref<528x64xf32, #tpu.memory_space<vmem>>, vector<16x64xf32>
    tpu.vector_store %arg19[%c512, %c0_5], %6 {strides = array<i32>} : memref<528x64xf32, #tpu.memory_space<vmem>>, vector<16x64xf32>,
    %c0_6 = arith.constant 0 : index
    %c0_7 = arith.constant 0 : index
    %8 = vector.load %arg8[%c0_6, %c0_7] : memref<1x64xf32, #tpu.memory_space<vmem>>, vector<1x64xf32>
    %9 = vector.shape_cast %8 : vector<1x64xf32> to vector<1x64xf32>
    %10 = vector.broadcast %9 : vector<1x64xf32> to vector<8x64xf32>
    %c0_8 = arith.constant 0 : index
    %c0_9 = arith.constant 0 : index
    %11 = vector.load %arg20[%c0_8, %c0_9] : memref<528x64xf32, #tpu.memory_space<vmem>>, vector<8x64xf32>
    tpu.vector_store %arg20[%c0_8, %c0_9], %10 {strides = array<i32>} : memref<528x64xf32, #tpu.memory_space<vmem>>, vector<8x64xf32>,
    %c0_10 = arith.constant 0 : index
    %c0_11 = arith.constant 0 : index
    %12 = vector.load %arg8[%c0_10, %c0_11] : memref<1x64xf32, #tpu.memory_space<vmem>>, vector<1x64xf32>
    %13 = vector.shape_cast %12 : vector<1x64xf32> to vector<1x64xf32>
    %14 = vector.broadcast %13 : vector<1x64xf32> to vector<16x64xf32>
    %c512_12 = arith.constant 512 : index
    %c0_13 = arith.constant 0 : index
    %15 = vector.load %arg20[%c512_12, %c0_13] : memref<528x64xf32, #tpu.memory_space<vmem>>, vector<16x64xf32>
    tpu.vector_store %arg20[%c512_12, %c0_13], %14 {strides = array<i32>} : memref<528x64xf32, #tpu.memory_space<vmem>>, vector<16x64xf32>,
    %c0_14 = arith.constant 0 : index
    %c0_15 = arith.constant 0 : index
    %c0_16 = arith.constant 0 : index
    %16 = vector.load %arg2[%c0_14, %c0_15, %c0_16] : memref<1x512x16xbf16, #tpu.memory_space<vmem>>, vector<1x256x16xbf16>
    %17 = vector.shape_cast %16 : vector<1x256x16xbf16> to vector<256x16xbf16>
    %c0_17 = arith.constant 0 : index
    %c0_18 = arith.constant 0 : index
    %18 = vector.load %arg3[%c0_17, %c0_18] : memref<16x64xbf16, #tpu.memory_space<vmem>>, vector<16x64xbf16>
    %cst = arith.constant dense<0.000000e+00> : vector<256x64xf32>
    %19 = tpu.matmul %17, %18, %cst {dimension_numbers = #tpu.dot_dimension_numbers<[1], [0], [0], [1], [0, 0, 1, 1], [], []>} : vector<256x16xbf16>, vector<16x64xbf16>, vector<256x64xf32> -> vector<256x64xf32>
    %c0_19 = arith.constant 0 : index
    %c0_20 = arith.constant 0 : index
    %20 = vector.load %arg4[%c0_19, %c0_20] : memref<1x64xf32, #tpu.memory_space<vmem>>, vector<1x64xf32>
    %21 = vector.broadcast %20 : vector<1x64xf32> to vector<256x64xf32>
    %22 = arith.addf %19, %21 : vector<256x64xf32>
    %cst_21 = arith.constant 0.000000e+00 : f32
    %23 = vector.broadcast %cst_21 : f32 to vector<256x64xf32>
    %24 = arith.maximumf %22, %23 : vector<256x64xf32>
    %c8 = arith.constant 8 : index
    %c0_22 = arith.constant 0 : index
    %25 = vector.load %arg19[%c8, %c0_22] : memref<528x64xf32, #tpu.memory_space<vmem>>, vector<256x64xf32>
    tpu.vector_store %arg19[%c8, %c0_22], %24 {strides = array<i32>} : memref<528x64xf32, #tpu.memory_space<vmem>>, vector<256x64xf32>,
    %c0_23 = arith.constant 0 : index
    %c256 = arith.constant 256 : index
    %c0_24 = arith.constant 0 : index
    %26 = vector.load %arg2[%c0_23, %c256, %c0_24] : memref<1x512x16xbf16, #tpu.memory_space<vmem>>, vector<1x256x16xbf16>
    %27 = vector.shape_cast %26 : vector<1x256x16xbf16> to vector<256x16xbf16>
    %c0_25 = arith.constant 0 : index
    %c0_26 = arith.constant 0 : index
    %28 = vector.load %arg3[%c0_25, %c0_26] : memref<16x64xbf16, #tpu.memory_space<vmem>>, vector<16x64xbf16>
    %cst_27 = arith.constant dense<0.000000e+00> : vector<256x64xf32>
    %29 = tpu.matmul %27, %28, %cst_27 {dimension_numbers = #tpu.dot_dimension_numbers<[1], [0], [0], [1], [0, 0, 1, 1], [], []>} : vector<256x16xbf16>, vector<16x64xbf16>, vector<256x64xf32> -> vector<256x64xf32>
    %c0_28 = arith.constant 0 : index
    %c0_29 = arith.constant 0 : index
    %30 = vector.load %arg4[%c0_28, %c0_29] : memref<1x64xf32, #tpu.memory_space<vmem>>, vector<1x64xf32>
    %31 = vector.broadcast %30 : vector<1x64xf32> to vector<256x64xf32>
    %32 = arith.addf %29, %31 : vector<256x64xf32>
    %cst_30 = arith.constant 0.000000e+00 : f32
    %33 = vector.broadcast %cst_30 : f32 to vector<256x64xf32>
    %34 = arith.maximumf %32, %33 : vector<256x64xf32>
    %35 = vector.extract_strided_slice %34 {offsets = [0, 0], sizes = [255, 64], strides = [1, 1]} : vector<256x64xf32> to vector<255x64xf32>
    %c264 = arith.constant 264 : index
    %c0_31 = arith.constant 0 : index
    %36 = vector.load %arg19[%c264, %c0_31] : memref<528x64xf32, #tpu.memory_space<vmem>>, vector<255x64xf32>
    tpu.vector_store %arg19[%c264, %c0_31], %35 {strides = array<i32>} : memref<528x64xf32, #tpu.memory_space<vmem>>, vector<255x64xf32>,
    %c0_32 = arith.constant 0 : index
    %c0_33 = arith.constant 0 : index
    %37 = vector.load %arg19[%c0_32, %c0_33] : memref<528x64xf32, #tpu.memory_space<vmem>>, vector<272x64xf32>
    %38 = vector.extract_strided_slice %37 {offsets = [6, 0], sizes = [256, 64], strides = [1, 1]} : vector<272x64xf32> to vector<256x64xf32>
    %39 = arith.truncf %38 : vector<256x64xf32> to vector<256x64xbf16>
    %40 = vector.extract_strided_slice %37 {offsets = [7, 0], sizes = [256, 64], strides = [1, 1]} : vector<272x64xf32> to vector<256x64xf32>
    %41 = arith.truncf %40 : vector<256x64xf32> to vector<256x64xbf16>
    %42 = vector.extract_strided_slice %37 {offsets = [8, 0], sizes = [256, 64], strides = [1, 1]} : vector<272x64xf32> to vector<256x64xf32>
    %43 = arith.truncf %42 : vector<256x64xf32> to vector<256x64xbf16>
    %44 = vector.extract_strided_slice %37 {offsets = [9, 0], sizes = [256, 64], strides = [1, 1]} : vector<272x64xf32> to vector<256x64xf32>
    %45 = arith.truncf %44 : vector<256x64xf32> to vector<256x64xbf16>
    %46 = vector.extract_strided_slice %37 {offsets = [10, 0], sizes = [256, 64], strides = [1, 1]} : vector<272x64xf32> to vector<256x64xf32>
    %47 = arith.truncf %46 : vector<256x64xf32> to vector<256x64xbf16>
    %48 = tpu.concatenate %39, %41, %43, %45, %47 in 1 : vector<256x64xbf16>, vector<256x64xbf16>, vector<256x64xbf16>, vector<256x64xbf16>, vector<256x64xbf16> -> vector<256x320xbf16>
    %c0_34 = arith.constant 0 : index
    %c0_35 = arith.constant 0 : index
    %49 = vector.load %arg6[%c0_34, %c0_35] : memref<320x64xbf16, #tpu.memory_space<vmem>>, vector<320x64xbf16>
    %cst_36 = arith.constant dense<0.000000e+00> : vector<256x64xf32>
    %50 = tpu.matmul %48, %49, %cst_36 {dimension_numbers = #tpu.dot_dimension_numbers<[1], [0], [0], [1], [0, 0, 1, 1], [], []>} : vector<256x320xbf16>, vector<320x64xbf16>, vector<256x64xf32> -> vector<256x64xf32>
    %c0_37 = arith.constant 0 : index
    %c0_38 = arith.constant 0 : index
    %51 = vector.load %arg7[%c0_37, %c0_38] : memref<1x64xf32, #tpu.memory_space<vmem>>, vector<1x64xf32>
    %52 = vector.broadcast %51 : vector<1x64xf32> to vector<256x64xf32>
    %53 = arith.addf %50, %52 : vector<256x64xf32>
    %cst_39 = arith.constant 0.000000e+00 : f32
    %54 = vector.broadcast %cst_39 : f32 to vector<256x64xf32>
    %55 = arith.maximumf %53, %54 : vector<256x64xf32>
    %c8_40 = arith.constant 8 : index
    %c0_41 = arith.constant 0 : index
    %56 = vector.load %arg20[%c8_40, %c0_41] : memref<528x64xf32, #tpu.memory_space<vmem>>, vector<256x64xf32>
    tpu.vector_store %arg20[%c8_40, %c0_41], %55 {strides = array<i32>} : memref<528x64xf32, #tpu.memory_space<vmem>>, vector<256x64xf32>,
    %c256_42 = arith.constant 256 : index
    %c0_43 = arith.constant 0 : index
    %57 = vector.load %arg19[%c256_42, %c0_43] : memref<528x64xf32, #tpu.memory_space<vmem>>, vector<272x64xf32>
    %58 = vector.extract_strided_slice %57 {offsets = [6, 0], sizes = [256, 64], strides = [1, 1]} : vector<272x64xf32> to vector<256x64xf32>
    %59 = arith.truncf %58 : vector<256x64xf32> to vector<256x64xbf16>
    %60 = vector.extract_strided_slice %57 {offsets = [7, 0], sizes = [256, 64], strides = [1, 1]} : vector<272x64xf32> to vector<256x64xf32>
    %61 = arith.truncf %60 : vector<256x64xf32> to vector<256x64xbf16>
    %62 = vector.extract_strided_slice %57 {offsets = [8, 0], sizes = [256, 64], strides = [1, 1]} : vector<272x64xf32> to vector<256x64xf32>
    %63 = arith.truncf %62 : vector<256x64xf32> to vector<256x64xbf16>
    %64 = vector.extract_strided_slice %57 {offsets = [9, 0], sizes = [256, 64], strides = [1, 1]} : vector<272x64xf32> to vector<256x64xf32>
    %65 = arith.truncf %64 : vector<256x64xf32> to vector<256x64xbf16>
    %66 = vector.extract_strided_slice %57 {offsets = [10, 0], sizes = [256, 64], strides = [1, 1]} : vector<272x64xf32> to vector<256x64xf32>
    %67 = arith.truncf %66 : vector<256x64xf32> to vector<256x64xbf16>
    %68 = tpu.concatenate %59, %61, %63, %65, %67 in 1 : vector<256x64xbf16>, vector<256x64xbf16>, vector<256x64xbf16>, vector<256x64xbf16>, vector<256x64xbf16> -> vector<256x320xbf16>
    %c0_44 = arith.constant 0 : index
    %c0_45 = arith.constant 0 : index
    %69 = vector.load %arg6[%c0_44, %c0_45] : memref<320x64xbf16, #tpu.memory_space<vmem>>, vector<320x64xbf16>
    %cst_46 = arith.constant dense<0.000000e+00> : vector<256x64xf32>
    %70 = tpu.matmul %68, %69, %cst_46 {dimension_numbers = #tpu.dot_dimension_numbers<[1], [0], [0], [1], [0, 0, 1, 1], [], []>} : vector<256x320xbf16>, vector<320x64xbf16>, vector<256x64xf32> -> vector<256x64xf32>
    %c0_47 = arith.constant 0 : index
    %c0_48 = arith.constant 0 : index
    %71 = vector.load %arg7[%c0_47, %c0_48] : memref<1x64xf32, #tpu.memory_space<vmem>>, vector<1x64xf32>
    %72 = vector.broadcast %71 : vector<1x64xf32> to vector<256x64xf32>
    %73 = arith.addf %70, %72 : vector<256x64xf32>
    %cst_49 = arith.constant 0.000000e+00 : f32
    %74 = vector.broadcast %cst_49 : f32 to vector<256x64xf32>
    %75 = arith.maximumf %73, %74 : vector<256x64xf32>
    %76 = vector.extract_strided_slice %75 {offsets = [0, 0], sizes = [255, 64], strides = [1, 1]} : vector<256x64xf32> to vector<255x64xf32>
    %c264_50 = arith.constant 264 : index
    %c0_51 = arith.constant 0 : index
    %77 = vector.load %arg20[%c264_50, %c0_51] : memref<528x64xf32, #tpu.memory_space<vmem>>, vector<255x64xf32>
    tpu.vector_store %arg20[%c264_50, %c0_51], %76 {strides = array<i32>} : memref<528x64xf32, #tpu.memory_space<vmem>>, vector<255x64xf32>,
    %cst_52 = arith.constant 0xFF800000 : f32
    %78 = vector.broadcast %cst_52 : f32 to vector<1x64xf32>
    %c0_53 = arith.constant 0 : index
    %c0_54 = arith.constant 0 : index
    %79 = vector.load %arg20[%c0_53, %c0_54] : memref<528x64xf32, #tpu.memory_space<vmem>>, vector<272x64xf32>
    %80 = vector.extract_strided_slice %79 {offsets = [6, 0], sizes = [256, 64], strides = [1, 1]} : vector<272x64xf32> to vector<256x64xf32>
    %81 = arith.truncf %80 : vector<256x64xf32> to vector<256x64xbf16>
    %82 = vector.extract_strided_slice %79 {offsets = [7, 0], sizes = [256, 64], strides = [1, 1]} : vector<272x64xf32> to vector<256x64xf32>
    %83 = arith.truncf %82 : vector<256x64xf32> to vector<256x64xbf16>
    %84 = vector.extract_strided_slice %79 {offsets = [8, 0], sizes = [256, 64], strides = [1, 1]} : vector<272x64xf32> to vector<256x64xf32>
    %85 = arith.truncf %84 : vector<256x64xf32> to vector<256x64xbf16>
    %86 = vector.extract_strided_slice %79 {offsets = [9, 0], sizes = [256, 64], strides = [1, 1]} : vector<272x64xf32> to vector<256x64xf32>
    %87 = arith.truncf %86 : vector<256x64xf32> to vector<256x64xbf16>
    %88 = vector.extract_strided_slice %79 {offsets = [10, 0], sizes = [256, 64], strides = [1, 1]} : vector<272x64xf32> to vector<256x64xf32>
    %89 = arith.truncf %88 : vector<256x64xf32> to vector<256x64xbf16>
    %90 = tpu.concatenate %81, %83, %85, %87, %89 in 1 : vector<256x64xbf16>, vector<256x64xbf16>, vector<256x64xbf16>, vector<256x64xbf16>, vector<256x64xbf16> -> vector<256x320xbf16>
    %c0_55 = arith.constant 0 : index
    %c0_56 = arith.constant 0 : index
    %91 = vector.load %arg9[%c0_55, %c0_56] : memref<320x64xbf16, #tpu.memory_space<vmem>>, vector<320x64xbf16>
    %cst_57 = arith.constant dense<0.000000e+00> : vector<256x64xf32>
    %92 = tpu.matmul %90, %91, %cst_57 {dimension_numbers = #tpu.dot_dimension_numbers<[1], [0], [0], [1], [0, 0, 1, 1], [], []>} : vector<256x320xbf16>, vector<320x64xbf16>, vector<256x64xf32> -> vector<256x64xf32>
    %c0_58 = arith.constant 0 : index
    %c0_59 = arith.constant 0 : index
    %93 = vector.load %arg10[%c0_58, %c0_59] : memref<1x64xf32, #tpu.memory_space<vmem>>, vector<1x64xf32>
    %94 = vector.broadcast %93 : vector<1x64xf32> to vector<256x64xf32>
    %95 = arith.addf %92, %94 : vector<256x64xf32>
    %cst_60 = arith.constant 0.000000e+00 : f32
    %96 = vector.broadcast %cst_60 : f32 to vector<256x64xf32>
    %97 = arith.maximumf %95, %96 : vector<256x64xf32>
    %c0_61 = arith.constant 0 : index
    %c0_62 = arith.constant 0 : index
    %98 = vector.load %arg11[%c0_61, %c0_62] : memref<1x64xf32, #tpu.memory_space<vmem>>, vector<1x64xf32>
    %99 = vector.broadcast %98 : vector<1x64xf32> to vector<256x64xf32>
    %100 = arith.mulf %97, %99 : vector<256x64xf32>
    %c0_63 = arith.constant 0 : index
    %c0_64 = arith.constant 0 : index
    %101 = vector.load %arg12[%c0_63, %c0_64] : memref<1x64xf32, #tpu.memory_space<vmem>>, vector<1x64xf32>
    %102 = vector.broadcast %101 : vector<1x64xf32> to vector<256x64xf32>
    %103 = arith.addf %100, %102 : vector<256x64xf32>
    %cst_65 = arith.constant dense<0xFF800000> : vector<64xf32>
    %104 = vector.multi_reduction <maximumf>, %103, %cst_65 [0] : vector<256x64xf32> to vector<64xf32>
    %105 = vector.shape_cast %104 : vector<64xf32> to vector<1x64xf32>
    %106 = arith.maximumf %78, %105 : vector<1x64xf32>
    %c256_66 = arith.constant 256 : index
    %c0_67 = arith.constant 0 : index
    %107 = vector.load %arg20[%c256_66, %c0_67] : memref<528x64xf32, #tpu.memory_space<vmem>>, vector<272x64xf32>
    %108 = vector.extract_strided_slice %107 {offsets = [6, 0], sizes = [256, 64], strides = [1, 1]} : vector<272x64xf32> to vector<256x64xf32>
    %109 = arith.truncf %108 : vector<256x64xf32> to vector<256x64xbf16>
    %110 = vector.extract_strided_slice %107 {offsets = [7, 0], sizes = [256, 64], strides = [1, 1]} : vector<272x64xf32> to vector<256x64xf32>
    %111 = arith.truncf %110 : vector<256x64xf32> to vector<256x64xbf16>
    %112 = vector.extract_strided_slice %107 {offsets = [8, 0], sizes = [256, 64], strides = [1, 1]} : vector<272x64xf32> to vector<256x64xf32>
    %113 = arith.truncf %112 : vector<256x64xf32> to vector<256x64xbf16>
    %114 = vector.extract_strided_slice %107 {offsets = [9, 0], sizes = [256, 64], strides = [1, 1]} : vector<272x64xf32> to vector<256x64xf32>
    %115 = arith.truncf %114 : vector<256x64xf32> to vector<256x64xbf16>
    %116 = vector.extract_strided_slice %107 {offsets = [10, 0], sizes = [256, 64], strides = [1, 1]} : vector<272x64xf32> to vector<256x64xf32>
    %117 = arith.truncf %116 : vector<256x64xf32> to vector<256x64xbf16>
    %118 = tpu.concatenate %109, %111, %113, %115, %117 in 1 : vector<256x64xbf16>, vector<256x64xbf16>, vector<256x64xbf16>, vector<256x64xbf16>, vector<256x64xbf16> -> vector<256x320xbf16>
    %c0_68 = arith.constant 0 : index
    %c0_69 = arith.constant 0 : index
    %119 = vector.load %arg9[%c0_68, %c0_69] : memref<320x64xbf16, #tpu.memory_space<vmem>>, vector<320x64xbf16>
    %cst_70 = arith.constant dense<0.000000e+00> : vector<256x64xf32>
    %120 = tpu.matmul %118, %119, %cst_70 {dimension_numbers = #tpu.dot_dimension_numbers<[1], [0], [0], [1], [0, 0, 1, 1], [], []>} : vector<256x320xbf16>, vector<320x64xbf16>, vector<256x64xf32> -> vector<256x64xf32>
    %c0_71 = arith.constant 0 : index
    %c0_72 = arith.constant 0 : index
    %121 = vector.load %arg10[%c0_71, %c0_72] : memref<1x64xf32, #tpu.memory_space<vmem>>, vector<1x64xf32>
    %122 = vector.broadcast %121 : vector<1x64xf32> to vector<256x64xf32>
    %123 = arith.addf %120, %122 : vector<256x64xf32>
    %cst_73 = arith.constant 0.000000e+00 : f32
    %124 = vector.broadcast %cst_73 : f32 to vector<256x64xf32>
    %125 = arith.maximumf %123, %124 : vector<256x64xf32>
    %c0_74 = arith.constant 0 : index
    %c0_75 = arith.constant 0 : index
    %126 = vector.load %arg11[%c0_74, %c0_75] : memref<1x64xf32, #tpu.memory_space<vmem>>, vector<1x64xf32>
    %127 = vector.broadcast %126 : vector<1x64xf32> to vector<256x64xf32>
    %128 = arith.mulf %125, %127 : vector<256x64xf32>
    %c0_76 = arith.constant 0 : index
    %c0_77 = arith.constant 0 : index
    %129 = vector.load %arg12[%c0_76, %c0_77] : memref<1x64xf32, #tpu.memory_space<vmem>>, vector<1x64xf32>
    %130 = vector.broadcast %129 : vector<1x64xf32> to vector<256x64xf32>
    %131 = arith.addf %128, %130 : vector<256x64xf32>
    %132 = vector.extract_strided_slice %131 {offsets = [0, 0], sizes = [255, 64], strides = [1, 1]} : vector<256x64xf32> to vector<255x64xf32>
    %cst_78 = arith.constant dense<0xFF800000> : vector<64xf32>
    %133 = vector.multi_reduction <maximumf>, %132, %cst_78 [0] : vector<255x64xf32> to vector<64xf32>
    %134 = vector.shape_cast %133 : vector<64xf32> to vector<1x64xf32>
    %135 = arith.maximumf %106, %134 : vector<1x64xf32>
    %c0_79 = arith.constant 0 : index
    %c0_80 = arith.constant 0 : index
    %136 = vector.load %arg13[%c0_79, %c0_80] : memref<64x64xf32, #tpu.memory_space<vmem>>, vector<64x64xf32>
    %cst_81 = arith.constant dense<0.000000e+00> : vector<1x64xf32>
    %137 = tpu.matmul %135, %136, %cst_81 {dimension_numbers = #tpu.dot_dimension_numbers<[1], [0], [0], [1], [0, 0, 1, 1], [], []>} : vector<1x64xf32>, vector<64x64xf32>, vector<1x64xf32> -> vector<1x64xf32>
    %c0_82 = arith.constant 0 : index
    %c0_83 = arith.constant 0 : index
    %c0_84 = arith.constant 0 : index
    %138 = vector.load %arg1[%c0_82, %c0_83, %c0_84] : memref<1x1x1xf32, #tpu.memory_space<vmem>>, vector<1x1x1xf32>
    %139 = vector.shape_cast %138 : vector<1x1x1xf32> to vector<1x1xf32>
    %c0_85 = arith.constant 0 : index
    %c0_86 = arith.constant 0 : index
    %140 = vector.load %arg14[%c0_85, %c0_86] : memref<1x64xf32, #tpu.memory_space<vmem>>, vector<1x64xf32>
    %141 = vector.broadcast %139 : vector<1x1xf32> to vector<1x64xf32>
    %142 = arith.mulf %141, %140 : vector<1x64xf32>
    %143 = arith.addf %137, %142 : vector<1x64xf32>
    %c0_87 = arith.constant 0 : index
    %c0_88 = arith.constant 0 : index
    %144 = vector.load %arg15[%c0_87, %c0_88] : memref<1x64xf32, #tpu.memory_space<vmem>>, vector<1x64xf32>
    %145 = arith.addf %143, %144 : vector<1x64xf32>
    %cst_89 = arith.constant 0.000000e+00 : f32
    %146 = vector.broadcast %cst_89 : f32 to vector<1x64xf32>
    %147 = arith.maximumf %145, %146 : vector<1x64xf32>
    %c0_90 = arith.constant 0 : index
    %c0_91 = arith.constant 0 : index
    %148 = vector.load %arg16[%c0_90, %c0_91] : memref<1x64xf32, #tpu.memory_space<vmem>>, vector<1x64xf32>
    %149 = arith.mulf %147, %148 : vector<1x64xf32>
    %cst_92 = arith.constant dense<0.000000e+00> : vector<1xf32>
    %150 = vector.multi_reduction <add>, %149, %cst_92 [1] : vector<1x64xf32> to vector<1xf32>
    %151 = vector.shape_cast %150 : vector<1xf32> to vector<1x1xf32>
    %c0_93 = arith.constant 0 : index
    %c0_94 = arith.constant 0 : index
    %152 = vector.load %arg17[%c0_93, %c0_94] : memref<1x1xf32, #tpu.memory_space<vmem>>, vector<1x1xf32>
    %153 = arith.addf %151, %152 : vector<1x1xf32>
    %c0_95 = arith.constant 0 : index
    %c0_96 = arith.constant 0 : index
    %c0_97 = arith.constant 0 : index
    %154 = vector.load %arg18[%c0_95, %c0_96, %c0_97] : memref<1x1x1xf32, #tpu.memory_space<vmem>>, vector<1x1x1xf32>
    %155 = vector.shape_cast %154 : vector<1x1x1xf32> to vector<1x1xf32>
    %156 = vector.shape_cast %153 : vector<1x1xf32> to vector<1x1x1xf32>
    tpu.vector_store %arg18[%c0_95, %c0_96, %c0_97], %156 {strides = array<i32>} : memref<1x1x1xf32, #tpu.memory_space<vmem>>, vector<1x1x1xf32>,
    return
  }
  func.func @transform_0(%arg0: i32) -> (i32, i32, i32) {
    %c0_i32 = arith.constant 0 : i32
    %c0_i32_0 = arith.constant 0 : i32
    %c0_i32_1 = arith.constant 0 : i32
    return %arg0, %c0_i32, %c0_i32_0 : i32, i32, i32
  }
  func.func @transform_1(%arg0: i32) -> (i32, i32, i32) {
    %c0_i32 = arith.constant 0 : i32
    %c0_i32_0 = arith.constant 0 : i32
    %c0_i32_1 = arith.constant 0 : i32
    return %arg0, %c0_i32, %c0_i32_0 : i32, i32, i32
  }
  func.func @transform_2(%arg0: i32) -> (i32, i32) {
    %c0_i32 = arith.constant 0 : i32
    %c0_i32_0 = arith.constant 0 : i32
    %c0_i32_1 = arith.constant 0 : i32
    return %c0_i32, %c0_i32_0 : i32, i32
  }
  func.func @transform_3(%arg0: i32) -> (i32, i32) {
    %c0_i32 = arith.constant 0 : i32
    %c0_i32_0 = arith.constant 0 : i32
    %c0_i32_1 = arith.constant 0 : i32
    return %c0_i32, %c0_i32_0 : i32, i32
  }
  func.func @transform_4(%arg0: i32) -> (i32, i32) {
    %c0_i32 = arith.constant 0 : i32
    %c0_i32_0 = arith.constant 0 : i32
    %c0_i32_1 = arith.constant 0 : i32
    return %c0_i32, %c0_i32_0 : i32, i32
  }
  func.func @transform_5(%arg0: i32) -> (i32, i32) {
    %c0_i32 = arith.constant 0 : i32
    %c0_i32_0 = arith.constant 0 : i32
    %c0_i32_1 = arith.constant 0 : i32
    return %c0_i32, %c0_i32_0 : i32, i32
  }
  func.func @transform_6(%arg0: i32) -> (i32, i32) {
    %c0_i32 = arith.constant 0 : i32
    %c0_i32_0 = arith.constant 0 : i32
    %c0_i32_1 = arith.constant 0 : i32
    return %c0_i32, %c0_i32_0 : i32, i32
  }
  func.func @transform_7(%arg0: i32) -> (i32, i32) {
    %c0_i32 = arith.constant 0 : i32
    %c0_i32_0 = arith.constant 0 : i32
    %c0_i32_1 = arith.constant 0 : i32
    return %c0_i32, %c0_i32_0 : i32, i32
  }
  func.func @transform_8(%arg0: i32) -> (i32, i32) {
    %c0_i32 = arith.constant 0 : i32
    %c0_i32_0 = arith.constant 0 : i32
    %c0_i32_1 = arith.constant 0 : i32
    return %c0_i32, %c0_i32_0 : i32, i32
  }
  func.func @transform_9(%arg0: i32) -> (i32, i32) {
    %c0_i32 = arith.constant 0 : i32
    %c0_i32_0 = arith.constant 0 : i32
    %c0_i32_1 = arith.constant 0 : i32
    return %c0_i32, %c0_i32_0 : i32, i32
  }
  func.func @transform_10(%arg0: i32) -> (i32, i32) {
    %c0_i32 = arith.constant 0 : i32
    %c0_i32_0 = arith.constant 0 : i32
    %c0_i32_1 = arith.constant 0 : i32
    return %c0_i32, %c0_i32_0 : i32, i32
  }
  func.func @transform_11(%arg0: i32) -> (i32, i32) {
    %c0_i32 = arith.constant 0 : i32
    %c0_i32_0 = arith.constant 0 : i32
    %c0_i32_1 = arith.constant 0 : i32
    return %c0_i32, %c0_i32_0 : i32, i32
  }
  func.func @transform_12(%arg0: i32) -> (i32, i32) {
    %c0_i32 = arith.constant 0 : i32
    %c0_i32_0 = arith.constant 0 : i32
    %c0_i32_1 = arith.constant 0 : i32
    return %c0_i32, %c0_i32_0 : i32, i32
  }
  func.func @transform_13(%arg0: i32) -> (i32, i32) {
    %c0_i32 = arith.constant 0 : i32
    %c0_i32_0 = arith.constant 0 : i32
    %c0_i32_1 = arith.constant 0 : i32
    return %c0_i32, %c0_i32_0 : i32, i32
  }
  func.func @transform_14(%arg0: i32) -> (i32, i32) {
    %c0_i32 = arith.constant 0 : i32
    %c0_i32_0 = arith.constant 0 : i32
    %c0_i32_1 = arith.constant 0 : i32
    return %c0_i32, %c0_i32_0 : i32, i32
  }
  func.func @transform_15(%arg0: i32) -> (i32, i32) {
    %c0_i32 = arith.constant 0 : i32
    %c0_i32_0 = arith.constant 0 : i32
    %c0_i32_1 = arith.constant 0 : i32
    return %c0_i32, %c0_i32_0 : i32, i32
  }
  func.func @transform_16(%arg0: i32) -> (i32, i32) {
    %c0_i32 = arith.constant 0 : i32
    %c0_i32_0 = arith.constant 0 : i32
    %c0_i32_1 = arith.constant 0 : i32
    return %c0_i32, %c0_i32_0 : i32, i32
  }
  func.func @transform_17(%arg0: i32) -> (i32, i32, i32) {
    %c0_i32 = arith.constant 0 : i32
    %c0_i32_0 = arith.constant 0 : i32
    %c0_i32_1 = arith.constant 0 : i32
    return %arg0, %c0_i32, %c0_i32_0 : i32, i32, i32
  }
}

</mosaic_0001>

<llo_original>
// kernel: tpu_custom_call.1
$region0: #{tpu_custom_call.1}
  #allocation0 [shape = 'u32[]', space=smem, size = 0x4, offset = 0x4, fixed_abs, tag = 'smem constant byte address 0x4 - core index']
  #allocation1 [shape = 'u32[144,128]{1,0:T(1,128)}', space=vmem, size = 0x12000, scoped, tag = 'internal scratch']
  #allocation2 [shape = 'f32[528,64]{1,0:T(8,128)}', space=vmem, size = 0x42000, scoped, tag = 'scratch operand']
  #allocation3 [shape = 'f32[528,64]{1,0:T(8,128)}', space=vmem, size = 0x42000, scoped, tag = 'scratch operand']
  #allocation4 [shape = 'f32[1,1]{1,0:T(1,128)S(1)}', space=vmem, size = 0x200, scoped, tag = 'scoped memory for tpu_custom_call.1']
  %s0 = inlined_call_operand.vmem [shape: f32[2,1,1], index: 0, kind: input, shape index: {}]
  %s1 = inlined_call_operand.vmem [shape: bf16[2,512,16], index: 1, kind: input, shape index: {}]
  %s2 = inlined_call_operand.vmem [shape: bf16[16,64], index: 2, kind: input, shape index: {}]
  %s3 = inlined_call_operand.vmem [shape: f32[1,64], index: 3, kind: input, shape index: {}]
  %s4 = inlined_call_operand.vmem [shape: f32[1,64], index: 4, kind: input, shape index: {}]
  %s5 = inlined_call_operand.vmem [shape: bf16[320,64], index: 5, kind: input, shape index: {}]
  %s6 = inlined_call_operand.vmem [shape: f32[1,64], index: 6, kind: input, shape index: {}]
  %s7 = inlined_call_operand.vmem [shape: f32[1,64], index: 7, kind: input, shape index: {}]
  %s8 = inlined_call_operand.vmem [shape: bf16[320,64], index: 8, kind: input, shape index: {}]
  %s9 = inlined_call_operand.vmem [shape: f32[1,64], index: 9, kind: input, shape index: {}]
  %s10 = inlined_call_operand.vmem [shape: f32[1,64], index: 10, kind: input, shape index: {}]
  %s11 = inlined_call_operand.vmem [shape: f32[1,64], index: 11, kind: input, shape index: {}]
  %s12 = inlined_call_operand.vmem [shape: f32[64,64], index: 12, kind: input, shape index: {}]
  %s13 = inlined_call_operand.vmem [shape: f32[1,64], index: 13, kind: input, shape index: {}]
  %s14 = inlined_call_operand.vmem [shape: f32[1,64], index: 14, kind: input, shape index: {}]
  %s15 = inlined_call_operand.vmem [shape: f32[1,64], index: 15, kind: input, shape index: {}]
  %s16 = inlined_call_operand.<no memory space> [shape: f32[1,1], index: 16, kind: input, shape index: {}]
  %s17 = inlined_call_operand.vmem [shape: f32[2,1,1], index: 17, kind: output, shape index: {}]
  %s18 = sld [smem:[#allocation0]]
  $region101: #{tpu_custom_call.1} parent=0
    _
  %s20 = ssub.s32 1, %s18
  %s21 = scalar_select 0, %s20, %s18
  %v22 = vstv %s16
  %23 = vst [vmem:[#allocation4] sm:$0x1] %v22
  loop: start=0, step=1, limit=4
  $region2: #{tpu_custom_call.1} parent=0 // loop_pre_header
    _
  $region3: #{tpu_custom_call.1} parent=0 // loop_header
    %s25 = sphi 0, %s29
    %p26 = scmp.ge.s32.totalorder %s25, 4
    %s35 = sphi 0, %s37
    %s38 = sphi 0, %s35
    %s39 = sphi 0, %s38
    %s55 = sphi 0, %s39
    %s61 = sphi 0, %s63
    %s64 = sphi 0, %s61
    %s65 = sphi 0, %s64
    %s81 = sphi 0, %s65
    %s85 = sphi 0, %s85
    %s87 = sphi 0, %s85
    %s88 = sphi 0, %s87
    %s102 = sphi 0, %s88
    %s106 = sphi 0, %s106
    %s108 = sphi 0, %s106
    %s109 = sphi 0, %s108
    %s123 = sphi 0, %s109
    %s127 = sphi 0, %s127
    %s129 = sphi 0, %s127
    %s130 = sphi 0, %s129
    %s144 = sphi 0, %s130
    %s148 = sphi 0, %s148
    %s150 = sphi 0, %s148
    %s151 = sphi 0, %s150
    %s165 = sphi 0, %s151
    %s169 = sphi 0, %s169
    %s171 = sphi 0, %s169
    %s172 = sphi 0, %s171
    %s186 = sphi 0, %s172
    %s190 = sphi 0, %s190
    %s192 = sphi 0, %s190
    %s193 = sphi 0, %s192
    %s207 = sphi 0, %s193
    %s211 = sphi 0, %s211
    %s213 = sphi 0, %s211
    %s214 = sphi 0, %s213
    %s228 = sphi 0, %s214
    %s232 = sphi 0, %s232
    %s234 = sphi 0, %s232
    %s235 = sphi 0, %s234
    %s249 = sphi 0, %s235
    %s253 = sphi 0, %s253
    %s255 = sphi 0, %s253
    %s256 = sphi 0, %s255
    %s270 = sphi 0, %s256
    %s274 = sphi 0, %s274
    %s276 = sphi 0, %s274
    %s277 = sphi 0, %s276
    %s291 = sphi 0, %s277
    %s295 = sphi 0, %s295
    %s297 = sphi 0, %s295
    %s298 = sphi 0, %s297
    %s312 = sphi 0, %s298
    %s316 = sphi 0, %s316
    %s318 = sphi 0, %s316
    %s319 = sphi 0, %s318
    %s333 = sphi 0, %s319
    %s337 = sphi 0, %s337
    %s339 = sphi 0, %s337
    %s340 = sphi 0, %s339
    %s354 = sphi 0, %s340
    %s358 = sphi 0, %s358
    %s360 = sphi 0, %s358
    %s361 = sphi 0, %s360
    %s375 = sphi 0, %s361
    %s379 = sphi 0, %s379
    %s381 = sphi 0, %s379
    %s382 = sphi 0, %s381
    %s396 = sphi 0, %s382
    %s402 = sphi 0, %s404
    %s405 = sphi 0, %s402
    %s406 = sphi 0, %s405
    %s422 = sphi 0, %s406
  $region4: #{tpu_custom_call.1} parent=0 // loop_header_branch
    %28 = sbr.rel (%p26) target = $region8
  $region5: #{tpu_custom_call.1} parent=0 // loop_body
    %s30 = ssub.s32 %s25, 1
    %s31 = ssub.s32 %s25, 2
    %s32 = sadd.s32 %s25, 1
    %s33 = ssub.s32 %s25, %s32
    %p34 = scmp.eq.s32.totalorder %s33, 0
    %s36 = sadd.s32 %s35, 1
    %s37 = scalar_select %p34, %s35, %s36
    %p40 = pneg %p34
    %p41 = scmp.eq.s32.totalorder %s25, 1
    %p42 = por %p40, %p41
    %p43 = scmp.ne.s32.totalorder %s35, %s38
    %p44 = scmp.eq.s32.totalorder %s25, 0
    %p45 = por %p43, %p44
    %p46 = scmp.ne.s32.totalorder %s35, %s38
    %p47 = scmp.eq.s32.totalorder %s30, 1
    %p48 = por %p46, %p47
    %p49 = scmp.ne.s32.totalorder %s38, %s39
    %p50 = scmp.eq.s32.totalorder %s30, 0
    %p51 = por %p49, %p50
    %p52 = scmp.ne.s32.totalorder %s38, %s39
    %p53 = scmp.eq.s32.totalorder %s31, 1
    %p54 = por %p52, %p53
    %p56 = scmp.ne.s32.totalorder %s39, %s55
    %p57 = scmp.eq.s32.totalorder %s31, 0
    %p58 = por %p56, %p57
    %s59 = ssub.s32 %s25, %s32
    %p60 = scmp.eq.s32.totalorder %s59, 0
    %s62 = sadd.s32 %s61, 1
    %s63 = scalar_select %p60, %s61, %s62
    %p66 = pneg %p60
    %p67 = scmp.eq.s32.totalorder %s25, 1
    %p68 = por %p66, %p67
    %p69 = scmp.ne.s32.totalorder %s61, %s64
    %p70 = scmp.eq.s32.totalorder %s25, 0
    %p71 = por %p69, %p70
    %p72 = scmp.ne.s32.totalorder %s61, %s64
    %p73 = scmp.eq.s32.totalorder %s30, 1
    %p74 = por %p72, %p73
    %p75 = scmp.ne.s32.totalorder %s64, %s65
    %p76 = scmp.eq.s32.totalorder %s30, 0
    %p77 = por %p75, %p76
    %p78 = scmp.ne.s32.totalorder %s64, %s65
    %p79 = scmp.eq.s32.totalorder %s31, 1
    %p80 = por %p78, %p79
    %p82 = scmp.ne.s32.totalorder %s65, %s81
    %p83 = scmp.eq.s32.totalorder %s31, 0
    %p84 = por %p82, %p83
    %s86 = sadd.s32 %s85, 1
    %p89 = scmp.eq.s32.totalorder %s25, 1
    %p90 = scmp.ne.s32.totalorder %s85, %s87
    %p91 = scmp.eq.s32.totalorder %s25, 0
    %p92 = por %p90, %p91
    %p93 = scmp.ne.s32.totalorder %s85, %s87
    %p94 = scmp.eq.s32.totalorder %s30, 1
    %p95 = por %p93, %p94
    %p96 = scmp.ne.s32.totalorder %s87, %s88
    %p97 = scmp.eq.s32.totalorder %s30, 0
    %p98 = por %p96, %p97
    %p99 = scmp.ne.s32.totalorder %s87, %s88
    %p100 = scmp.eq.s32.totalorder %s31, 1
    %p101 = por %p99, %p100
    %p103 = scmp.ne.s32.totalorder %s88, %s102
    %p104 = scmp.eq.s32.totalorder %s31, 0
    %p105 = por %p103, %p104
    %s107 = sadd.s32 %s106, 1
    %p110 = scmp.eq.s32.totalorder %s25, 1
    %p111 = scmp.ne.s32.totalorder %s106, %s108
    %p112 = scmp.eq.s32.totalorder %s25, 0
    %p113 = por %p111, %p112
    %p114 = scmp.ne.s32.totalorder %s106, %s108
    %p115 = scmp.eq.s32.totalorder %s30, 1
    %p116 = por %p114, %p115
    %p117 = scmp.ne.s32.totalorder %s108, %s109
    %p118 = scmp.eq.s32.totalorder %s30, 0
    %p119 = por %p117, %p118
    %p120 = scmp.ne.s32.totalorder %s108, %s109
    %p121 = scmp.eq.s32.totalorder %s31, 1
    %p122 = por %p120, %p121
    %p124 = scmp.ne.s32.totalorder %s109, %s123
    %p125 = scmp.eq.s32.totalorder %s31, 0
    %p126 = por %p124, %p125
    %s128 = sadd.s32 %s127, 1
    %p131 = scmp.eq.s32.totalorder %s25, 1
    %p132 = scmp.ne.s32.totalorder %s127, %s129
    %p133 = scmp.eq.s32.totalorder %s25, 0
    %p134 = por %p132, %p133
    %p135 = scmp.ne.s32.totalorder %s127, %s129
    %p136 = scmp.eq.s32.totalorder %s30, 1
    %p137 = por %p135, %p136
    %p138 = scmp.ne.s32.totalorder %s129, %s130
    %p139 = scmp.eq.s32.totalorder %s30, 0
    %p140 = por %p138, %p139
    %p141 = scmp.ne.s32.totalorder %s129, %s130
    %p142 = scmp.eq.s32.totalorder %s31, 1
    %p143 = por %p141, %p142
    %p145 = scmp.ne.s32.totalorder %s130, %s144
    %p146 = scmp.eq.s32.totalorder %s31, 0
    %p147 = por %p145, %p146
    %s149 = sadd.s32 %s148, 1
    %p152 = scmp.eq.s32.totalorder %s25, 1
    %p153 = scmp.ne.s32.totalorder %s148, %s150
    %p154 = scmp.eq.s32.totalorder %s25, 0
    %p155 = por %p153, %p154
    %p156 = scmp.ne.s32.totalorder %s148, %s150
    %p157 = scmp.eq.s32.totalorder %s30, 1
    %p158 = por %p156, %p157
    %p159 = scmp.ne.s32.totalorder %s150, %s151
    %p160 = scmp.eq.s32.totalorder %s30, 0
    %p161 = por %p159, %p160
    %p162 = scmp.ne.s32.totalorder %s150, %s151
    %p163 = scmp.eq.s32.totalorder %s31, 1
    %p164 = por %p162, %p163
    %p166 = scmp.ne.s32.totalorder %s151, %s165
    %p167 = scmp.eq.s32.totalorder %s31, 0
    %p168 = por %p166, %p167
    %s170 = sadd.s32 %s169, 1
    %p173 = scmp.eq.s32.totalorder %s25, 1
    %p174 = scmp.ne.s32.totalorder %s169, %s171
    %p175 = scmp.eq.s32.totalorder %s25, 0
    %p176 = por %p174, %p175
    %p177 = scmp.ne.s32.totalorder %s169, %s171
    %p178 = scmp.eq.s32.totalorder %s30, 1
    %p179 = por %p177, %p178
    %p180 = scmp.ne.s32.totalorder %s171, %s172
    %p181 = scmp.eq.s32.totalorder %s30, 0
    %p182 = por %p180, %p181
    %p183 = scmp.ne.s32.totalorder %s171, %s172
    %p184 = scmp.eq.s32.totalorder %s31, 1
    %p185 = por %p183, %p184
    %p187 = scmp.ne.s32.totalorder %s172, %s186
    %p188 = scmp.eq.s32.totalorder %s31, 0
    %p189 = por %p187, %p188
    %s191 = sadd.s32 %s190, 1
    %p194 = scmp.eq.s32.totalorder %s25, 1
    %p195 = scmp.ne.s32.totalorder %s190, %s192
    %p196 = scmp.eq.s32.totalorder %s25, 0
    %p197 = por %p195, %p196
    %p198 = scmp.ne.s32.totalorder %s190, %s192
    %p199 = scmp.eq.s32.totalorder %s30, 1
    %p200 = por %p198, %p199
    %p201 = scmp.ne.s32.totalorder %s192, %s193
    %p202 = scmp.eq.s32.totalorder %s30, 0
    %p203 = por %p201, %p202
    %p204 = scmp.ne.s32.totalorder %s192, %s193
    %p205 = scmp.eq.s32.totalorder %s31, 1
    %p206 = por %p204, %p205
    %p208 = scmp.ne.s32.totalorder %s193, %s207
    %p209 = scmp.eq.s32.totalorder %s31, 0
    %p210 = por %p208, %p209
    %s212 = sadd.s32 %s211, 1
    %p215 = scmp.eq.s32.totalorder %s25, 1
    %p216 = scmp.ne.s32.totalorder %s211, %s213
    %p217 = scmp.eq.s32.totalorder %s25, 0
    %p218 = por %p216, %p217
    %p219 = scmp.ne.s32.totalorder %s211, %s213
    %p220 = scmp.eq.s32.totalorder %s30, 1
    %p221 = por %p219, %p220
    %p222 = scmp.ne.s32.totalorder %s213, %s214
    %p223 = scmp.eq.s32.totalorder %s30, 0
    %p224 = por %p222, %p223
    %p225 = scmp.ne.s32.totalorder %s213, %s214
    %p226 = scmp.eq.s32.totalorder %s31, 1
    %p227 = por %p225, %p226
    %p229 = scmp.ne.s32.totalorder %s214, %s228
    %p230 = scmp.eq.s32.totalorder %s31, 0
    %p231 = por %p229, %p230
    %s233 = sadd.s32 %s232, 1
    %p236 = scmp.eq.s32.totalorder %s25, 1
    %p237 = scmp.ne.s32.totalorder %s232, %s234
    %p238 = scmp.eq.s32.totalorder %s25, 0
    %p239 = por %p237, %p238
    %p240 = scmp.ne.s32.totalorder %s232, %s234
    %p241 = scmp.eq.s32.totalorder %s30, 1
    %p242 = por %p240, %p241
    %p243 = scmp.ne.s32.totalorder %s234, %s235
    %p244 = scmp.eq.s32.totalorder %s30, 0
    %p245 = por %p243, %p244
    %p246 = scmp.ne.s32.totalorder %s234, %s235
    %p247 = scmp.eq.s32.totalorder %s31, 1
    %p248 = por %p246, %p247
    %p250 = scmp.ne.s32.totalorder %s235, %s249
    %p251 = scmp.eq.s32.totalorder %s31, 0
    %p252 = por %p250, %p251
    %s254 = sadd.s32 %s253, 1
    %p257 = scmp.eq.s32.totalorder %s25, 1
    %p258 = scmp.ne.s32.totalorder %s253, %s255
    %p259 = scmp.eq.s32.totalorder %s25, 0
    %p260 = por %p258, %p259
    %p261 = scmp.ne.s32.totalorder %s253, %s255
    %p262 = scmp.eq.s32.totalorder %s30, 1
    %p263 = por %p261, %p262
    %p264 = scmp.ne.s32.totalorder %s255, %s256
    %p265 = scmp.eq.s32.totalorder %s30, 0
    %p266 = por %p264, %p265
    %p267 = scmp.ne.s32.totalorder %s255, %s256
    %p268 = scmp.eq.s32.totalorder %s31, 1
    %p269 = por %p267, %p268
    %p271 = scmp.ne.s32.totalorder %s256, %s270
    %p272 = scmp.eq.s32.totalorder %s31, 0
    %p273 = por %p271, %p272
    %s275 = sadd.s32 %s274, 1
    %p278 = scmp.eq.s32.totalorder %s25, 1
    %p279 = scmp.ne.s32.totalorder %s274, %s276
    %p280 = scmp.eq.s32.totalorder %s25, 0
    %p281 = por %p279, %p280
    %p282 = scmp.ne.s32.totalorder %s274, %s276
    %p283 = scmp.eq.s32.totalorder %s30, 1
    %p284 = por %p282, %p283
    %p285 = scmp.ne.s32.totalorder %s276, %s277
    %p286 = scmp.eq.s32.totalorder %s30, 0
    %p287 = por %p285, %p286
    %p288 = scmp.ne.s32.totalorder %s276, %s277
    %p289 = scmp.eq.s32.totalorder %s31, 1
    %p290 = por %p288, %p289
    %p292 = scmp.ne.s32.totalorder %s277, %s291
    %p293 = scmp.eq.s32.totalorder %s31, 0
    %p294 = por %p292, %p293
    %s296 = sadd.s32 %s295, 1
    %p299 = scmp.eq.s32.totalorder %s25, 1
    %p300 = scmp.ne.s32.totalorder %s295, %s297
    %p301 = scmp.eq.s32.totalorder %s25, 0
    %p302 = por %p300, %p301
    %p303 = scmp.ne.s32.totalorder %s295, %s297
    %p304 = scmp.eq.s32.totalorder %s30, 1
    %p305 = por %p303, %p304
    %p306 = scmp.ne.s32.totalorder %s297, %s298
    %p307 = scmp.eq.s32.totalorder %s30, 0
    %p308 = por %p306, %p307
    %p309 = scmp.ne.s32.totalorder %s297, %s298
    %p310 = scmp.eq.s32.totalorder %s31, 1
    %p311 = por %p309, %p310
    %p313 = scmp.ne.s32.totalorder %s298, %s312
    %p314 = scmp.eq.s32.totalorder %s31, 0
    %p315 = por %p313, %p314
    %s317 = sadd.s32 %s316, 1
    %p320 = scmp.eq.s32.totalorder %s25, 1
    %p321 = scmp.ne.s32.totalorder %s316, %s318
    %p322 = scmp.eq.s32.totalorder %s25, 0
    %p323 = por %p321, %p322
    %p324 = scmp.ne.s32.totalorder %s316, %s318
    %p325 = scmp.eq.s32.totalorder %s30, 1
    %p326 = por %p324, %p325
    %p327 = scmp.ne.s32.totalorder %s318, %s319
    %p328 = scmp.eq.s32.totalorder %s30, 0
    %p329 = por %p327, %p328
    %p330 = scmp.ne.s32.totalorder %s318, %s319
    %p331 = scmp.eq.s32.totalorder %s31, 1
    %p332 = por %p330, %p331
    %p334 = scmp.ne.s32.totalorder %s319, %s333
    %p335 = scmp.eq.s32.totalorder %s31, 0
    %p336 = por %p334, %p335
    %s338 = sadd.s32 %s337, 1
    %p341 = scmp.eq.s32.totalorder %s25, 1
    %p342 = scmp.ne.s32.totalorder %s337, %s339
    %p343 = scmp.eq.s32.totalorder %s25, 0
    %p344 = por %p342, %p343
    %p345 = scmp.ne.s32.totalorder %s337, %s339
    %p346 = scmp.eq.s32.totalorder %s30, 1
    %p347 = por %p345, %p346
    %p348 = scmp.ne.s32.totalorder %s339, %s340
    %p349 = scmp.eq.s32.totalorder %s30, 0
    %p350 = por %p348, %p349
    %p351 = scmp.ne.s32.totalorder %s339, %s340
    %p352 = scmp.eq.s32.totalorder %s31, 1
    %p353 = por %p351, %p352
    %p355 = scmp.ne.s32.totalorder %s340, %s354
    %p356 = scmp.eq.s32.totalorder %s31, 0
    %p357 = por %p355, %p356
    %s359 = sadd.s32 %s358, 1
    %p362 = scmp.eq.s32.totalorder %s25, 1
    %p363 = scmp.ne.s32.totalorder %s358, %s360
    %p364 = scmp.eq.s32.totalorder %s25, 0
    %p365 = por %p363, %p364
    %p366 = scmp.ne.s32.totalorder %s358, %s360
    %p367 = scmp.eq.s32.totalorder %s30, 1
    %p368 = por %p366, %p367
    %p369 = scmp.ne.s32.totalorder %s360, %s361
    %p370 = scmp.eq.s32.totalorder %s30, 0
    %p371 = por %p369, %p370
    %p372 = scmp.ne.s32.totalorder %s360, %s361
    %p373 = scmp.eq.s32.totalorder %s31, 1
    %p374 = por %p372, %p373
    %p376 = scmp.ne.s32.totalorder %s361, %s375
    %p377 = scmp.eq.s32.totalorder %s31, 0
    %p378 = por %p376, %p377
    %s380 = sadd.s32 %s379, 1
    %p383 = scmp.eq.s32.totalorder %s25, 1
    %p384 = scmp.ne.s32.totalorder %s379, %s381
    %p385 = scmp.eq.s32.totalorder %s25, 0
    %p386 = por %p384, %p385
    %p387 = scmp.ne.s32.totalorder %s379, %s381
    %p388 = scmp.eq.s32.totalorder %s30, 1
    %p389 = por %p387, %p388
    %p390 = scmp.ne.s32.totalorder %s381, %s382
    %p391 = scmp.eq.s32.totalorder %s30, 0
    %p392 = por %p390, %p391
    %p393 = scmp.ne.s32.totalorder %s381, %s382
    %p394 = scmp.eq.s32.totalorder %s31, 1
    %p395 = por %p393, %p394
    %p397 = scmp.ne.s32.totalorder %s382, %s396
    %p398 = scmp.eq.s32.totalorder %s31, 0
    %p399 = por %p397, %p398
    %s400 = ssub.s32 %s25, %s32
    %p401 = scmp.eq.s32.totalorder %s400, 0
    %s403 = sadd.s32 %s402, 1
    %s404 = scalar_select %p401, %s402, %s403
    %p407 = pneg %p401
    %p408 = scmp.eq.s32.totalorder %s25, 1
    %p409 = por %p407, %p408
    %p410 = scmp.ne.s32.totalorder %s402, %s405
    %p411 = scmp.eq.s32.totalorder %s25, 0
    %p412 = por %p410, %p411
    %p413 = scmp.ne.s32.totalorder %s402, %s405
    %p414 = scmp.eq.s32.totalorder %s30, 1
    %p415 = por %p413, %p414
    %p416 = scmp.ne.s32.totalorder %s405, %s406
    %p417 = scmp.eq.s32.totalorder %s30, 0
    %p418 = por %p416, %p417
    %p419 = scmp.ne.s32.totalorder %s405, %s406
    %p420 = scmp.eq.s32.totalorder %s31, 1
    %p421 = por %p419, %p420
    %p423 = scmp.ne.s32.totalorder %s406, %s422
    %p424 = scmp.eq.s32.totalorder %s31, 0
    %p425 = por %p423, %p424
    %p426 = scmp.le.s32.totalorder 1, %s25
    %p427 = scmp.lt.s32.totalorder %s25, 3
    %p428 = pnand %p426, %p427
    %p429 = pneg %p428
    // Predicated region
    $region9: #{tpu_custom_call.1} parent=5 // pred_check
      _
    $region10: #{tpu_custom_call.1} parent=5 // pred_check_branch
      %431 = sbr.rel (%p428) target = $region12
    $region11: #{tpu_custom_call.1} parent=5 // pred_region
      %s432 = ssub.s32 %s25, 1
      // Predicated region
      $region13: #{tpu_custom_call.1} parent=11 // pred_check
        %p433 = pneg %p98
      $region14: #{tpu_custom_call.1} parent=11 // pred_check_branch
        %435 = sbr.rel (%p433) target = $region16
      $region15: #{tpu_custom_call.1} parent=11 // pred_region
        _
      $region16: #{tpu_custom_call.1} parent=11 // pred_fallthru
        _
      // Predicated region
      $region17: #{tpu_custom_call.1} parent=11 // pred_check
        %p436 = pneg %p119
      $region18: #{tpu_custom_call.1} parent=11 // pred_check_branch
        %438 = sbr.rel (%p436) target = $region20
      $region19: #{tpu_custom_call.1} parent=11 // pred_region
        _
      $region20: #{tpu_custom_call.1} parent=11 // pred_fallthru
        _
      // Predicated region
      $region21: #{tpu_custom_call.1} parent=11 // pred_check
        %p439 = pneg %p140
      $region22: #{tpu_custom_call.1} parent=11 // pred_check_branch
        %441 = sbr.rel (%p439) target = $region24
      $region23: #{tpu_custom_call.1} parent=11 // pred_region
        _
      $region24: #{tpu_custom_call.1} parent=11 // pred_fallthru
        _
      // Predicated region
      $region25: #{tpu_custom_call.1} parent=11 // pred_check
        %p442 = pneg %p161
      $region26: #{tpu_custom_call.1} parent=11 // pred_check_branch
        %444 = sbr.rel (%p442) target = $region28
      $region27: #{tpu_custom_call.1} parent=11 // pred_region
        _
      $region28: #{tpu_custom_call.1} parent=11 // pred_fallthru
        _
      // Predicated region
      $region29: #{tpu_custom_call.1} parent=11 // pred_check
        %p445 = pneg %p182
      $region30: #{tpu_custom_call.1} parent=11 // pred_check_branch
        %447 = sbr.rel (%p445) target = $region32
      $region31: #{tpu_custom_call.1} parent=11 // pred_region
        _
      $region32: #{tpu_custom_call.1} parent=11 // pred_fallthru
        _
      // Predicated region
      $region33: #{tpu_custom_call.1} parent=11 // pred_check
        %p448 = pneg %p203
      $region34: #{tpu_custom_call.1} parent=11 // pred_check_branch
        %450 = sbr.rel (%p448) target = $region36
      $region35: #{tpu_custom_call.1} parent=11 // pred_region
        _
      $region36: #{tpu_custom_call.1} parent=11 // pred_fallthru
        _
      // Predicated region
      $region37: #{tpu_custom_call.1} parent=11 // pred_check
        %p451 = pneg %p224
      $region38: #{tpu_custom_call.1} parent=11 // pred_check_branch
        %453 = sbr.rel (%p451) target = $region40
      $region39: #{tpu_custom_call.1} parent=11 // pred_region
        _
      $region40: #{tpu_custom_call.1} parent=11 // pred_fallthru
        _
      // Predicated region
      $region41: #{tpu_custom_call.1} parent=11 // pred_check
        %p454 = pneg %p245
      $region42: #{tpu_custom_call.1} parent=11 // pred_check_branch
        %456 = sbr.rel (%p454) target = $region44
      $region43: #{tpu_custom_call.1} parent=11 // pred_region
        _
      $region44: #{tpu_custom_call.1} parent=11 // pred_fallthru
        _
      // Predicated region
      $region45: #{tpu_custom_call.1} parent=11 // pred_check
        %p457 = pneg %p266
      $region46: #{tpu_custom_call.1} parent=11 // pred_check_branch
        %459 = sbr.rel (%p457) target = $region48
      $region47: #{tpu_custom_call.1} parent=11 // pred_region
        _
      $region48: #{tpu_custom_call.1} parent=11 // pred_fallthru
        _
      // Predicated region
      $region49: #{tpu_custom_call.1} parent=11 // pred_check
        %p460 = pneg %p287
      $region50: #{tpu_custom_call.1} parent=11 // pred_check_branch
        %462 = sbr.rel (%p460) target = $region52
      $region51: #{tpu_custom_call.1} parent=11 // pred_region
        _
      $region52: #{tpu_custom_call.1} parent=11 // pred_fallthru
        _
      // Predicated region
      $region53: #{tpu_custom_call.1} parent=11 // pred_check
        %p463 = pneg %p308
      $region54: #{tpu_custom_call.1} parent=11 // pred_check_branch
        %465 = sbr.rel (%p463) target = $region56
      $region55: #{tpu_custom_call.1} parent=11 // pred_region
        _
      $region56: #{tpu_custom_call.1} parent=11 // pred_fallthru
        _
      // Predicated region
      $region57: #{tpu_custom_call.1} parent=11 // pred_check
        %p466 = pneg %p329
      $region58: #{tpu_custom_call.1} parent=11 // pred_check_branch
        %468 = sbr.rel (%p466) target = $region60
      $region59: #{tpu_custom_call.1} parent=11 // pred_region
        _
      $region60: #{tpu_custom_call.1} parent=11 // pred_fallthru
        _
      // Predicated region
      $region61: #{tpu_custom_call.1} parent=11 // pred_check
        %p469 = pneg %p350
      $region62: #{tpu_custom_call.1} parent=11 // pred_check_branch
        %471 = sbr.rel (%p469) target = $region64
      $region63: #{tpu_custom_call.1} parent=11 // pred_region
        _
      $region64: #{tpu_custom_call.1} parent=11 // pred_fallthru
        _
      // Predicated region
      $region65: #{tpu_custom_call.1} parent=11 // pred_check
        %p472 = pneg %p371
      $region66: #{tpu_custom_call.1} parent=11 // pred_check_branch
        %474 = sbr.rel (%p472) target = $region68
      $region67: #{tpu_custom_call.1} parent=11 // pred_region
        _
      $region68: #{tpu_custom_call.1} parent=11 // pred_fallthru
        _
      // Predicated region
      $region69: #{tpu_custom_call.1} parent=11 // pred_check
        %p475 = pneg %p392
      $region70: #{tpu_custom_call.1} parent=11 // pred_check_branch
        %477 = sbr.rel (%p475) target = $region72
      $region71: #{tpu_custom_call.1} parent=11 // pred_region
        _
      $region72: #{tpu_custom_call.1} parent=11 // pred_fallthru
        _
    $region12: #{tpu_custom_call.1} parent=5 // pred_fallthru
      _
    %p478 = scmp.lt.s32.totalorder %s25, 2
    // Predicated region
    $region73: #{tpu_custom_call.1} parent=5 // pred_check
      %p479 = pneg %p478
    $region74: #{tpu_custom_call.1} parent=5 // pred_check_branch
      %481 = sbr.rel (%p479) target = $region76
    $region75: #{tpu_custom_call.1} parent=5 // pred_region
      // Predicated region
      $region77: #{tpu_custom_call.1} parent=75 // pred_check
        %p482 = pneg %p45
      $region78: #{tpu_custom_call.1} parent=75 // pred_check_branch
        %484 = sbr.rel (%p482) target = $region80
      $region79: #{tpu_custom_call.1} parent=75 // pred_region
        %p485 = scmp.lt.s32.totalorder %s25, 1
        %s486 = scalar_select %p485, %s25, 1
        %s487 = scalar_lea.vmem %s0, %s486
      $region80: #{tpu_custom_call.1} parent=75 // pred_fallthru
        _
      // Predicated region
      $region81: #{tpu_custom_call.1} parent=75 // pred_check
        %p488 = pneg %p71
      $region82: #{tpu_custom_call.1} parent=75 // pred_check_branch
        %490 = sbr.rel (%p488) target = $region84
      $region83: #{tpu_custom_call.1} parent=75 // pred_region
        %p491 = scmp.lt.s32.totalorder %s25, 1
        %s492 = scalar_select %p491, %s25, 1
        %s493 = smul.addr %s492, 64
        %s494 = smul.addr %s493, 4
        %s495 = scalar_lea.vmem %s1, %s494
      $region84: #{tpu_custom_call.1} parent=75 // pred_fallthru
        _
    $region76: #{tpu_custom_call.1} parent=5 // pred_fallthru
      _
    %p496 = scmp.le.s32.totalorder 1, %s25
    %p497 = scmp.lt.s32.totalorder %s25, 3
    %p498 = pnand %p496, %p497
    %p499 = pneg %p498
    // Predicated region
    $region85: #{tpu_custom_call.1} parent=5 // pred_check
      _
    $region86: #{tpu_custom_call.1} parent=5 // pred_check_branch
      %501 = sbr.rel (%p498) target = $region88
    $region87: #{tpu_custom_call.1} parent=5 // pred_region
      %s502 = ssub.s32 %s25, 1
      %p503 = scmp.lt.s32.totalorder %s30, 1
      %s504 = scalar_select %p503, %s30, 1
      %s505 = scalar_lea.vmem %s0, %s504
      %p506 = pneg %p51
      %p507 = pneg %p48
      %p508 = scmp.lt.s32.totalorder %s30, 1
      %s509 = scalar_select %p508, %s30, 1
      %s510 = smul.addr %s509, 64
      %s511 = smul.addr %s510, 4
      %s512 = scalar_lea.vmem %s1, %s511
      %p513 = pneg %p77
      %p514 = pneg %p74
      %p515 = pneg %p98
      %p516 = pneg %p95
      %p517 = pneg %p119
      %p518 = pneg %p116
      %p519 = pneg %p140
      %p520 = pneg %p137
      %p521 = pneg %p161
      %p522 = pneg %p158
      %p523 = pneg %p182
      %p524 = pneg %p179
      %p525 = pneg %p203
      %p526 = pneg %p200
      %p527 = pneg %p224
      %p528 = pneg %p221
      %p529 = pneg %p245
      %p530 = pneg %p242
      %p531 = pneg %p266
      %p532 = pneg %p263
      %p533 = pneg %p287
      %p534 = pneg %p284
      %p535 = pneg %p308
      %p536 = pneg %p305
      %p537 = pneg %p329
      %p538 = pneg %p326
      %p539 = pneg %p350
      %p540 = pneg %p347
      %p541 = pneg %p371
      %p542 = pneg %p368
      %p543 = pneg %p392
      %p544 = pneg %p389
      %p545 = pneg %p418
      %p546 = pneg %p415
      %p547 = scmp.lt.s32.totalorder %s30, 1
      %s548 = scalar_select %p547, %s30, 1
      %s549 = scalar_lea.vmem %s17, %s548
      %p550 = scmp.lt.s32.totalorder %s30, 1
      %s551 = scalar_select %p550, %s30, 1
      %s552 = scalar_lea.vmem %s0, %s551
      %p553 = scmp.lt.s32.totalorder %s30, 1
      %s554 = scalar_select %p553, %s30, 1
      %s555 = smul.addr %s554, 64
      %s556 = smul.addr %s555, 4
      %s557 = scalar_lea.vmem %s1, %s556
      %p558 = scmp.lt.s32.totalorder %s30, 1
      %s559 = scalar_select %p558, %s30, 1
      %s560 = scalar_lea.vmem %s17, %s559
      %v562 = vld [vmem:[%s4] sm:$0x1]
      %v564 = vlaneseq
      %v565 = vshrl.u32 %v564, 7
      %v566 = vsub.s32 0, %v565
      %v567 = vrot.slane %v562, %v566
      %vm569 = vcmask 523264
      %570 = vst.msk [vmem:[#allocation2] sm:$0xff] %vm569, %v567
      %v571 = vld [vmem:[%s4] sm:$0x1]
      %v573 = vlaneseq
      %v574 = vshrl.u32 %v573, 7
      %v575 = vsub.s32 0, %v574
      %v576 = vrot.slane %v571, %v575
      %578 = vst.msk [vmem:[#allocation2 + $0x200] sm:$0xff] %vm569, %v576
      %579 = vst.msk [vmem:[#allocation2 + $0x208] sm:$0xff] %vm569, %v576
      %v580 = vld [vmem:[%s7] sm:$0x1]
      %v582 = vlaneseq
      %v583 = vshrl.u32 %v582, 7
      %v584 = vsub.s32 0, %v583
      %v585 = vrot.slane %v580, %v584
      %587 = vst.msk [vmem:[#allocation3] sm:$0xff] %vm569, %v585
      %v588 = vld [vmem:[%s7] sm:$0x1]
      %v590 = vlaneseq
      %v591 = vshrl.u32 %v590, 7
      %v592 = vsub.s32 0, %v591
      %v593 = vrot.slane %v588, %v592
      %595 = vst.msk [vmem:[#allocation3 + $0x200] sm:$0xff] %vm569, %v593
      %596 = vst.msk [vmem:[#allocation3 + $0x208] sm:$0xff] %vm569, %v593
      %v597 = vld [vmem:[%s557] sm:$0xf]
      %v598 = vld [vmem:[%s557 + $0x4] sm:$0xf]
      %v599 = vld [vmem:[%s557 + $0x8] sm:$0xf]
      %v600 = vld [vmem:[%s557 + $0xc] sm:$0xf]
      %v601 = vld [vmem:[%s557 + $0x10] sm:$0xf]
      %v602 = vld [vmem:[%s557 + $0x14] sm:$0xf]
      %v603 = vld [vmem:[%s557 + $0x18] sm:$0xf]
      %v604 = vld [vmem:[%s557 + $0x1c] sm:$0xf]
      %v605 = vld [vmem:[%s557 + $0x20] sm:$0xf]
      %v606 = vld [vmem:[%s557 + $0x24] sm:$0xf]
      %v607 = vld [vmem:[%s557 + $0x28] sm:$0xf]
      %v608 = vld [vmem:[%s557 + $0x2c] sm:$0xf]
      %v609 = vld [vmem:[%s557 + $0x30] sm:$0xf]
      %v610 = vld [vmem:[%s557 + $0x34] sm:$0xf]
      %v611 = vld [vmem:[%s557 + $0x38] sm:$0xf]
      %v612 = vld [vmem:[%s557 + $0x3c] sm:$0xf]
      %v613 = vld [vmem:[%s557 + $0x40] sm:$0xf]
      %v614 = vld [vmem:[%s557 + $0x44] sm:$0xf]
      %v615 = vld [vmem:[%s557 + $0x48] sm:$0xf]
      %v616 = vld [vmem:[%s557 + $0x4c] sm:$0xf]
      %v617 = vld [vmem:[%s557 + $0x50] sm:$0xf]
      %v618 = vld [vmem:[%s557 + $0x54] sm:$0xf]
      %v619 = vld [vmem:[%s557 + $0x58] sm:$0xf]
      %v620 = vld [vmem:[%s557 + $0x5c] sm:$0xf]
      %v621 = vld [vmem:[%s557 + $0x60] sm:$0xf]
      %v622 = vld [vmem:[%s557 + $0x64] sm:$0xf]
      %v623 = vld [vmem:[%s557 + $0x68] sm:$0xf]
      %v624 = vld [vmem:[%s557 + $0x6c] sm:$0xf]
      %v625 = vld [vmem:[%s557 + $0x70] sm:$0xf]
      %v626 = vld [vmem:[%s557 + $0x74] sm:$0xf]
      %v627 = vld [vmem:[%s557 + $0x78] sm:$0xf]
      %v628 = vld [vmem:[%s557 + $0x7c] sm:$0xf]
      %v629 = vld [vmem:[%s2] sm:$0xf]
      %v630 = vld [vmem:[%s2 + $0x4] sm:$0xf]
      %v631 = vld [vmem:[%s3] sm:$0x1]
      %v633 = vlaneseq
      %v634 = vshrl.u32 %v633, 7
      %v635 = vsub.s32 0, %v634
      %v636 = vrot.slane %v631, %v635
      %v670 = vunpack.c.l.b16 %v597
      %v671 = vunpack.c.l.b16 %v598
      %v672 = vunpack.c.l.b16 %v599
      %v673 = vunpack.c.l.b16 %v600
      %v674 = vunpack.c.l.b16 %v601
      %v675 = vunpack.c.l.b16 %v602
      %v676 = vunpack.c.l.b16 %v603
      %v677 = vunpack.c.l.b16 %v604
      %v678 = vunpack.c.l.b16 %v605
      %v679 = vunpack.c.l.b16 %v606
      %v680 = vunpack.c.l.b16 %v607
      %v681 = vunpack.c.l.b16 %v608
      %v682 = vunpack.c.l.b16 %v609
      %v683 = vunpack.c.l.b16 %v610
      %v684 = vunpack.c.l.b16 %v611
      %v685 = vunpack.c.l.b16 %v612
      %v686 = vunpack.c.l.b16 %v613
      %v687 = vunpack.c.l.b16 %v614
      %v688 = vunpack.c.l.b16 %v615
      %v689 = vunpack.c.l.b16 %v616
      %v690 = vunpack.c.l.b16 %v617
      %v691 = vunpack.c.l.b16 %v618
      %v692 = vunpack.c.l.b16 %v619
      %v693 = vunpack.c.l.b16 %v620
      %v694 = vunpack.c.l.b16 %v621
      %v695 = vunpack.c.l.b16 %v622
      %v696 = vunpack.c.l.b16 %v623
      %v697 = vunpack.c.l.b16 %v624
      %v698 = vunpack.c.l.b16 %v625
      %v699 = vunpack.c.l.b16 %v626
      %v700 = vunpack.c.l.b16 %v627
      %v701 = vunpack.c.l.b16 %v628
      %v702 = vpack.c.b16 %v671, %v670
      %v703 = vpack.c.b16 %v673, %v672
      %v704 = vpack.c.b16 %v675, %v674
      %v705 = vpack.c.b16 %v677, %v676
      %v706 = vpack.c.b16 %v679, %v678
      %v707 = vpack.c.b16 %v681, %v680
      %v708 = vpack.c.b16 %v683, %v682
      %v709 = vpack.c.b16 %v685, %v684
      %v710 = vpack.c.b16 %v687, %v686
      %v711 = vpack.c.b16 %v689, %v688
      %v712 = vpack.c.b16 %v691, %v690
      %v713 = vpack.c.b16 %v693, %v692
      %v714 = vpack.c.b16 %v695, %v694
      %v715 = vpack.c.b16 %v697, %v696
      %v716 = vpack.c.b16 %v699, %v698
      %v717 = vpack.c.b16 %v701, %v700
      %v720 = vunpack.c.l.b16 %v629
      %v721 = vunpack.c.l.b16 %v630
      %v722 = vpack.c.b16 %v721, %v720
      %vm724 = vcmask 130048
      %v726 = vsel %vm724, %v702, 0
      %v729 = vsel %vm724, %v703, 0
      %v732 = vsel %vm724, %v704, 0
      %v735 = vsel %vm724, %v705, 0
      %v738 = vsel %vm724, %v706, 0
      %v741 = vsel %vm724, %v707, 0
      %v744 = vsel %vm724, %v708, 0
      %v747 = vsel %vm724, %v709, 0
      %v750 = vsel %vm724, %v710, 0
      %v753 = vsel %vm724, %v711, 0
      %v756 = vsel %vm724, %v712, 0
      %v759 = vsel %vm724, %v713, 0
      %v762 = vsel %vm724, %v714, 0
      %v765 = vsel %vm724, %v715, 0
      %v768 = vsel %vm724, %v716, 0
      %v771 = vsel %vm724, %v717, 0
      %773 = vmatprep.subr.bf16.mxu0 0
      %774 = vmatpush1.bf16.msra.mxu0 %v722
      %775 = vmatprep.subr.bf16.mxu0 0
      %776 = vmatpush1.bf16.msra.mxu0 0
      %777 = vmatprep.subr.bf16.mxu0 0
      %778 = vmatpush1.bf16.msra.mxu0 0
      %779 = vmatprep.subr.bf16.mxu0 0
      %780 = vmatpush1.bf16.msra.mxu0 0
      %781 = vmatprep.subr.bf16.mxu0 0
      %782 = vmatpush1.bf16.msra.mxu0 0
      %783 = vmatprep.subr.bf16.mxu0 0
      %784 = vmatpush1.bf16.msra.mxu0 0
      %785 = vmatprep.subr.bf16.mxu0 0
      %786 = vmatpush1.bf16.msra.mxu0 0
      %787 = vmatprep.subr.bf16.mxu0 0
      %788 = vmatpush1.bf16.msra.mxu0 0
      %789 = vmatprep.subr.bf16.mxu0 0
      %790 = vmatpush1.bf16.msra.mxu0 0
      %791 = vmatprep.subr.bf16.mxu0 0
      %792 = vmatpush1.bf16.msra.mxu0 0
      %793 = vmatprep.subr.bf16.mxu0 0
      %794 = vmatpush1.bf16.msra.mxu0 0
      %795 = vmatprep.subr.bf16.mxu0 0
      %796 = vmatpush1.bf16.msra.mxu0 0
      %797 = vmatprep.subr.bf16.mxu0 0
      %798 = vmatpush1.bf16.msra.mxu0 0
      %799 = vmatprep.subr.bf16.mxu0 0
      %800 = vmatpush1.bf16.msra.mxu0 0
      %801 = vmatprep.subr.bf16.mxu0 0
      %802 = vmatpush1.bf16.msra.mxu0 0
      %803 = vmatprep.subr.bf16.mxu0 0
      %804 = vmatpush1.bf16.msra.mxu0 0
      %805 = vmatprep.mubr.bf16.mxu0 0
      %806 = vmatmul.mubr.bf16.gmra.mrb[0].mxu0 %v726
      %v807 = vpop.f32.mrb[0].mxu0
      %v808 = vadd.f32 %v636, %v807
      %v809 = vpop.f32.mrb[0].mxu0
      %v810 = vpop.f32.mrb[0].mxu0
      %v811 = vadd.f32 %v636, %v810
      %v812 = vpop.f32.mrb[0].mxu0
      %813 = vmatprep.mubr.bf16.mxu0 0
      %814 = vmatmul.mubr.bf16.gmra.mrb[0].mxu0 %v729
      %v815 = vpop.f32.mrb[0].mxu0
      %v816 = vadd.f32 %v636, %v815
      %v817 = vpop.f32.mrb[0].mxu0
      %v818 = vpop.f32.mrb[0].mxu0
      %v819 = vadd.f32 %v636, %v818
      %v820 = vpop.f32.mrb[0].mxu0
      %821 = vmatprep.mubr.bf16.mxu0 0
      %822 = vmatmul.mubr.bf16.gmra.mrb[0].mxu0 %v732
      %v823 = vpop.f32.mrb[0].mxu0
      %v824 = vadd.f32 %v636, %v823
      %v825 = vpop.f32.mrb[0].mxu0
      %v826 = vpop.f32.mrb[0].mxu0
      %v827 = vadd.f32 %v636, %v826
      %v828 = vpop.f32.mrb[0].mxu0
      %829 = vmatprep.mubr.bf16.mxu0 0
      %830 = vmatmul.mubr.bf16.gmra.mrb[0].mxu0 %v735
      %v831 = vpop.f32.mrb[0].mxu0
      %v832 = vadd.f32 %v636, %v831
      %v833 = vpop.f32.mrb[0].mxu0
      %v834 = vpop.f32.mrb[0].mxu0
      %v835 = vadd.f32 %v636, %v834
      %v836 = vpop.f32.mrb[0].mxu0
      %837 = vmatprep.mubr.bf16.mxu0 0
      %838 = vmatmul.mubr.bf16.gmra.mrb[0].mxu0 %v738
      %v839 = vpop.f32.mrb[0].mxu0
      %v840 = vadd.f32 %v636, %v839
      %v841 = vpop.f32.mrb[0].mxu0
      %v842 = vpop.f32.mrb[0].mxu0
      %v843 = vadd.f32 %v636, %v842
      %v844 = vpop.f32.mrb[0].mxu0
      %845 = vmatprep.mubr.bf16.mxu0 0
      %846 = vmatmul.mubr.bf16.gmra.mrb[0].mxu0 %v741
      %v847 = vpop.f32.mrb[0].mxu0
      %v848 = vadd.f32 %v636, %v847
      %v849 = vpop.f32.mrb[0].mxu0
      %v850 = vpop.f32.mrb[0].mxu0
      %v851 = vadd.f32 %v636, %v850
      %v852 = vpop.f32.mrb[0].mxu0
      %853 = vmatprep.mubr.bf16.mxu0 0
      %854 = vmatmul.mubr.bf16.gmra.mrb[0].mxu0 %v744
      %v855 = vpop.f32.mrb[0].mxu0
      %v856 = vadd.f32 %v636, %v855
      %v857 = vpop.f32.mrb[0].mxu0
      %v858 = vpop.f32.mrb[0].mxu0
      %v859 = vadd.f32 %v636, %v858
      %v860 = vpop.f32.mrb[0].mxu0
      %861 = vmatprep.mubr.bf16.mxu0 0
      %862 = vmatmul.mubr.bf16.gmra.mrb[0].mxu0 %v747
      %v863 = vpop.f32.mrb[0].mxu0
      %v864 = vadd.f32 %v636, %v863
      %v865 = vpop.f32.mrb[0].mxu0
      %v866 = vpop.f32.mrb[0].mxu0
      %v867 = vadd.f32 %v636, %v866
      %v868 = vpop.f32.mrb[0].mxu0
      %869 = vmatprep.mubr.bf16.mxu0 0
      %870 = vmatmul.mubr.bf16.gmra.mrb[0].mxu0 %v750
      %v871 = vpop.f32.mrb[0].mxu0
      %v872 = vadd.f32 %v636, %v871
      %v873 = vpop.f32.mrb[0].mxu0
      %v874 = vpop.f32.mrb[0].mxu0
      %v875 = vadd.f32 %v636, %v874
      %v876 = vpop.f32.mrb[0].mxu0
      %877 = vmatprep.mubr.bf16.mxu0 0
      %878 = vmatmul.mubr.bf16.gmra.mrb[0].mxu0 %v753
      %v879 = vpop.f32.mrb[0].mxu0
      %v880 = vadd.f32 %v636, %v879
      %v881 = vpop.f32.mrb[0].mxu0
      %v882 = vpop.f32.mrb[0].mxu0
      %v883 = vadd.f32 %v636, %v882
      %v884 = vpop.f32.mrb[0].mxu0
      %885 = vmatprep.mubr.bf16.mxu0 0
      %886 = vmatmul.mubr.bf16.gmra.mrb[0].mxu0 %v756
      %v887 = vpop.f32.mrb[0].mxu0
      %v888 = vadd.f32 %v636, %v887
      %v889 = vpop.f32.mrb[0].mxu0
      %v890 = vpop.f32.mrb[0].mxu0
      %v891 = vadd.f32 %v636, %v890
      %v892 = vpop.f32.mrb[0].mxu0
      %893 = vmatprep.mubr.bf16.mxu0 0
      %894 = vmatmul.mubr.bf16.gmra.mrb[0].mxu0 %v759
      %v895 = vpop.f32.mrb[0].mxu0
      %v896 = vadd.f32 %v636, %v895
      %v897 = vpop.f32.mrb[0].mxu0
      %v898 = vpop.f32.mrb[0].mxu0
      %v899 = vadd.f32 %v636, %v898
      %v900 = vpop.f32.mrb[0].mxu0
      %901 = vmatprep.mubr.bf16.mxu0 0
      %902 = vmatmul.mubr.bf16.gmra.mrb[0].mxu0 %v762
      %v903 = vpop.f32.mrb[0].mxu0
      %v904 = vadd.f32 %v636, %v903
      %v905 = vpop.f32.mrb[0].mxu0
      %v906 = vpop.f32.mrb[0].mxu0
      %v907 = vadd.f32 %v636, %v906
      %v908 = vpop.f32.mrb[0].mxu0
      %909 = vmatprep.mubr.bf16.mxu0 0
      %910 = vmatmul.mubr.bf16.gmra.mrb[0].mxu0 %v765
      %v911 = vpop.f32.mrb[0].mxu0
      %v912 = vadd.f32 %v636, %v911
      %v913 = vpop.f32.mrb[0].mxu0
      %v914 = vpop.f32.mrb[0].mxu0
      %v915 = vadd.f32 %v636, %v914
      %v916 = vpop.f32.mrb[0].mxu0
      %917 = vmatprep.mubr.bf16.mxu0 0
      %918 = vmatmul.mubr.bf16.gmra.mrb[0].mxu0 %v768
      %v919 = vpop.f32.mrb[0].mxu0
      %v920 = vadd.f32 %v636, %v919
      %v921 = vpop.f32.mrb[0].mxu0
      %v922 = vpop.f32.mrb[0].mxu0
      %v923 = vadd.f32 %v636, %v922
      %v924 = vpop.f32.mrb[0].mxu0
      %925 = vmatprep.mubr.bf16.mxu0 0
      %926 = vmatmul.mubr.bf16.gmra.mrb[0].mxu0 %v771
      %v927 = vpop.f32.mrb[0].mxu0
      %v928 = vadd.f32 %v636, %v927
      %v929 = vpop.f32.mrb[0].mxu0
      %v930 = vpop.f32.mrb[0].mxu0
      %v931 = vadd.f32 %v636, %v930
      %v932 = vpop.f32.mrb[0].mxu0
      %933 = vdwg.mxu0
      %v934 = vmax.f32 %v808, 0.0
      %v935 = vmax.f32 %v811, 0.0
      %v936 = vmax.f32 %v816, 0.0
      %v937 = vmax.f32 %v819, 0.0
      %v938 = vmax.f32 %v824, 0.0
      %v939 = vmax.f32 %v827, 0.0
      %v940 = vmax.f32 %v832, 0.0
      %v941 = vmax.f32 %v835, 0.0
      %v942 = vmax.f32 %v840, 0.0
      %v943 = vmax.f32 %v843, 0.0
      %v944 = vmax.f32 %v848, 0.0
      %v945 = vmax.f32 %v851, 0.0
      %v946 = vmax.f32 %v856, 0.0
      %v947 = vmax.f32 %v859, 0.0
      %v948 = vmax.f32 %v864, 0.0
      %v949 = vmax.f32 %v867, 0.0
      %v950 = vmax.f32 %v872, 0.0
      %v951 = vmax.f32 %v875, 0.0
      %v952 = vmax.f32 %v880, 0.0
      %v953 = vmax.f32 %v883, 0.0
      %v954 = vmax.f32 %v888, 0.0
      %v955 = vmax.f32 %v891, 0.0
      %v956 = vmax.f32 %v896, 0.0
      %v957 = vmax.f32 %v899, 0.0
      %v958 = vmax.f32 %v904, 0.0
      %v959 = vmax.f32 %v907, 0.0
      %v960 = vmax.f32 %v912, 0.0
      %v961 = vmax.f32 %v915, 0.0
      %v962 = vmax.f32 %v920, 0.0
      %v963 = vmax.f32 %v923, 0.0
      %v964 = vmax.f32 %v928, 0.0
      %v965 = vmax.f32 %v931, 0.0
      %966 = vst.msk [vmem:[#allocation2 + $0x8] sm:$0xff] %vm569, %v934
      %967 = vst.msk [vmem:[#allocation2 + $0x10] sm:$0xff] %vm569, %v935
      %968 = vst.msk [vmem:[#allocation2 + $0x18] sm:$0xff] %vm569, %v936
      %969 = vst.msk [vmem:[#allocation2 + $0x20] sm:$0xff] %vm569, %v937
      %970 = vst.msk [vmem:[#allocation2 + $0x28] sm:$0xff] %vm569, %v938
      %971 = vst.msk [vmem:[#allocation2 + $0x30] sm:$0xff] %vm569, %v939
      %972 = vst.msk [vmem:[#allocation2 + $0x38] sm:$0xff] %vm569, %v940
      %973 = vst.msk [vmem:[#allocation2 + $0x40] sm:$0xff] %vm569, %v941
      %974 = vst.msk [vmem:[#allocation2 + $0x48] sm:$0xff] %vm569, %v942
      %975 = vst.msk [vmem:[#allocation2 + $0x50] sm:$0xff] %vm569, %v943
      %976 = vst.msk [vmem:[#allocation2 + $0x58] sm:$0xff] %vm569, %v944
      %977 = vst.msk [vmem:[#allocation2 + $0x60] sm:$0xff] %vm569, %v945
      %978 = vst.msk [vmem:[#allocation2 + $0x68] sm:$0xff] %vm569, %v946
      %979 = vst.msk [vmem:[#allocation2 + $0x70] sm:$0xff] %vm569, %v947
      %980 = vst.msk [vmem:[#allocation2 + $0x78] sm:$0xff] %vm569, %v948
      %981 = vst.msk [vmem:[#allocation2 + $0x80] sm:$0xff] %vm569, %v949
      %982 = vst.msk [vmem:[#allocation2 + $0x88] sm:$0xff] %vm569, %v950
      %983 = vst.msk [vmem:[#allocation2 + $0x90] sm:$0xff] %vm569, %v951
      %984 = vst.msk [vmem:[#allocation2 + $0x98] sm:$0xff] %vm569, %v952
      %985 = vst.msk [vmem:[#allocation2 + $0xa0] sm:$0xff] %vm569, %v953
      %986 = vst.msk [vmem:[#allocation2 + $0xa8] sm:$0xff] %vm569, %v954
      %987 = vst.msk [vmem:[#allocation2 + $0xb0] sm:$0xff] %vm569, %v955
      %988 = vst.msk [vmem:[#allocation2 + $0xb8] sm:$0xff] %vm569, %v956
      %989 = vst.msk [vmem:[#allocation2 + $0xc0] sm:$0xff] %vm569, %v957
      %990 = vst.msk [vmem:[#allocation2 + $0xc8] sm:$0xff] %vm569, %v958
      %991 = vst.msk [vmem:[#allocation2 + $0xd0] sm:$0xff] %vm569, %v959
      %992 = vst.msk [vmem:[#allocation2 + $0xd8] sm:$0xff] %vm569, %v960
      %993 = vst.msk [vmem:[#allocation2 + $0xe0] sm:$0xff] %vm569, %v961
      %994 = vst.msk [vmem:[#allocation2 + $0xe8] sm:$0xff] %vm569, %v962
      %995 = vst.msk [vmem:[#allocation2 + $0xf0] sm:$0xff] %vm569, %v963
      %996 = vst.msk [vmem:[#allocation2 + $0xf8] sm:$0xff] %vm569, %v964
      %997 = vst.msk [vmem:[#allocation2 + $0x100] sm:$0xff] %vm569, %v965
      %v998 = vld [vmem:[%s557 + $0x80] sm:$0xf]
      %v999 = vld [vmem:[%s557 + $0x84] sm:$0xf]
      %v1000 = vld [vmem:[%s557 + $0x88] sm:$0xf]
      %v1001 = vld [vmem:[%s557 + $0x8c] sm:$0xf]
      %v1002 = vld [vmem:[%s557 + $0x90] sm:$0xf]
      %v1003 = vld [vmem:[%s557 + $0x94] sm:$0xf]
      %v1004 = vld [vmem:[%s557 + $0x98] sm:$0xf]
      %v1005 = vld [vmem:[%s557 + $0x9c] sm:$0xf]
      %v1006 = vld [vmem:[%s557 + $0xa0] sm:$0xf]
      %v1007 = vld [vmem:[%s557 + $0xa4] sm:$0xf]
      %v1008 = vld [vmem:[%s557 + $0xa8] sm:$0xf]
      %v1009 = vld [vmem:[%s557 + $0xac] sm:$0xf]
      %v1010 = vld [vmem:[%s557 + $0xb0] sm:$0xf]
      %v1011 = vld [vmem:[%s557 + $0xb4] sm:$0xf]
      %v1012 = vld [vmem:[%s557 + $0xb8] sm:$0xf]
      %v1013 = vld [vmem:[%s557 + $0xbc] sm:$0xf]
      %v1014 = vld [vmem:[%s557 + $0xc0] sm:$0xf]
      %v1015 = vld [vmem:[%s557 + $0xc4] sm:$0xf]
      %v1016 = vld [vmem:[%s557 + $0xc8] sm:$0xf]
      %v1017 = vld [vmem:[%s557 + $0xcc] sm:$0xf]
      %v1018 = vld [vmem:[%s557 + $0xd0] sm:$0xf]
      %v1019 = vld [vmem:[%s557 + $0xd4] sm:$0xf]
      %v1020 = vld [vmem:[%s557 + $0xd8] sm:$0xf]
      %v1021 = vld [vmem:[%s557 + $0xdc] sm:$0xf]
      %v1022 = vld [vmem:[%s557 + $0xe0] sm:$0xf]
      %v1023 = vld [vmem:[%s557 + $0xe4] sm:$0xf]
      %v1024 = vld [vmem:[%s557 + $0xe8] sm:$0xf]
      %v1025 = vld [vmem:[%s557 + $0xec] sm:$0xf]
      %v1026 = vld [vmem:[%s557 + $0xf0] sm:$0xf]
      %v1027 = vld [vmem:[%s557 + $0xf4] sm:$0xf]
      %v1028 = vld [vmem:[%s557 + $0xf8] sm:$0xf]
      %v1029 = vld [vmem:[%s557 + $0xfc] sm:$0xf]
      %v1030 = vld [vmem:[%s2] sm:$0xf]
      %v1031 = vld [vmem:[%s2 + $0x4] sm:$0xf]
      %v1032 = vld [vmem:[%s3] sm:$0x1]
      %v1034 = vlaneseq
      %v1035 = vshrl.u32 %v1034, 7
      %v1036 = vsub.s32 0, %v1035
      %v1037 = vrot.slane %v1032, %v1036
      %v1071 = vunpack.c.l.b16 %v998
      %v1072 = vunpack.c.l.b16 %v999
      %v1073 = vunpack.c.l.b16 %v1000
      %v1074 = vunpack.c.l.b16 %v1001
      %v1075 = vunpack.c.l.b16 %v1002
      %v1076 = vunpack.c.l.b16 %v1003
      %v1077 = vunpack.c.l.b16 %v1004
      %v1078 = vunpack.c.l.b16 %v1005
      %v1079 = vunpack.c.l.b16 %v1006
      %v1080 = vunpack.c.l.b16 %v1007
      %v1081 = vunpack.c.l.b16 %v1008
      %v1082 = vunpack.c.l.b16 %v1009
      %v1083 = vunpack.c.l.b16 %v1010
      %v1084 = vunpack.c.l.b16 %v1011
      %v1085 = vunpack.c.l.b16 %v1012
      %v1086 = vunpack.c.l.b16 %v1013
      %v1087 = vunpack.c.l.b16 %v1014
      %v1088 = vunpack.c.l.b16 %v1015
      %v1089 = vunpack.c.l.b16 %v1016
      %v1090 = vunpack.c.l.b16 %v1017
      %v1091 = vunpack.c.l.b16 %v1018
      %v1092 = vunpack.c.l.b16 %v1019
      %v1093 = vunpack.c.l.b16 %v1020
      %v1094 = vunpack.c.l.b16 %v1021
      %v1095 = vunpack.c.l.b16 %v1022
      %v1096 = vunpack.c.l.b16 %v1023
      %v1097 = vunpack.c.l.b16 %v1024
      %v1098 = vunpack.c.l.b16 %v1025
      %v1099 = vunpack.c.l.b16 %v1026
      %v1100 = vunpack.c.l.b16 %v1027
      %v1101 = vunpack.c.l.b16 %v1028
      %v1102 = vunpack.c.l.b16 %v1029
      %v1103 = vpack.c.b16 %v1072, %v1071
      %v1104 = vpack.c.b16 %v1074, %v1073
      %v1105 = vpack.c.b16 %v1076, %v1075
      %v1106 = vpack.c.b16 %v1078, %v1077
      %v1107 = vpack.c.b16 %v1080, %v1079
      %v1108 = vpack.c.b16 %v1082, %v1081
      %v1109 = vpack.c.b16 %v1084, %v1083
      %v1110 = vpack.c.b16 %v1086, %v1085
      %v1111 = vpack.c.b16 %v1088, %v1087
      %v1112 = vpack.c.b16 %v1090, %v1089
      %v1113 = vpack.c.b16 %v1092, %v1091
      %v1114 = vpack.c.b16 %v1094, %v1093
      %v1115 = vpack.c.b16 %v1096, %v1095
      %v1116 = vpack.c.b16 %v1098, %v1097
      %v1117 = vpack.c.b16 %v1100, %v1099
      %v1118 = vpack.c.b16 %v1102, %v1101
      %v1121 = vunpack.c.l.b16 %v1030
      %v1122 = vunpack.c.l.b16 %v1031
      %v1123 = vpack.c.b16 %v1122, %v1121
      %v1126 = vsel %vm724, %v1103, 0
      %v1129 = vsel %vm724, %v1104, 0
      %v1132 = vsel %vm724, %v1105, 0
      %v1135 = vsel %vm724, %v1106, 0
      %v1138 = vsel %vm724, %v1107, 0
      %v1141 = vsel %vm724, %v1108, 0
      %v1144 = vsel %vm724, %v1109, 0
      %v1147 = vsel %vm724, %v1110, 0
      %v1150 = vsel %vm724, %v1111, 0
      %v1153 = vsel %vm724, %v1112, 0
      %v1156 = vsel %vm724, %v1113, 0
      %v1159 = vsel %vm724, %v1114, 0
      %v1162 = vsel %vm724, %v1115, 0
      %v1165 = vsel %vm724, %v1116, 0
      %v1168 = vsel %vm724, %v1117, 0
      %v1171 = vsel %vm724, %v1118, 0
      %1173 = vmatprep.subr.bf16.mxu0 0
      %1174 = vmatpush1.bf16.msra.mxu0 %v1123
      %1175 = vmatprep.subr.bf16.mxu0 0
      %1176 = vmatpush1.bf16.msra.mxu0 0
      %1177 = vmatprep.subr.bf16.mxu0 0
      %1178 = vmatpush1.bf16.msra.mxu0 0
      %1179 = vmatprep.subr.bf16.mxu0 0
      %1180 = vmatpush1.bf16.msra.mxu0 0
      %1181 = vmatprep.subr.bf16.mxu0 0
      %1182 = vmatpush1.bf16.msra.mxu0 0
      %1183 = vmatprep.subr.bf16.mxu0 0
      %1184 = vmatpush1.bf16.msra.mxu0 0
      %1185 = vmatprep.subr.bf16.mxu0 0
      %1186 = vmatpush1.bf16.msra.mxu0 0
      %1187 = vmatprep.subr.bf16.mxu0 0
      %1188 = vmatpush1.bf16.msra.mxu0 0
      %1189 = vmatprep.subr.bf16.mxu0 0
      %1190 = vmatpush1.bf16.msra.mxu0 0
      %1191 = vmatprep.subr.bf16.mxu0 0
      %1192 = vmatpush1.bf16.msra.mxu0 0
      %1193 = vmatprep.subr.bf16.mxu0 0
      %1194 = vmatpush1.bf16.msra.mxu0 0
      %1195 = vmatprep.subr.bf16.mxu0 0
      %1196 = vmatpush1.bf16.msra.mxu0 0
      %1197 = vmatprep.subr.bf16.mxu0 0
      %1198 = vmatpush1.bf16.msra.mxu0 0
      %1199 = vmatprep.subr.bf16.mxu0 0
      %1200 = vmatpush1.bf16.msra.mxu0 0
      %1201 = vmatprep.subr.bf16.mxu0 0
      %1202 = vmatpush1.bf16.msra.mxu0 0
      %1203 = vmatprep.subr.bf16.mxu0 0
      %1204 = vmatpush1.bf16.msra.mxu0 0
      %1205 = vmatprep.mubr.bf16.mxu0 0
      %1206 = vmatmul.mubr.bf16.gmra.mrb[0].mxu0 %v1126
      %v1207 = vpop.f32.mrb[0].mxu0
      %v1208 = vadd.f32 %v1037, %v1207
      %v1209 = vpop.f32.mrb[0].mxu0
      %v1210 = vpop.f32.mrb[0].mxu0
      %v1211 = vadd.f32 %v1037, %v1210
      %v1212 = vpop.f32.mrb[0].mxu0
      %1213 = vmatprep.mubr.bf16.mxu0 0
      %1214 = vmatmul.mubr.bf16.gmra.mrb[0].mxu0 %v1129
      %v1215 = vpop.f32.mrb[0].mxu0
      %v1216 = vadd.f32 %v1037, %v1215
      %v1217 = vpop.f32.mrb[0].mxu0
      %v1218 = vpop.f32.mrb[0].mxu0
      %v1219 = vadd.f32 %v1037, %v1218
      %v1220 = vpop.f32.mrb[0].mxu0
      %1221 = vmatprep.mubr.bf16.mxu0 0
      %1222 = vmatmul.mubr.bf16.gmra.mrb[0].mxu0 %v1132
      %v1223 = vpop.f32.mrb[0].mxu0
      %v1224 = vadd.f32 %v1037, %v1223
      %v1225 = vpop.f32.mrb[0].mxu0
      %v1226 = vpop.f32.mrb[0].mxu0
      %v1227 = vadd.f32 %v1037, %v1226
      %v1228 = vpop.f32.mrb[0].mxu0
      %1229 = vmatprep.mubr.bf16.mxu0 0
      %1230 = vmatmul.mubr.bf16.gmra.mrb[0].mxu0 %v1135
      %v1231 = vpop.f32.mrb[0].mxu0
      %v1232 = vadd.f32 %v1037, %v1231
      %v1233 = vpop.f32.mrb[0].mxu0
      %v1234 = vpop.f32.mrb[0].mxu0
      %v1235 = vadd.f32 %v1037, %v1234
      %v1236 = vpop.f32.mrb[0].mxu0
      %1237 = vmatprep.mubr.bf16.mxu0 0
      %1238 = vmatmul.mubr.bf16.gmra.mrb[0].mxu0 %v1138
      %v1239 = vpop.f32.mrb[0].mxu0
      %v1240 = vadd.f32 %v1037, %v1239
      %v1241 = vpop.f32.mrb[0].mxu0
      %v1242 = vpop.f32.mrb[0].mxu0
      %v1243 = vadd.f32 %v1037, %v1242
      %v1244 = vpop.f32.mrb[0].mxu0
      %1245 = vmatprep.mubr.bf16.mxu0 0
      %1246 = vmatmul.mubr.bf16.gmra.mrb[0].mxu0 %v1141
      %v1247 = vpop.f32.mrb[0].mxu0
      %v1248 = vadd.f32 %v1037, %v1247
      %v1249 = vpop.f32.mrb[0].mxu0
      %v1250 = vpop.f32.mrb[0].mxu0
      %v1251 = vadd.f32 %v1037, %v1250
      %v1252 = vpop.f32.mrb[0].mxu0
      %1253 = vmatprep.mubr.bf16.mxu0 0
      %1254 = vmatmul.mubr.bf16.gmra.mrb[0].mxu0 %v1144
      %v1255 = vpop.f32.mrb[0].mxu0
      %v1256 = vadd.f32 %v1037, %v1255
      %v1257 = vpop.f32.mrb[0].mxu0
      %v1258 = vpop.f32.mrb[0].mxu0
      %v1259 = vadd.f32 %v1037, %v1258
      %v1260 = vpop.f32.mrb[0].mxu0
      %1261 = vmatprep.mubr.bf16.mxu0 0
      %1262 = vmatmul.mubr.bf16.gmra.mrb[0].mxu0 %v1147
      %v1263 = vpop.f32.mrb[0].mxu0
      %v1264 = vadd.f32 %v1037, %v1263
      %v1265 = vpop.f32.mrb[0].mxu0
      %v1266 = vpop.f32.mrb[0].mxu0
      %v1267 = vadd.f32 %v1037, %v1266
      %v1268 = vpop.f32.mrb[0].mxu0
      %1269 = vmatprep.mubr.bf16.mxu0 0
      %1270 = vmatmul.mubr.bf16.gmra.mrb[0].mxu0 %v1150
      %v1271 = vpop.f32.mrb[0].mxu0
      %v1272 = vadd.f32 %v1037, %v1271
      %v1273 = vpop.f32.mrb[0].mxu0
      %v1274 = vpop.f32.mrb[0].mxu0
      %v1275 = vadd.f32 %v1037, %v1274
      %v1276 = vpop.f32.mrb[0].mxu0
      %1277 = vmatprep.mubr.bf16.mxu0 0
      %1278 = vmatmul.mubr.bf16.gmra.mrb[0].mxu0 %v1153
      %v1279 = vpop.f32.mrb[0].mxu0
      %v1280 = vadd.f32 %v1037, %v1279
      %v1281 = vpop.f32.mrb[0].mxu0
      %v1282 = vpop.f32.mrb[0].mxu0
      %v1283 = vadd.f32 %v1037, %v1282
      %v1284 = vpop.f32.mrb[0].mxu0
      %1285 = vmatprep.mubr.bf16.mxu0 0
      %1286 = vmatmul.mubr.bf16.gmra.mrb[0].mxu0 %v1156
      %v1287 = vpop.f32.mrb[0].mxu0
      %v1288 = vadd.f32 %v1037, %v1287
      %v1289 = vpop.f32.mrb[0].mxu0
      %v1290 = vpop.f32.mrb[0].mxu0
      %v1291 = vadd.f32 %v1037, %v1290
      %v1292 = vpop.f32.mrb[0].mxu0
      %1293 = vmatprep.mubr.bf16.mxu0 0
      %1294 = vmatmul.mubr.bf16.gmra.mrb[0].mxu0 %v1159
      %v1295 = vpop.f32.mrb[0].mxu0
      %v1296 = vadd.f32 %v1037, %v1295
      %v1297 = vpop.f32.mrb[0].mxu0
      %v1298 = vpop.f32.mrb[0].mxu0
      %v1299 = vadd.f32 %v1037, %v1298
      %v1300 = vpop.f32.mrb[0].mxu0
      %1301 = vmatprep.mubr.bf16.mxu0 0
      %1302 = vmatmul.mubr.bf16.gmra.mrb[0].mxu0 %v1162
      %v1303 = vpop.f32.mrb[0].mxu0
      %v1304 = vadd.f32 %v1037, %v1303
      %v1305 = vpop.f32.mrb[0].mxu0
      %v1306 = vpop.f32.mrb[0].mxu0
      %v1307 = vadd.f32 %v1037, %v1306
      %v1308 = vpop.f32.mrb[0].mxu0
      %1309 = vmatprep.mubr.bf16.mxu0 0
      %1310 = vmatmul.mubr.bf16.gmra.mrb[0].mxu0 %v1165
      %v1311 = vpop.f32.mrb[0].mxu0
      %v1312 = vadd.f32 %v1037, %v1311
      %v1313 = vpop.f32.mrb[0].mxu0
      %v1314 = vpop.f32.mrb[0].mxu0
      %v1315 = vadd.f32 %v1037, %v1314
      %v1316 = vpop.f32.mrb[0].mxu0
      %1317 = vmatprep.mubr.bf16.mxu0 0
      %1318 = vmatmul.mubr.bf16.gmra.mrb[0].mxu0 %v1168
      %v1319 = vpop.f32.mrb[0].mxu0
      %v1320 = vadd.f32 %v1037, %v1319
      %v1321 = vpop.f32.mrb[0].mxu0
      %v1322 = vpop.f32.mrb[0].mxu0
      %v1323 = vadd.f32 %v1037, %v1322
      %v1324 = vpop.f32.mrb[0].mxu0
      %1325 = vmatprep.mubr.bf16.mxu0 0
      %1326 = vmatmul.mubr.bf16.gmra.mrb[0].mxu0 %v1171
      %v1327 = vpop.f32.mrb[0].mxu0
      %v1328 = vadd.f32 %v1037, %v1327
      %v1329 = vpop.f32.mrb[0].mxu0
      %v1330 = vpop.f32.mrb[0].mxu0
      %v1331 = vadd.f32 %v1037, %v1330
      %v1332 = vpop.f32.mrb[0].mxu0
      %1333 = vdwg.mxu0
      %v1334 = vmax.f32 %v1208, 0.0
      %v1335 = vmax.f32 %v1211, 0.0
      %v1336 = vmax.f32 %v1216, 0.0
      %v1337 = vmax.f32 %v1219, 0.0
      %v1338 = vmax.f32 %v1224, 0.0
      %v1339 = vmax.f32 %v1227, 0.0
      %v1340 = vmax.f32 %v1232, 0.0
      %v1341 = vmax.f32 %v1235, 0.0
      %v1342 = vmax.f32 %v1240, 0.0
      %v1343 = vmax.f32 %v1243, 0.0
      %v1344 = vmax.f32 %v1248, 0.0
      %v1345 = vmax.f32 %v1251, 0.0
      %v1346 = vmax.f32 %v1256, 0.0
      %v1347 = vmax.f32 %v1259, 0.0
      %v1348 = vmax.f32 %v1264, 0.0
      %v1349 = vmax.f32 %v1267, 0.0
      %v1350 = vmax.f32 %v1272, 0.0
      %v1351 = vmax.f32 %v1275, 0.0
      %v1352 = vmax.f32 %v1280, 0.0
      %v1353 = vmax.f32 %v1283, 0.0
      %v1354 = vmax.f32 %v1288, 0.0
      %v1355 = vmax.f32 %v1291, 0.0
      %v1356 = vmax.f32 %v1296, 0.0
      %v1357 = vmax.f32 %v1299, 0.0
      %v1358 = vmax.f32 %v1304, 0.0
      %v1359 = vmax.f32 %v1307, 0.0
      %v1360 = vmax.f32 %v1312, 0.0
      %v1361 = vmax.f32 %v1315, 0.0
      %v1362 = vmax.f32 %v1320, 0.0
      %v1363 = vmax.f32 %v1323, 0.0
      %v1364 = vmax.f32 %v1328, 0.0
      %v1365 = vmax.f32 %v1331, 0.0
      %1366 = vst.msk [vmem:[#allocation2 + $0x108] sm:$0xff] %vm569, %v1334
      %1367 = vst.msk [vmem:[#allocation2 + $0x110] sm:$0xff] %vm569, %v1335
      %1368 = vst.msk [vmem:[#allocation2 + $0x118] sm:$0xff] %vm569, %v1336
      %1369 = vst.msk [vmem:[#allocation2 + $0x120] sm:$0xff] %vm569, %v1337
      %1370 = vst.msk [vmem:[#allocation2 + $0x128] sm:$0xff] %vm569, %v1338
      %1371 = vst.msk [vmem:[#allocation2 + $0x130] sm:$0xff] %vm569, %v1339
      %1372 = vst.msk [vmem:[#allocation2 + $0x138] sm:$0xff] %vm569, %v1340
      %1373 = vst.msk [vmem:[#allocation2 + $0x140] sm:$0xff] %vm569, %v1341
      %1374 = vst.msk [vmem:[#allocation2 + $0x148] sm:$0xff] %vm569, %v1342
      %1375 = vst.msk [vmem:[#allocation2 + $0x150] sm:$0xff] %vm569, %v1343
      %1376 = vst.msk [vmem:[#allocation2 + $0x158] sm:$0xff] %vm569, %v1344
      %1377 = vst.msk [vmem:[#allocation2 + $0x160] sm:$0xff] %vm569, %v1345
      %1378 = vst.msk [vmem:[#allocation2 + $0x168] sm:$0xff] %vm569, %v1346
      %1379 = vst.msk [vmem:[#allocation2 + $0x170] sm:$0xff] %vm569, %v1347
      %1380 = vst.msk [vmem:[#allocation2 + $0x178] sm:$0xff] %vm569, %v1348
      %1381 = vst.msk [vmem:[#allocation2 + $0x180] sm:$0xff] %vm569, %v1349
      %1382 = vst.msk [vmem:[#allocation2 + $0x188] sm:$0xff] %vm569, %v1350
      %1383 = vst.msk [vmem:[#allocation2 + $0x190] sm:$0xff] %vm569, %v1351
      %1384 = vst.msk [vmem:[#allocation2 + $0x198] sm:$0xff] %vm569, %v1352
      %1385 = vst.msk [vmem:[#allocation2 + $0x1a0] sm:$0xff] %vm569, %v1353
      %1386 = vst.msk [vmem:[#allocation2 + $0x1a8] sm:$0xff] %vm569, %v1354
      %1387 = vst.msk [vmem:[#allocation2 + $0x1b0] sm:$0xff] %vm569, %v1355
      %1388 = vst.msk [vmem:[#allocation2 + $0x1b8] sm:$0xff] %vm569, %v1356
      %1389 = vst.msk [vmem:[#allocation2 + $0x1c0] sm:$0xff] %vm569, %v1357
      %1390 = vst.msk [vmem:[#allocation2 + $0x1c8] sm:$0xff] %vm569, %v1358
      %1391 = vst.msk [vmem:[#allocation2 + $0x1d0] sm:$0xff] %vm569, %v1359
      %1392 = vst.msk [vmem:[#allocation2 + $0x1d8] sm:$0xff] %vm569, %v1360
      %1393 = vst.msk [vmem:[#allocation2 + $0x1e0] sm:$0xff] %vm569, %v1361
      %1394 = vst.msk [vmem:[#allocation2 + $0x1e8] sm:$0xff] %vm569, %v1362
      %1395 = vst.msk [vmem:[#allocation2 + $0x1f0] sm:$0xff] %vm569, %v1363
      %1396 = vst.msk [vmem:[#allocation2 + $0x1f8] sm:$0xff] %vm569, %v1364
      %vm1397 = vcmask 522240
      %1398 = vst.msk [vmem:[#allocation2 + $0x200] sm:$0x7f] %vm1397, %v1365
      %v1399 = vld [vmem:[#allocation2] sm:$0xff]
      %v1400 = vld [vmem:[#allocation2 + $0x8] sm:$0xff]
      %v1401 = vld [vmem:[#allocation2 + $0x10] sm:$0xff]
      %v1402 = vld [vmem:[#allocation2 + $0x18] sm:$0xff]
      %v1403 = vld [vmem:[#allocation2 + $0x20] sm:$0xff]
      %v1404 = vld [vmem:[#allocation2 + $0x28] sm:$0xff]
      %v1405 = vld [vmem:[#allocation2 + $0x30] sm:$0xff]
      %v1406 = vld [vmem:[#allocation2 + $0x38] sm:$0xff]
      %v1407 = vld [vmem:[#allocation2 + $0x40] sm:$0xff]
      %v1408 = vld [vmem:[#allocation2 + $0x48] sm:$0xff]
      %v1409 = vld [vmem:[#allocation2 + $0x50] sm:$0xff]
      %v1410 = vld [vmem:[#allocation2 + $0x58] sm:$0xff]
      %v1411 = vld [vmem:[#allocation2 + $0x60] sm:$0xff]
      %v1412 = vld [vmem:[#allocation2 + $0x68] sm:$0xff]
      %v1413 = vld [vmem:[#allocation2 + $0x70] sm:$0xff]
      %v1414 = vld [vmem:[#allocation2 + $0x78] sm:$0xff]
      %v1415 = vld [vmem:[#allocation2 + $0x80] sm:$0xff]
      %v1416 = vld [vmem:[#allocation2 + $0x88] sm:$0xff]
      %v1417 = vld [vmem:[#allocation2 + $0x90] sm:$0xff]
      %v1418 = vld [vmem:[#allocation2 + $0x98] sm:$0xff]
      %v1419 = vld [vmem:[#allocation2 + $0xa0] sm:$0xff]
      %v1420 = vld [vmem:[#allocation2 + $0xa8] sm:$0xff]
      %v1421 = vld [vmem:[#allocation2 + $0xb0] sm:$0xff]
      %v1422 = vld [vmem:[#allocation2 + $0xb8] sm:$0xff]
      %v1423 = vld [vmem:[#allocation2 + $0xc0] sm:$0xff]
      %v1424 = vld [vmem:[#allocation2 + $0xc8] sm:$0xff]
      %v1425 = vld [vmem:[#allocation2 + $0xd0] sm:$0xff]
      %v1426 = vld [vmem:[#allocation2 + $0xd8] sm:$0xff]
      %v1427 = vld [vmem:[#allocation2 + $0xe0] sm:$0xff]
      %v1428 = vld [vmem:[#allocation2 + $0xe8] sm:$0xff]
      %v1429 = vld [vmem:[#allocation2 + $0xf0] sm:$0xff]
      %v1430 = vld [vmem:[#allocation2 + $0xf8] sm:$0xff]
      %v1431 = vld [vmem:[#allocation2 + $0x100] sm:$0xff]
      %v1432 = vld [vmem:[#allocation2 + $0x108] sm:$0xff]
      %v1433 = vpack.c.bf16 %v1400, %v1399
      %v1434 = vpack.c.bf16 %v1402, %v1401
      %v1435 = vpack.c.bf16 %v1404, %v1403
      %v1436 = vpack.c.bf16 %v1406, %v1405
      %v1437 = vpack.c.bf16 %v1408, %v1407
      %v1438 = vpack.c.bf16 %v1410, %v1409
      %v1439 = vpack.c.bf16 %v1412, %v1411
      %v1440 = vpack.c.bf16 %v1414, %v1413
      %v1441 = vpack.c.bf16 %v1416, %v1415
      %v1442 = vpack.c.bf16 %v1418, %v1417
      %v1443 = vpack.c.bf16 %v1420, %v1419
      %v1444 = vpack.c.bf16 %v1422, %v1421
      %v1445 = vpack.c.bf16 %v1424, %v1423
      %v1446 = vpack.c.bf16 %v1426, %v1425
      %v1447 = vpack.c.bf16 %v1428, %v1427
      %v1448 = vpack.c.bf16 %v1430, %v1429
      %v1449 = vpack.c.bf16 %v1431, %v1431
      %v1450 = vpack.c.bf16 %v1401, %v1400
      %v1451 = vpack.c.bf16 %v1403, %v1402
      %v1452 = vpack.c.bf16 %v1405, %v1404
      %v1453 = vpack.c.bf16 %v1407, %v1406
      %v1454 = vpack.c.bf16 %v1409, %v1408
      %v1455 = vpack.c.bf16 %v1411, %v1410
      %v1456 = vpack.c.bf16 %v1413, %v1412
      %v1457 = vpack.c.bf16 %v1415, %v1414
      %v1458 = vpack.c.bf16 %v1417, %v1416
      %v1459 = vpack.c.bf16 %v1419, %v1418
      %v1460 = vpack.c.bf16 %v1421, %v1420
      %v1461 = vpack.c.bf16 %v1423, %v1422
      %v1462 = vpack.c.bf16 %v1425, %v1424
      %v1463 = vpack.c.bf16 %v1427, %v1426
      %v1464 = vpack.c.bf16 %v1429, %v1428
      %v1465 = vpack.c.bf16 %v1431, %v1430
      %v1466 = vpack.c.bf16 %v1432, %v1432
      %vm1467 = vsmask.f32 7424
      %v1469 = vshrl.u32 %v1433, 16
      %v1471 = vshll.u32 %v1433, 16
      %v1473 = vrot.slane %v1471, 1
      %v1474 = vor.u32 %v1469, %v1473
      %v1476 = vshll.u32 %v1434, 16
      %v1478 = vrot.slane %v1476, 1
      %v1479 = vsel %vm1467, %v1474, %v1478
      %v1480 = vshrl.u32 %v1434, 16
      %v1482 = vor.u32 %v1480, %v1478
      %v1484 = vshll.u32 %v1435, 16
      %v1486 = vrot.slane %v1484, 1
      %v1487 = vsel %vm1467, %v1482, %v1486
      %v1488 = vshrl.u32 %v1435, 16
      %v1490 = vor.u32 %v1488, %v1486
      %v1492 = vshll.u32 %v1436, 16
      %v1494 = vrot.slane %v1492, 1
      %v1495 = vsel %vm1467, %v1490, %v1494
      %v1496 = vshrl.u32 %v1436, 16
      %v1498 = vor.u32 %v1496, %v1494
      %v1500 = vshll.u32 %v1437, 16
      %v1502 = vrot.slane %v1500, 1
      %v1503 = vsel %vm1467, %v1498, %v1502
      %v1504 = vshrl.u32 %v1437, 16
      %v1506 = vor.u32 %v1504, %v1502
      %v1508 = vshll.u32 %v1438, 16
      %v1510 = vrot.slane %v1508, 1
      %v1511 = vsel %vm1467, %v1506, %v1510
      %v1512 = vshrl.u32 %v1438, 16
      %v1514 = vor.u32 %v1512, %v1510
      %v1516 = vshll.u32 %v1439, 16
      %v1518 = vrot.slane %v1516, 1
      %v1519 = vsel %vm1467, %v1514, %v1518
      %v1520 = vshrl.u32 %v1439, 16
      %v1522 = vor.u32 %v1520, %v1518
      %v1524 = vshll.u32 %v1440, 16
      %v1526 = vrot.slane %v1524, 1
      %v1527 = vsel %vm1467, %v1522, %v1526
      %v1528 = vshrl.u32 %v1440, 16
      %v1530 = vor.u32 %v1528, %v1526
      %v1532 = vshll.u32 %v1441, 16
      %v1534 = vrot.slane %v1532, 1
      %v1535 = vsel %vm1467, %v1530, %v1534
      %v1536 = vshrl.u32 %v1441, 16
      %v1538 = vor.u32 %v1536, %v1534
      %v1540 = vshll.u32 %v1442, 16
      %v1542 = vrot.slane %v1540, 1
      %v1543 = vsel %vm1467, %v1538, %v1542
      %v1544 = vshrl.u32 %v1442, 16
      %v1546 = vor.u32 %v1544, %v1542
      %v1548 = vshll.u32 %v1443, 16
      %v1550 = vrot.slane %v1548, 1
      %v1551 = vsel %vm1467, %v1546, %v1550
      %v1552 = vshrl.u32 %v1443, 16
      %v1554 = vor.u32 %v1552, %v1550
      %v1556 = vshll.u32 %v1444, 16
      %v1558 = vrot.slane %v1556, 1
      %v1559 = vsel %vm1467, %v1554, %v1558
      %v1560 = vshrl.u32 %v1444, 16
      %v1562 = vor.u32 %v1560, %v1558
      %v1564 = vshll.u32 %v1445, 16
      %v1566 = vrot.slane %v1564, 1
      %v1567 = vsel %vm1467, %v1562, %v1566
      %v1568 = vshrl.u32 %v1445, 16
      %v1570 = vor.u32 %v1568, %v1566
      %v1572 = vshll.u32 %v1446, 16
      %v1574 = vrot.slane %v1572, 1
      %v1575 = vsel %vm1467, %v1570, %v1574
      %v1576 = vshrl.u32 %v1446, 16
      %v1578 = vor.u32 %v1576, %v1574
      %v1580 = vshll.u32 %v1447, 16
      %v1582 = vrot.slane %v1580, 1
      %v1583 = vsel %vm1467, %v1578, %v1582
      %v1584 = vshrl.u32 %v1447, 16
      %v1586 = vor.u32 %v1584, %v1582
      %v1588 = vshll.u32 %v1448, 16
      %v1590 = vrot.slane %v1588, 1
      %v1591 = vsel %vm1467, %v1586, %v1590
      %v1592 = vshrl.u32 %v1448, 16
      %v1594 = vor.u32 %v1592, %v1590
      %v1596 = vshll.u32 %v1449, 16
      %v1598 = vrot.slane %v1596, 1
      %v1599 = vsel %vm1467, %v1594, %v1598
      %v1600 = vshrl.u32 %v1449, 16
      %v1602 = vor.u32 %v1600, %v1598
      %1603 = vrot.lane.b32.xlu0 %v1479, 64
      %v1604 = vpop.permute.xlu0 %1603
      %1605 = vrot.lane.b32.xlu0 %v1487, 64
      %v1606 = vpop.permute.xlu0 %1605
      %1607 = vrot.lane.b32.xlu0 %v1495, 64
      %v1608 = vpop.permute.xlu0 %1607
      %1609 = vrot.lane.b32.xlu0 %v1503, 64
      %v1610 = vpop.permute.xlu0 %1609
      %1611 = vrot.lane.b32.xlu0 %v1511, 64
      %v1612 = vpop.permute.xlu0 %1611
      %1613 = vrot.lane.b32.xlu0 %v1519, 64
      %v1614 = vpop.permute.xlu0 %1613
      %1615 = vrot.lane.b32.xlu0 %v1527, 64
      %v1616 = vpop.permute.xlu0 %1615
      %1617 = vrot.lane.b32.xlu0 %v1535, 64
      %v1618 = vpop.permute.xlu0 %1617
      %1619 = vrot.lane.b32.xlu0 %v1543, 64
      %v1620 = vpop.permute.xlu0 %1619
      %1621 = vrot.lane.b32.xlu0 %v1551, 64
      %v1622 = vpop.permute.xlu0 %1621
      %1623 = vrot.lane.b32.xlu0 %v1559, 64
      %v1624 = vpop.permute.xlu0 %1623
      %1625 = vrot.lane.b32.xlu0 %v1567, 64
      %v1626 = vpop.permute.xlu0 %1625
      %1627 = vrot.lane.b32.xlu0 %v1575, 64
      %v1628 = vpop.permute.xlu0 %1627
      %1629 = vrot.lane.b32.xlu0 %v1583, 64
      %v1630 = vpop.permute.xlu0 %1629
      %1631 = vrot.lane.b32.xlu0 %v1591, 64
      %v1632 = vpop.permute.xlu0 %1631
      %1633 = vrot.lane.b32.xlu0 %v1599, 64
      %v1634 = vpop.permute.xlu0 %1633
      %1635 = vrot.lane.b32.xlu0 %v1602, 64
      %v1636 = vpop.permute.xlu0 %1635
      %vm1653 = vcmask 1042432
      %v1654 = vrot.slane %v1450, 5
      %v1655 = vrot.slane %v1451, 5
      %v1656 = vsel %vm1653, %v1654, %v1655
      %v1657 = vrot.slane %v1452, 5
      %v1658 = vsel %vm1653, %v1655, %v1657
      %v1659 = vrot.slane %v1453, 5
      %v1660 = vsel %vm1653, %v1657, %v1659
      %v1661 = vrot.slane %v1454, 5
      %v1662 = vsel %vm1653, %v1659, %v1661
      %v1663 = vrot.slane %v1455, 5
      %v1664 = vsel %vm1653, %v1661, %v1663
      %v1665 = vrot.slane %v1456, 5
      %v1666 = vsel %vm1653, %v1663, %v1665
      %v1667 = vrot.slane %v1457, 5
      %v1668 = vsel %vm1653, %v1665, %v1667
      %v1669 = vrot.slane %v1458, 5
      %v1670 = vsel %vm1653, %v1667, %v1669
      %v1671 = vrot.slane %v1459, 5
      %v1672 = vsel %vm1653, %v1669, %v1671
      %v1673 = vrot.slane %v1460, 5
      %v1674 = vsel %vm1653, %v1671, %v1673
      %v1675 = vrot.slane %v1461, 5
      %v1676 = vsel %vm1653, %v1673, %v1675
      %v1677 = vrot.slane %v1462, 5
      %v1678 = vsel %vm1653, %v1675, %v1677
      %v1679 = vrot.slane %v1463, 5
      %v1680 = vsel %vm1653, %v1677, %v1679
      %v1681 = vrot.slane %v1464, 5
      %v1682 = vsel %vm1653, %v1679, %v1681
      %v1683 = vrot.slane %v1465, 5
      %v1684 = vsel %vm1653, %v1681, %v1683
      %vm1685 = vsmask.f32 2304
      %v1687 = vshrl.u32 %v1450, 16
      %v1689 = vrot.slane %v1687, 5
      %v1690 = vshll.u32 %v1450, 16
      %v1692 = vrot.slane %v1690, 6
      %v1693 = vor.u32 %v1689, %v1692
      %v1695 = vshrl.u32 %v1451, 16
      %v1697 = vrot.slane %v1695, 5
      %v1698 = vshll.u32 %v1451, 16
      %v1700 = vrot.slane %v1698, 6
      %v1701 = vor.u32 %v1697, %v1700
      %v1702 = vsel %vm1685, %v1693, %v1701
      %v1704 = vshrl.u32 %v1452, 16
      %v1706 = vrot.slane %v1704, 5
      %v1707 = vshll.u32 %v1452, 16
      %v1709 = vrot.slane %v1707, 6
      %v1710 = vor.u32 %v1706, %v1709
      %v1711 = vsel %vm1685, %v1701, %v1710
      %v1713 = vshrl.u32 %v1453, 16
      %v1715 = vrot.slane %v1713, 5
      %v1716 = vshll.u32 %v1453, 16
      %v1718 = vrot.slane %v1716, 6
      %v1719 = vor.u32 %v1715, %v1718
      %v1720 = vsel %vm1685, %v1710, %v1719
      %v1722 = vshrl.u32 %v1454, 16
      %v1724 = vrot.slane %v1722, 5
      %v1725 = vshll.u32 %v1454, 16
      %v1727 = vrot.slane %v1725, 6
      %v1728 = vor.u32 %v1724, %v1727
      %v1729 = vsel %vm1685, %v1719, %v1728
      %v1731 = vshrl.u32 %v1455, 16
      %v1733 = vrot.slane %v1731, 5
      %v1734 = vshll.u32 %v1455, 16
      %v1736 = vrot.slane %v1734, 6
      %v1737 = vor.u32 %v1733, %v1736
      %v1738 = vsel %vm1685, %v1728, %v1737
      %v1740 = vshrl.u32 %v1456, 16
      %v1742 = vrot.slane %v1740, 5
      %v1743 = vshll.u32 %v1456, 16
      %v1745 = vrot.slane %v1743, 6
      %v1746 = vor.u32 %v1742, %v1745
      %v1747 = vsel %vm1685, %v1737, %v1746
      %v1749 = vshrl.u32 %v1457, 16
      %v1751 = vrot.slane %v1749, 5
      %v1752 = vshll.u32 %v1457, 16
      %v1754 = vrot.slane %v1752, 6
      %v1755 = vor.u32 %v1751, %v1754
      %v1756 = vsel %vm1685, %v1746, %v1755
      %v1758 = vshrl.u32 %v1458, 16
      %v1760 = vrot.slane %v1758, 5
      %v1761 = vshll.u32 %v1458, 16
      %v1763 = vrot.slane %v1761, 6
      %v1764 = vor.u32 %v1760, %v1763
      %v1765 = vsel %vm1685, %v1755, %v1764
      %v1767 = vshrl.u32 %v1459, 16
      %v1769 = vrot.slane %v1767, 5
      %v1770 = vshll.u32 %v1459, 16
      %v1772 = vrot.slane %v1770, 6
      %v1773 = vor.u32 %v1769, %v1772
      %v1774 = vsel %vm1685, %v1764, %v1773
      %v1776 = vshrl.u32 %v1460, 16
      %v1778 = vrot.slane %v1776, 5
      %v1779 = vshll.u32 %v1460, 16
      %v1781 = vrot.slane %v1779, 6
      %v1782 = vor.u32 %v1778, %v1781
      %v1783 = vsel %vm1685, %v1773, %v1782
      %v1785 = vshrl.u32 %v1461, 16
      %v1787 = vrot.slane %v1785, 5
      %v1788 = vshll.u32 %v1461, 16
      %v1790 = vrot.slane %v1788, 6
      %v1791 = vor.u32 %v1787, %v1790
      %v1792 = vsel %vm1685, %v1782, %v1791
      %v1794 = vshrl.u32 %v1462, 16
      %v1796 = vrot.slane %v1794, 5
      %v1797 = vshll.u32 %v1462, 16
      %v1799 = vrot.slane %v1797, 6
      %v1800 = vor.u32 %v1796, %v1799
      %v1801 = vsel %vm1685, %v1791, %v1800
      %v1803 = vshrl.u32 %v1463, 16
      %v1805 = vrot.slane %v1803, 5
      %v1806 = vshll.u32 %v1463, 16
      %v1808 = vrot.slane %v1806, 6
      %v1809 = vor.u32 %v1805, %v1808
      %v1810 = vsel %vm1685, %v1800, %v1809
      %v1812 = vshrl.u32 %v1464, 16
      %v1814 = vrot.slane %v1812, 5
      %v1815 = vshll.u32 %v1464, 16
      %v1817 = vrot.slane %v1815, 6
      %v1818 = vor.u32 %v1814, %v1817
      %v1819 = vsel %vm1685, %v1809, %v1818
      %v1821 = vshrl.u32 %v1465, 16
      %v1823 = vrot.slane %v1821, 5
      %v1824 = vshll.u32 %v1465, 16
      %v1826 = vrot.slane %v1824, 6
      %v1827 = vor.u32 %v1823, %v1826
      %v1828 = vsel %vm1685, %v1818, %v1827
      %v1830 = vshll.u32 %v1466, 16
      %v1832 = vrot.slane %v1830, 6
      %v1833 = vsel %vm1685, %v1827, %v1832
      %1834 = vrot.lane.b32.xlu0 %v1693, 64
      %v1835 = vpop.permute.xlu0 %1834
      %1836 = vrot.lane.b32.xlu0 %v1702, 64
      %v1837 = vpop.permute.xlu0 %1836
      %1838 = vrot.lane.b32.xlu0 %v1711, 64
      %v1839 = vpop.permute.xlu0 %1838
      %1840 = vrot.lane.b32.xlu0 %v1720, 64
      %v1841 = vpop.permute.xlu0 %1840
      %1842 = vrot.lane.b32.xlu0 %v1729, 64
      %v1843 = vpop.permute.xlu0 %1842
      %1844 = vrot.lane.b32.xlu0 %v1738, 64
      %v1845 = vpop.permute.xlu0 %1844
      %1846 = vrot.lane.b32.xlu0 %v1747, 64
      %v1847 = vpop.permute.xlu0 %1846
      %1848 = vrot.lane.b32.xlu0 %v1756, 64
      %v1849 = vpop.permute.xlu0 %1848
      %1850 = vrot.lane.b32.xlu0 %v1765, 64
      %v1851 = vpop.permute.xlu0 %1850
      %1852 = vrot.lane.b32.xlu0 %v1774, 64
      %v1853 = vpop.permute.xlu0 %1852
      %1854 = vrot.lane.b32.xlu0 %v1783, 64
      %v1855 = vpop.permute.xlu0 %1854
      %1856 = vrot.lane.b32.xlu0 %v1792, 64
      %v1857 = vpop.permute.xlu0 %1856
      %1858 = vrot.lane.b32.xlu0 %v1801, 64
      %v1859 = vpop.permute.xlu0 %1858
      %1860 = vrot.lane.b32.xlu0 %v1810, 64
      %v1861 = vpop.permute.xlu0 %1860
      %1862 = vrot.lane.b32.xlu0 %v1819, 64
      %v1863 = vpop.permute.xlu0 %1862
      %1864 = vrot.lane.b32.xlu0 %v1828, 64
      %v1865 = vpop.permute.xlu0 %1864
      %1866 = vrot.lane.b32.xlu0 %v1833, 64
      %v1867 = vpop.permute.xlu0 %1866
      %vm1869 = vcmask 1041408
      %v1870 = vrot.slane %v1450, 6
      %v1871 = vrot.slane %v1451, 6
      %v1872 = vsel %vm1869, %v1870, %v1871
      %v1873 = vrot.slane %v1452, 6
      %v1874 = vsel %vm1869, %v1871, %v1873
      %v1875 = vrot.slane %v1453, 6
      %v1876 = vsel %vm1869, %v1873, %v1875
      %v1877 = vrot.slane %v1454, 6
      %v1878 = vsel %vm1869, %v1875, %v1877
      %v1879 = vrot.slane %v1455, 6
      %v1880 = vsel %vm1869, %v1877, %v1879
      %v1881 = vrot.slane %v1456, 6
      %v1882 = vsel %vm1869, %v1879, %v1881
      %v1883 = vrot.slane %v1457, 6
      %v1884 = vsel %vm1869, %v1881, %v1883
      %v1885 = vrot.slane %v1458, 6
      %v1886 = vsel %vm1869, %v1883, %v1885
      %v1887 = vrot.slane %v1459, 6
      %v1888 = vsel %vm1869, %v1885, %v1887
      %v1889 = vrot.slane %v1460, 6
      %v1890 = vsel %vm1869, %v1887, %v1889
      %v1891 = vrot.slane %v1461, 6
      %v1892 = vsel %vm1869, %v1889, %v1891
      %v1893 = vrot.slane %v1462, 6
      %v1894 = vsel %vm1869, %v1891, %v1893
      %v1895 = vrot.slane %v1463, 6
      %v1896 = vsel %vm1869, %v1893, %v1895
      %v1897 = vrot.slane %v1464, 6
      %v1898 = vsel %vm1869, %v1895, %v1897
      %v1899 = vrot.slane %v1465, 6
      %v1900 = vsel %vm1869, %v1897, %v1899
      %v1901 = vrot.slane %v1466, 6
      %v1902 = vsel %vm1869, %v1899, %v1901
      %v1904 = vsel %vm569, %v1433, %v1604
      %v1906 = vsel %vm569, %v1434, %v1606
      %v1908 = vsel %vm569, %v1435, %v1608
      %v1910 = vsel %vm569, %v1436, %v1610
      %v1912 = vsel %vm569, %v1437, %v1612
      %v1914 = vsel %vm569, %v1438, %v1614
      %v1916 = vsel %vm569, %v1439, %v1616
      %v1918 = vsel %vm569, %v1440, %v1618
      %v1920 = vsel %vm569, %v1441, %v1620
      %v1922 = vsel %vm569, %v1442, %v1622
      %v1924 = vsel %vm569, %v1443, %v1624
      %v1926 = vsel %vm569, %v1444, %v1626
      %v1928 = vsel %vm569, %v1445, %v1628
      %v1930 = vsel %vm569, %v1446, %v1630
      %v1932 = vsel %vm569, %v1447, %v1632
      %v1934 = vsel %vm569, %v1448, %v1634
      %v1936 = vsel %vm569, %v1449, %v1636
      %v1939 = vsel %vm569, %v1654, %v1835
      %v1942 = vsel %vm569, %v1656, %v1837
      %v1945 = vsel %vm569, %v1658, %v1839
      %v1948 = vsel %vm569, %v1660, %v1841
      %v1951 = vsel %vm569, %v1662, %v1843
      %v1954 = vsel %vm569, %v1664, %v1845
      %v1957 = vsel %vm569, %v1666, %v1847
      %v1960 = vsel %vm569, %v1668, %v1849
      %v1963 = vsel %vm569, %v1670, %v1851
      %v1966 = vsel %vm569, %v1672, %v1853
      %v1969 = vsel %vm569, %v1674, %v1855
      %v1972 = vsel %vm569, %v1676, %v1857
      %v1975 = vsel %vm569, %v1678, %v1859
      %v1978 = vsel %vm569, %v1680, %v1861
      %v1981 = vsel %vm569, %v1682, %v1863
      %v1984 = vsel %vm569, %v1684, %v1865
      %v1987 = vsel %vm569, %v1683, %v1867
      %v1988 = vld [vmem:[%s5] sm:$0xf]
      %v1989 = vld [vmem:[%s5 + $0x4] sm:$0xf]
      %v1990 = vld [vmem:[%s5 + $0x8] sm:$0xf]
      %v1991 = vld [vmem:[%s5 + $0xc] sm:$0xf]
      %v1992 = vld [vmem:[%s5 + $0x10] sm:$0xf]
      %v1993 = vld [vmem:[%s5 + $0x14] sm:$0xf]
      %v1994 = vld [vmem:[%s5 + $0x18] sm:$0xf]
      %v1995 = vld [vmem:[%s5 + $0x1c] sm:$0xf]
      %v1996 = vld [vmem:[%s5 + $0x20] sm:$0xf]
      %v1997 = vld [vmem:[%s5 + $0x24] sm:$0xf]
      %v1998 = vld [vmem:[%s5 + $0x28] sm:$0xf]
      %v1999 = vld [vmem:[%s5 + $0x2c] sm:$0xf]
      %v2000 = vld [vmem:[%s5 + $0x30] sm:$0xf]
      %v2001 = vld [vmem:[%s5 + $0x34] sm:$0xf]
      %v2002 = vld [vmem:[%s5 + $0x38] sm:$0xf]
      %v2003 = vld [vmem:[%s5 + $0x3c] sm:$0xf]
      %v2004 = vld [vmem:[%s5 + $0x40] sm:$0xf]
      %v2005 = vld [vmem:[%s5 + $0x44] sm:$0xf]
      %v2006 = vld [vmem:[%s5 + $0x48] sm:$0xf]
      %v2007 = vld [vmem:[%s5 + $0x4c] sm:$0xf]
      %v2008 = vld [vmem:[%s5 + $0x50] sm:$0xf]
      %v2009 = vld [vmem:[%s5 + $0x54] sm:$0xf]
      %v2010 = vld [vmem:[%s5 + $0x58] sm:$0xf]
      %v2011 = vld [vmem:[%s5 + $0x5c] sm:$0xf]
      %v2012 = vld [vmem:[%s5 + $0x60] sm:$0xf]
      %v2013 = vld [vmem:[%s5 + $0x64] sm:$0xf]
      %v2014 = vld [vmem:[%s5 + $0x68] sm:$0xf]
      %v2015 = vld [vmem:[%s5 + $0x6c] sm:$0xf]
      %v2016 = vld [vmem:[%s5 + $0x70] sm:$0xf]
      %v2017 = vld [vmem:[%s5 + $0x74] sm:$0xf]
      %v2018 = vld [vmem:[%s5 + $0x78] sm:$0xf]
      %v2019 = vld [vmem:[%s5 + $0x7c] sm:$0xf]
      %v2020 = vld [vmem:[%s5 + $0x80] sm:$0xf]
      %v2021 = vld [vmem:[%s5 + $0x84] sm:$0xf]
      %v2022 = vld [vmem:[%s5 + $0x88] sm:$0xf]
      %v2023 = vld [vmem:[%s5 + $0x8c] sm:$0xf]
      %v2024 = vld [vmem:[%s5 + $0x90] sm:$0xf]
      %v2025 = vld [vmem:[%s5 + $0x94] sm:$0xf]
      %v2026 = vld [vmem:[%s5 + $0x98] sm:$0xf]
      %v2027 = vld [vmem:[%s5 + $0x9c] sm:$0xf]
      %v2028 = vld [vmem:[%s6] sm:$0x1]
      %v2030 = vlaneseq
      %v2031 = vshrl.u32 %v2030, 7
      %v2032 = vsub.s32 0, %v2031
      %v2033 = vrot.slane %v2028, %v2032
      %vm2069 = vcmask 1044480
      %v2070 = vrot.slane %v1904, 3
      %v2071 = vrot.slane %v1906, 3
      %v2072 = vsel %vm2069, %v2070, %v2071
      %v2073 = vrot.slane %v1939, 3
      %v2074 = vrot.slane %v1942, 3
      %v2075 = vsel %vm2069, %v2073, %v2074
      %v2076 = vrot.slane %v1870, 3
      %v2077 = vrot.slane %v1872, 3
      %v2078 = vsel %vm2069, %v2076, %v2077
      %v2079 = vrot.slane %v1908, 3
      %v2080 = vsel %vm2069, %v2071, %v2079
      %v2081 = vrot.slane %v1945, 3
      %v2082 = vsel %vm2069, %v2074, %v2081
      %v2083 = vrot.slane %v1874, 3
      %v2084 = vsel %vm2069, %v2077, %v2083
      %v2085 = vrot.slane %v1910, 3
      %v2086 = vsel %vm2069, %v2079, %v2085
      %v2087 = vrot.slane %v1948, 3
      %v2088 = vsel %vm2069, %v2081, %v2087
      %v2089 = vrot.slane %v1876, 3
      %v2090 = vsel %vm2069, %v2083, %v2089
      %v2091 = vrot.slane %v1912, 3
      %v2092 = vsel %vm2069, %v2085, %v2091
      %v2093 = vrot.slane %v1951, 3
      %v2094 = vsel %vm2069, %v2087, %v2093
      %v2095 = vrot.slane %v1878, 3
      %v2096 = vsel %vm2069, %v2089, %v2095
      %v2097 = vrot.slane %v1914, 3
      %v2098 = vsel %vm2069, %v2091, %v2097
      %v2099 = vrot.slane %v1954, 3
      %v2100 = vsel %vm2069, %v2093, %v2099
      %v2101 = vrot.slane %v1880, 3
      %v2102 = vsel %vm2069, %v2095, %v2101
      %v2103 = vrot.slane %v1916, 3
      %v2104 = vsel %vm2069, %v2097, %v2103
      %v2105 = vrot.slane %v1957, 3
      %v2106 = vsel %vm2069, %v2099, %v2105
      %v2107 = vrot.slane %v1882, 3
      %v2108 = vsel %vm2069, %v2101, %v2107
      %v2109 = vrot.slane %v1918, 3
      %v2110 = vsel %vm2069, %v2103, %v2109
      %v2111 = vrot.slane %v1960, 3
      %v2112 = vsel %vm2069, %v2105, %v2111
      %v2113 = vrot.slane %v1884, 3
      %v2114 = vsel %vm2069, %v2107, %v2113
      %v2115 = vrot.slane %v1920, 3
      %v2116 = vsel %vm2069, %v2109, %v2115
      %v2117 = vrot.slane %v1963, 3
      %v2118 = vsel %vm2069, %v2111, %v2117
      %v2119 = vrot.slane %v1886, 3
      %v2120 = vsel %vm2069, %v2113, %v2119
      %v2121 = vrot.slane %v1922, 3
      %v2122 = vsel %vm2069, %v2115, %v2121
      %v2123 = vrot.slane %v1966, 3
      %v2124 = vsel %vm2069, %v2117, %v2123
      %v2125 = vrot.slane %v1888, 3
      %v2126 = vsel %vm2069, %v2119, %v2125
      %v2127 = vrot.slane %v1924, 3
      %v2128 = vsel %vm2069, %v2121, %v2127
      %v2129 = vrot.slane %v1969, 3
      %v2130 = vsel %vm2069, %v2123, %v2129
      %v2131 = vrot.slane %v1890, 3
      %v2132 = vsel %vm2069, %v2125, %v2131
      %v2133 = vrot.slane %v1926, 3
      %v2134 = vsel %vm2069, %v2127, %v2133
      %v2135 = vrot.slane %v1972, 3
      %v2136 = vsel %vm2069, %v2129, %v2135
      %v2137 = vrot.slane %v1892, 3
      %v2138 = vsel %vm2069, %v2131, %v2137
      %v2139 = vrot.slane %v1928, 3
      %v2140 = vsel %vm2069, %v2133, %v2139
      %v2141 = vrot.slane %v1975, 3
      %v2142 = vsel %vm2069, %v2135, %v2141
      %v2143 = vrot.slane %v1894, 3
      %v2144 = vsel %vm2069, %v2137, %v2143
      %v2145 = vrot.slane %v1930, 3
      %v2146 = vsel %vm2069, %v2139, %v2145
      %v2147 = vrot.slane %v1978, 3
      %v2148 = vsel %vm2069, %v2141, %v2147
      %v2149 = vrot.slane %v1896, 3
      %v2150 = vsel %vm2069, %v2143, %v2149
      %v2151 = vrot.slane %v1932, 3
      %v2152 = vsel %vm2069, %v2145, %v2151
      %v2153 = vrot.slane %v1981, 3
      %v2154 = vsel %vm2069, %v2147, %v2153
      %v2155 = vrot.slane %v1898, 3
      %v2156 = vsel %vm2069, %v2149, %v2155
      %v2157 = vrot.slane %v1934, 3
      %v2158 = vsel %vm2069, %v2151, %v2157
      %v2159 = vrot.slane %v1984, 3
      %v2160 = vsel %vm2069, %v2153, %v2159
      %v2161 = vrot.slane %v1900, 3
      %v2162 = vsel %vm2069, %v2155, %v2161
      %v2163 = vrot.slane %v1936, 3
      %v2164 = vsel %vm2069, %v2157, %v2163
      %v2165 = vrot.slane %v1987, 3
      %v2166 = vsel %vm2069, %v2159, %v2165
      %v2167 = vrot.slane %v1902, 3
      %v2168 = vsel %vm2069, %v2161, %v2167
      %v2241 = vunpack.c.l.b16 %v1988
      %v2242 = vunpack.c.l.b16 %v1989
      %v2243 = vunpack.c.l.b16 %v1990
      %v2244 = vunpack.c.l.b16 %v1991
      %v2245 = vunpack.c.l.b16 %v1992
      %v2246 = vunpack.c.l.b16 %v1993
      %v2247 = vunpack.c.l.b16 %v1994
      %v2248 = vunpack.c.l.b16 %v1995
      %v2249 = vunpack.c.l.b16 %v1996
      %v2250 = vunpack.c.l.b16 %v1997
      %v2251 = vunpack.c.l.b16 %v1998
      %v2252 = vunpack.c.l.b16 %v1999
      %v2253 = vunpack.c.l.b16 %v2000
      %v2254 = vunpack.c.l.b16 %v2001
      %v2255 = vunpack.c.l.b16 %v2002
      %v2256 = vunpack.c.l.b16 %v2003
      %v2257 = vunpack.c.l.b16 %v2004
      %v2258 = vunpack.c.l.b16 %v2005
      %v2259 = vunpack.c.l.b16 %v2006
      %v2260 = vunpack.c.l.b16 %v2007
      %v2261 = vunpack.c.l.b16 %v2008
      %v2262 = vunpack.c.l.b16 %v2009
      %v2263 = vunpack.c.l.b16 %v2010
      %v2264 = vunpack.c.l.b16 %v2011
      %v2265 = vunpack.c.l.b16 %v2012
      %v2266 = vunpack.c.l.b16 %v2013
      %v2267 = vunpack.c.l.b16 %v2014
      %v2268 = vunpack.c.l.b16 %v2015
      %v2269 = vunpack.c.l.b16 %v2016
      %v2270 = vunpack.c.l.b16 %v2017
      %v2271 = vunpack.c.l.b16 %v2018
      %v2272 = vunpack.c.l.b16 %v2019
      %v2273 = vunpack.c.l.b16 %v2020
      %v2274 = vunpack.c.l.b16 %v2021
      %v2275 = vunpack.c.l.b16 %v2022
      %v2276 = vunpack.c.l.b16 %v2023
      %v2277 = vunpack.c.l.b16 %v2024
      %v2278 = vunpack.c.l.b16 %v2025
      %v2279 = vunpack.c.l.b16 %v2026
      %v2280 = vunpack.c.l.b16 %v2027
      %v2281 = vpack.c.b16 %v2242, %v2241
      %v2282 = vpack.c.b16 %v2244, %v2243
      %v2283 = vpack.c.b16 %v2246, %v2245
      %v2284 = vpack.c.b16 %v2248, %v2247
      %v2285 = vpack.c.b16 %v2250, %v2249
      %v2286 = vpack.c.b16 %v2252, %v2251
      %v2287 = vpack.c.b16 %v2254, %v2253
      %v2288 = vpack.c.b16 %v2256, %v2255
      %v2289 = vpack.c.b16 %v2258, %v2257
      %v2290 = vpack.c.b16 %v2260, %v2259
      %v2291 = vpack.c.b16 %v2262, %v2261
      %v2292 = vpack.c.b16 %v2264, %v2263
      %v2293 = vpack.c.b16 %v2266, %v2265
      %v2294 = vpack.c.b16 %v2268, %v2267
      %v2295 = vpack.c.b16 %v2270, %v2269
      %v2296 = vpack.c.b16 %v2272, %v2271
      %v2297 = vpack.c.b16 %v2274, %v2273
      %v2298 = vpack.c.b16 %v2276, %v2275
      %v2299 = vpack.c.b16 %v2278, %v2277
      %v2300 = vpack.c.b16 %v2280, %v2279
      %v2322 = vsel %vm569, %v2078, 0
      %v2325 = vsel %vm569, %v2084, 0
      %v2328 = vsel %vm569, %v2090, 0
      %v2331 = vsel %vm569, %v2096, 0
      %v2334 = vsel %vm569, %v2102, 0
      %v2337 = vsel %vm569, %v2108, 0
      %v2340 = vsel %vm569, %v2114, 0
      %v2343 = vsel %vm569, %v2120, 0
      %v2346 = vsel %vm569, %v2126, 0
      %v2349 = vsel %vm569, %v2132, 0
      %v2352 = vsel %vm569, %v2138, 0
      %v2355 = vsel %vm569, %v2144, 0
      %v2358 = vsel %vm569, %v2150, 0
      %v2361 = vsel %vm569, %v2156, 0
      %v2364 = vsel %vm569, %v2162, 0
      %v2367 = vsel %vm569, %v2168, 0
      %2369 = vmatprep.subr.bf16.mxu0 0
      %2370 = vmatpush1.bf16.msra.mxu0 %v2281
      %2371 = vmatprep.subr.bf16.mxu0 0
      %2372 = vmatpush1.bf16.msra.mxu0 %v2282
      %2373 = vmatprep.subr.bf16.mxu0 0
      %2374 = vmatpush1.bf16.msra.mxu0 %v2283
      %2375 = vmatprep.subr.bf16.mxu0 0
      %2376 = vmatpush1.bf16.msra.mxu0 %v2284
      %2377 = vmatprep.subr.bf16.mxu0 0
      %2378 = vmatpush1.bf16.msra.mxu0 %v2285
      %2379 = vmatprep.subr.bf16.mxu0 0
      %2380 = vmatpush1.bf16.msra.mxu0 %v2286
      %2381 = vmatprep.subr.bf16.mxu0 0
      %2382 = vmatpush1.bf16.msra.mxu0 %v2287
      %2383 = vmatprep.subr.bf16.mxu0 0
      %2384 = vmatpush1.bf16.msra.mxu0 %v2288
      %2385 = vmatprep.subr.bf16.mxu0 0
      %2386 = vmatpush1.bf16.msra.mxu0 %v2289
      %2387 = vmatprep.subr.bf16.mxu0 0
      %2388 = vmatpush1.bf16.msra.mxu0 %v2290
      %2389 = vmatprep.subr.bf16.mxu0 0
      %2390 = vmatpush1.bf16.msra.mxu0 %v2291
      %2391 = vmatprep.subr.bf16.mxu0 0
      %2392 = vmatpush1.bf16.msra.mxu0 %v2292
      %2393 = vmatprep.subr.bf16.mxu0 0
      %2394 = vmatpush1.bf16.msra.mxu0 %v2293
      %2395 = vmatprep.subr.bf16.mxu0 0
      %2396 = vmatpush1.bf16.msra.mxu0 %v2294
      %2397 = vmatprep.subr.bf16.mxu0 0
      %2398 = vmatpush1.bf16.msra.mxu0 %v2295
      %2399 = vmatprep.subr.bf16.mxu0 0
      %2400 = vmatpush1.bf16.msra.mxu0 %v2296
      %2401 = vmatprep.mubr.bf16.mxu0 %v2075
      %2402 = vmatmul.mubr.bf16.gmra.mrb[0].mxu0 %v2072
      %v2403 = vpop.f32.mrb[0].mxu0
      %v2404 = vadd.f32 %v2033, %v2403
      %v2405 = vpop.f32.mrb[0].mxu0
      %v2406 = vpop.f32.mrb[0].mxu0
      %v2407 = vadd.f32 %v2033, %v2406
      %v2408 = vpop.f32.mrb[0].mxu0
      %2409 = vmatprep.mubr.bf16.mxu0 %v2082
      %2410 = vmatmul.mubr.bf16.gmra.mrb[0].mxu0 %v2080
      %v2411 = vpop.f32.mrb[0].mxu0
      %v2412 = vadd.f32 %v2033, %v2411
      %v2413 = vpop.f32.mrb[0].mxu0
      %v2414 = vpop.f32.mrb[0].mxu0
      %v2415 = vadd.f32 %v2033, %v2414
      %v2416 = vpop.f32.mrb[0].mxu0
      %2417 = vmatprep.mubr.bf16.mxu0 %v2088
      %2418 = vmatmul.mubr.bf16.gmra.mrb[0].mxu0 %v2086
      %v2419 = vpop.f32.mrb[0].mxu0
      %v2420 = vadd.f32 %v2033, %v2419
      %v2421 = vpop.f32.mrb[0].mxu0
      %v2422 = vpop.f32.mrb[0].mxu0
      %v2423 = vadd.f32 %v2033, %v2422
      %v2424 = vpop.f32.mrb[0].mxu0
      %2425 = vmatprep.mubr.bf16.mxu0 %v2094
      %2426 = vmatmul.mubr.bf16.gmra.mrb[0].mxu0 %v2092
      %v2427 = vpop.f32.mrb[0].mxu0
      %v2428 = vadd.f32 %v2033, %v2427
      %v2429 = vpop.f32.mrb[0].mxu0
      %v2430 = vpop.f32.mrb[0].mxu0
      %v2431 = vadd.f32 %v2033, %v2430
      %v2432 = vpop.f32.mrb[0].mxu0
      %2433 = vmatprep.mubr.bf16.mxu0 %v2100
      %2434 = vmatmul.mubr.bf16.gmra.mrb[0].mxu0 %v2098
      %v2435 = vpop.f32.mrb[0].mxu0
      %v2436 = vadd.f32 %v2033, %v2435
      %v2437 = vpop.f32.mrb[0].mxu0
      %v2438 = vpop.f32.mrb[0].mxu0
      %v2439 = vadd.f32 %v2033, %v2438
      %v2440 = vpop.f32.mrb[0].mxu0
      %2441 = vmatprep.mubr.bf16.mxu0 %v2106
      %2442 = vmatmul.mubr.bf16.gmra.mrb[0].mxu0 %v2104
      %v2443 = vpop.f32.mrb[0].mxu0
      %v2444 = vadd.f32 %v2033, %v2443
      %v2445 = vpop.f32.mrb[0].mxu0
      %v2446 = vpop.f32.mrb[0].mxu0
      %v2447 = vadd.f32 %v2033, %v2446
      %v2448 = vpop.f32.mrb[0].mxu0
      %2449 = vmatprep.mubr.bf16.mxu0 %v2112
      %2450 = vmatmul.mubr.bf16.gmra.mrb[0].mxu0 %v2110
      %v2451 = vpop.f32.mrb[0].mxu0
      %v2452 = vadd.f32 %v2033, %v2451
      %v2453 = vpop.f32.mrb[0].mxu0
      %v2454 = vpop.f32.mrb[0].mxu0
      %v2455 = vadd.f32 %v2033, %v2454
      %v2456 = vpop.f32.mrb[0].mxu0
      %2457 = vmatprep.mubr.bf16.mxu0 %v2118
      %2458 = vmatmul.mubr.bf16.gmra.mrb[0].mxu0 %v2116
      %v2459 = vpop.f32.mrb[0].mxu0
      %v2460 = vadd.f32 %v2033, %v2459
      %v2461 = vpop.f32.mrb[0].mxu0
      %v2462 = vpop.f32.mrb[0].mxu0
      %v2463 = vadd.f32 %v2033, %v2462
      %v2464 = vpop.f32.mrb[0].mxu0
      %2465 = vmatprep.mubr.bf16.mxu0 %v2124
      %2466 = vmatmul.mubr.bf16.gmra.mrb[0].mxu0 %v2122
      %v2467 = vpop.f32.mrb[0].mxu0
      %v2468 = vadd.f32 %v2033, %v2467
      %v2469 = vpop.f32.mrb[0].mxu0
      %v2470 = vpop.f32.mrb[0].mxu0
      %v2471 = vadd.f32 %v2033, %v2470
      %v2472 = vpop.f32.mrb[0].mxu0
      %2473 = vmatprep.mubr.bf16.mxu0 %v2130
      %2474 = vmatmul.mubr.bf16.gmra.mrb[0].mxu0 %v2128
      %v2475 = vpop.f32.mrb[0].mxu0
      %v2476 = vadd.f32 %v2033, %v2475
      %v2477 = vpop.f32.mrb[0].mxu0
      %v2478 = vpop.f32.mrb[0].mxu0
      %v2479 = vadd.f32 %v2033, %v2478
      %v2480 = vpop.f32.mrb[0].mxu0
      %2481 = vmatprep.mubr.bf16.mxu0 %v2136
      %2482 = vmatmul.mubr.bf16.gmra.mrb[0].mxu0 %v2134
      %v2483 = vpop.f32.mrb[0].mxu0
      %v2484 = vadd.f32 %v2033, %v2483
      %v2485 = vpop.f32.mrb[0].mxu0
      %v2486 = vpop.f32.mrb[0].mxu0
      %v2487 = vadd.f32 %v2033, %v2486
      %v2488 = vpop.f32.mrb[0].mxu0
      %2489 = vmatprep.mubr.bf16.mxu0 %v2142
      %2490 = vmatmul.mubr.bf16.gmra.mrb[0].mxu0 %v2140
      %v2491 = vpop.f32.mrb[0].mxu0
      %v2492 = vadd.f32 %v2033, %v2491
      %v2493 = vpop.f32.mrb[0].mxu0
      %v2494 = vpop.f32.mrb[0].mxu0
      %v2495 = vadd.f32 %v2033, %v2494
      %v2496 = vpop.f32.mrb[0].mxu0
      %2497 = vmatprep.mubr.bf16.mxu0 %v2148
      %2498 = vmatmul.mubr.bf16.gmra.mrb[0].mxu0 %v2146
      %v2499 = vpop.f32.mrb[0].mxu0
      %v2500 = vadd.f32 %v2033, %v2499
      %v2501 = vpop.f32.mrb[0].mxu0
      %v2502 = vpop.f32.mrb[0].mxu0
      %v2503 = vadd.f32 %v2033, %v2502
      %v2504 = vpop.f32.mrb[0].mxu0
      %2505 = vmatprep.mubr.bf16.mxu0 %v2154
      %2506 = vmatmul.mubr.bf16.gmra.mrb[0].mxu0 %v2152
      %v2507 = vpop.f32.mrb[0].mxu0
      %v2508 = vadd.f32 %v2033, %v2507
      %v2509 = vpop.f32.mrb[0].mxu0
      %v2510 = vpop.f32.mrb[0].mxu0
      %v2511 = vadd.f32 %v2033, %v2510
      %v2512 = vpop.f32.mrb[0].mxu0
      %2513 = vmatprep.mubr.bf16.mxu0 %v2160
      %2514 = vmatmul.mubr.bf16.gmra.mrb[0].mxu0 %v2158
      %v2515 = vpop.f32.mrb[0].mxu0
      %v2516 = vadd.f32 %v2033, %v2515
      %v2517 = vpop.f32.mrb[0].mxu0
      %v2518 = vpop.f32.mrb[0].mxu0
      %v2519 = vadd.f32 %v2033, %v2518
      %v2520 = vpop.f32.mrb[0].mxu0
      %2521 = vmatprep.mubr.bf16.mxu0 %v2166
      %2522 = vmatmul.mubr.bf16.gmra.mrb[0].mxu0 %v2164
      %v2523 = vpop.f32.mrb[0].mxu0
      %v2524 = vadd.f32 %v2033, %v2523
      %v2525 = vpop.f32.mrb[0].mxu0
      %v2526 = vpop.f32.mrb[0].mxu0
      %v2527 = vadd.f32 %v2033, %v2526
      %v2528 = vpop.f32.mrb[0].mxu0
      %2529 = vdwg.mxu0
      %2530 = vmatprep.subr.bf16.mxu0 0
      %2531 = vmatpush1.bf16.msra.mxu0 %v2297
      %2532 = vmatprep.subr.bf16.mxu0 0
      %2533 = vmatpush1.bf16.msra.mxu0 %v2298
      %2534 = vmatprep.subr.bf16.mxu0 0
      %2535 = vmatpush1.bf16.msra.mxu0 %v2299
      %2536 = vmatprep.subr.bf16.mxu0 0
      %2537 = vmatpush1.bf16.msra.mxu0 %v2300
      %2538 = vmatprep.subr.bf16.mxu0 0
      %2539 = vmatpush1.bf16.msra.mxu0 0
      %2540 = vmatprep.subr.bf16.mxu0 0
      %2541 = vmatpush1.bf16.msra.mxu0 0
      %2542 = vmatprep.subr.bf16.mxu0 0
      %2543 = vmatpush1.bf16.msra.mxu0 0
      %2544 = vmatprep.subr.bf16.mxu0 0
      %2545 = vmatpush1.bf16.msra.mxu0 0
      %2546 = vmatprep.subr.bf16.mxu0 0
      %2547 = vmatpush1.bf16.msra.mxu0 0
      %2548 = vmatprep.subr.bf16.mxu0 0
      %2549 = vmatpush1.bf16.msra.mxu0 0
      %2550 = vmatprep.subr.bf16.mxu0 0
      %2551 = vmatpush1.bf16.msra.mxu0 0
      %2552 = vmatprep.subr.bf16.mxu0 0
      %2553 = vmatpush1.bf16.msra.mxu0 0
      %2554 = vmatprep.subr.bf16.mxu0 0
      %2555 = vmatpush1.bf16.msra.mxu0 0
      %2556 = vmatprep.subr.bf16.mxu0 0
      %2557 = vmatpush1.bf16.msra.mxu0 0
      %2558 = vmatprep.subr.bf16.mxu0 0
      %2559 = vmatpush1.bf16.msra.mxu0 0
      %2560 = vmatprep.subr.bf16.mxu0 0
      %2561 = vmatpush1.bf16.msra.mxu0 0
      %2562 = vmatprep.mubr.bf16.mxu0 0
      %2563 = vmatmul.mubr.bf16.gmra.mrb[0].mxu0 %v2322
      %v2564 = vpop.f32.mrb[0].mxu0
      %v2565 = vadd.f32 %v2404, %v2564
      %v2566 = vpop.f32.mrb[0].mxu0
      %v2567 = vpop.f32.mrb[0].mxu0
      %v2568 = vadd.f32 %v2407, %v2567
      %v2569 = vpop.f32.mrb[0].mxu0
      %2570 = vmatprep.mubr.bf16.mxu0 0
      %2571 = vmatmul.mubr.bf16.gmra.mrb[0].mxu0 %v2325
      %v2572 = vpop.f32.mrb[0].mxu0
      %v2573 = vadd.f32 %v2412, %v2572
      %v2574 = vpop.f32.mrb[0].mxu0
      %v2575 = vpop.f32.mrb[0].mxu0
      %v2576 = vadd.f32 %v2415, %v2575
      %v2577 = vpop.f32.mrb[0].mxu0
      %2578 = vmatprep.mubr.bf16.mxu0 0
      %2579 = vmatmul.mubr.bf16.gmra.mrb[0].mxu0 %v2328
      %v2580 = vpop.f32.mrb[0].mxu0
      %v2581 = vadd.f32 %v2420, %v2580
      %v2582 = vpop.f32.mrb[0].mxu0
      %v2583 = vpop.f32.mrb[0].mxu0
      %v2584 = vadd.f32 %v2423, %v2583
      %v2585 = vpop.f32.mrb[0].mxu0
      %2586 = vmatprep.mubr.bf16.mxu0 0
      %2587 = vmatmul.mubr.bf16.gmra.mrb[0].mxu0 %v2331
      %v2588 = vpop.f32.mrb[0].mxu0
      %v2589 = vadd.f32 %v2428, %v2588
      %v2590 = vpop.f32.mrb[0].mxu0
      %v2591 = vpop.f32.mrb[0].mxu0
      %v2592 = vadd.f32 %v2431, %v2591
      %v2593 = vpop.f32.mrb[0].mxu0
      %2594 = vmatprep.mubr.bf16.mxu0 0
      %2595 = vmatmul.mubr.bf16.gmra.mrb[0].mxu0 %v2334
      %v2596 = vpop.f32.mrb[0].mxu0
      %v2597 = vadd.f32 %v2436, %v2596
      %v2598 = vpop.f32.mrb[0].mxu0
      %v2599 = vpop.f32.mrb[0].mxu0
      %v2600 = vadd.f32 %v2439, %v2599
      %v2601 = vpop.f32.mrb[0].mxu0
      %2602 = vmatprep.mubr.bf16.mxu0 0
      %2603 = vmatmul.mubr.bf16.gmra.mrb[0].mxu0 %v2337
      %v2604 = vpop.f32.mrb[0].mxu0
      %v2605 = vadd.f32 %v2444, %v2604
      %v2606 = vpop.f32.mrb[0].mxu0
      %v2607 = vpop.f32.mrb[0].mxu0
      %v2608 = vadd.f32 %v2447, %v2607
      %v2609 = vpop.f32.mrb[0].mxu0
      %2610 = vmatprep.mubr.bf16.mxu0 0
      %2611 = vmatmul.mubr.bf16.gmra.mrb[0].mxu0 %v2340
      %v2612 = vpop.f32.mrb[0].mxu0
      %v2613 = vadd.f32 %v2452, %v2612
      %v2614 = vpop.f32.mrb[0].mxu0
      %v2615 = vpop.f32.mrb[0].mxu0
      %v2616 = vadd.f32 %v2455, %v2615
      %v2617 = vpop.f32.mrb[0].mxu0
      %2618 = vmatprep.mubr.bf16.mxu0 0
      %2619 = vmatmul.mubr.bf16.gmra.mrb[0].mxu0 %v2343
      %v2620 = vpop.f32.mrb[0].mxu0
      %v2621 = vadd.f32 %v2460, %v2620
      %v2622 = vpop.f32.mrb[0].mxu0
      %v2623 = vpop.f32.mrb[0].mxu0
      %v2624 = vadd.f32 %v2463, %v2623
      %v2625 = vpop.f32.mrb[0].mxu0
      %2626 = vmatprep.mubr.bf16.mxu0 0
      %2627 = vmatmul.mubr.bf16.gmra.mrb[0].mxu0 %v2346
      %v2628 = vpop.f32.mrb[0].mxu0
      %v2629 = vadd.f32 %v2468, %v2628
      %v2630 = vpop.f32.mrb[0].mxu0
      %v2631 = vpop.f32.mrb[0].mxu0
      %v2632 = vadd.f32 %v2471, %v2631
      %v2633 = vpop.f32.mrb[0].mxu0
      %2634 = vmatprep.mubr.bf16.mxu0 0
      %2635 = vmatmul.mubr.bf16.gmra.mrb[0].mxu0 %v2349
      %v2636 = vpop.f32.mrb[0].mxu0
      %v2637 = vadd.f32 %v2476, %v2636
      %v2638 = vpop.f32.mrb[0].mxu0
      %v2639 = vpop.f32.mrb[0].mxu0
      %v2640 = vadd.f32 %v2479, %v2639
      %v2641 = vpop.f32.mrb[0].mxu0
      %2642 = vmatprep.mubr.bf16.mxu0 0
      %2643 = vmatmul.mubr.bf16.gmra.mrb[0].mxu0 %v2352
      %v2644 = vpop.f32.mrb[0].mxu0
      %v2645 = vadd.f32 %v2484, %v2644
      %v2646 = vpop.f32.mrb[0].mxu0
      %v2647 = vpop.f32.mrb[0].mxu0
      %v2648 = vadd.f32 %v2487, %v2647
      %v2649 = vpop.f32.mrb[0].mxu0
      %2650 = vmatprep.mubr.bf16.mxu0 0
      %2651 = vmatmul.mubr.bf16.gmra.mrb[0].mxu0 %v2355
      %v2652 = vpop.f32.mrb[0].mxu0
      %v2653 = vadd.f32 %v2492, %v2652
      %v2654 = vpop.f32.mrb[0].mxu0
      %v2655 = vpop.f32.mrb[0].mxu0
      %v2656 = vadd.f32 %v2495, %v2655
      %v2657 = vpop.f32.mrb[0].mxu0
      %2658 = vmatprep.mubr.bf16.mxu0 0
      %2659 = vmatmul.mubr.bf16.gmra.mrb[0].mxu0 %v2358
      %v2660 = vpop.f32.mrb[0].mxu0
      %v2661 = vadd.f32 %v2500, %v2660
      %v2662 = vpop.f32.mrb[0].mxu0
      %v2663 = vpop.f32.mrb[0].mxu0
      %v2664 = vadd.f32 %v2503, %v2663
      %v2665 = vpop.f32.mrb[0].mxu0
      %2666 = vmatprep.mubr.bf16.mxu0 0
      %2667 = vmatmul.mubr.bf16.gmra.mrb[0].mxu0 %v2361
      %v2668 = vpop.f32.mrb[0].mxu0
      %v2669 = vadd.f32 %v2508, %v2668
      %v2670 = vpop.f32.mrb[0].mxu0
      %v2671 = vpop.f32.mrb[0].mxu0
      %v2672 = vadd.f32 %v2511, %v2671
      %v2673 = vpop.f32.mrb[0].mxu0
      %2674 = vmatprep.mubr.bf16.mxu0 0
      %2675 = vmatmul.mubr.bf16.gmra.mrb[0].mxu0 %v2364
      %v2676 = vpop.f32.mrb[0].mxu0
      %v2677 = vadd.f32 %v2516, %v2676
      %v2678 = vpop.f32.mrb[0].mxu0
      %v2679 = vpop.f32.mrb[0].mxu0
      %v2680 = vadd.f32 %v2519, %v2679
      %v2681 = vpop.f32.mrb[0].mxu0
      %2682 = vmatprep.mubr.bf16.mxu0 0
      %2683 = vmatmul.mubr.bf16.gmra.mrb[0].mxu0 %v2367
      %v2684 = vpop.f32.mrb[0].mxu0
      %v2685 = vadd.f32 %v2524, %v2684
      %v2686 = vpop.f32.mrb[0].mxu0
      %v2687 = vpop.f32.mrb[0].mxu0
      %v2688 = vadd.f32 %v2527, %v2687
      %v2689 = vpop.f32.mrb[0].mxu0
      %2690 = vdwg.mxu0
      %v2691 = vmax.f32 %v2565, 0.0
      %v2692 = vmax.f32 %v2568, 0.0
      %v2693 = vmax.f32 %v2573, 0.0
      %v2694 = vmax.f32 %v2576, 0.0
      %v2695 = vmax.f32 %v2581, 0.0
      %v2696 = vmax.f32 %v2584, 0.0
      %v2697 = vmax.f32 %v2589, 0.0
      %v2698 = vmax.f32 %v2592, 0.0
      %v2699 = vmax.f32 %v2597, 0.0
      %v2700 = vmax.f32 %v2600, 0.0
      %v2701 = vmax.f32 %v2605, 0.0
      %v2702 = vmax.f32 %v2608, 0.0
      %v2703 = vmax.f32 %v2613, 0.0
      %v2704 = vmax.f32 %v2616, 0.0
      %v2705 = vmax.f32 %v2621, 0.0
      %v2706 = vmax.f32 %v2624, 0.0
      %v2707 = vmax.f32 %v2629, 0.0
      %v2708 = vmax.f32 %v2632, 0.0
      %v2709 = vmax.f32 %v2637, 0.0
      %v2710 = vmax.f32 %v2640, 0.0
      %v2711 = vmax.f32 %v2645, 0.0
      %v2712 = vmax.f32 %v2648, 0.0
      %v2713 = vmax.f32 %v2653, 0.0
      %v2714 = vmax.f32 %v2656, 0.0
      %v2715 = vmax.f32 %v2661, 0.0
      %v2716 = vmax.f32 %v2664, 0.0
      %v2717 = vmax.f32 %v2669, 0.0
      %v2718 = vmax.f32 %v2672, 0.0
      %v2719 = vmax.f32 %v2677, 0.0
      %v2720 = vmax.f32 %v2680, 0.0
      %v2721 = vmax.f32 %v2685, 0.0
      %v2722 = vmax.f32 %v2688, 0.0
      %2723 = vst.msk [vmem:[#allocation3 + $0x8] sm:$0xff] %vm569, %v2691
      %2724 = vst.msk [vmem:[#allocation3 + $0x10] sm:$0xff] %vm569, %v2692
      %2725 = vst.msk [vmem:[#allocation3 + $0x18] sm:$0xff] %vm569, %v2693
      %2726 = vst.msk [vmem:[#allocation3 + $0x20] sm:$0xff] %vm569, %v2694
      %2727 = vst.msk [vmem:[#allocation3 + $0x28] sm:$0xff] %vm569, %v2695
      %2728 = vst.msk [vmem:[#allocation3 + $0x30] sm:$0xff] %vm569, %v2696
      %2729 = vst.msk [vmem:[#allocation3 + $0x38] sm:$0xff] %vm569, %v2697
      %2730 = vst.msk [vmem:[#allocation3 + $0x40] sm:$0xff] %vm569, %v2698
      %2731 = vst.msk [vmem:[#allocation3 + $0x48] sm:$0xff] %vm569, %v2699
      %2732 = vst.msk [vmem:[#allocation3 + $0x50] sm:$0xff] %vm569, %v2700
      %2733 = vst.msk [vmem:[#allocation3 + $0x58] sm:$0xff] %vm569, %v2701
      %2734 = vst.msk [vmem:[#allocation3 + $0x60] sm:$0xff] %vm569, %v2702
      %2735 = vst.msk [vmem:[#allocation3 + $0x68] sm:$0xff] %vm569, %v2703
      %2736 = vst.msk [vmem:[#allocation3 + $0x70] sm:$0xff] %vm569, %v2704
      %2737 = vst.msk [vmem:[#allocation3 + $0x78] sm:$0xff] %vm569, %v2705
      %2738 = vst.msk [vmem:[#allocation3 + $0x80] sm:$0xff] %vm569, %v2706
      %2739 = vst.msk [vmem:[#allocation3 + $0x88] sm:$0xff] %vm569, %v2707
      %2740 = vst.msk [vmem:[#allocation3 + $0x90] sm:$0xff] %vm569, %v2708
      %2741 = vst.msk [vmem:[#allocation3 + $0x98] sm:$0xff] %vm569, %v2709
      %2742 = vst.msk [vmem:[#allocation3 + $0xa0] sm:$0xff] %vm569, %v2710
      %2743 = vst.msk [vmem:[#allocation3 + $0xa8] sm:$0xff] %vm569, %v2711
      %2744 = vst.msk [vmem:[#allocation3 + $0xb0] sm:$0xff] %vm569, %v2712
      %2745 = vst.msk [vmem:[#allocation3 + $0xb8] sm:$0xff] %vm569, %v2713
      %2746 = vst.msk [vmem:[#allocation3 + $0xc0] sm:$0xff] %vm569, %v2714
      %2747 = vst.msk [vmem:[#allocation3 + $0xc8] sm:$0xff] %vm569, %v2715
      %2748 = vst.msk [vmem:[#allocation3 + $0xd0] sm:$0xff] %vm569, %v2716
      %2749 = vst.msk [vmem:[#allocation3 + $0xd8] sm:$0xff] %vm569, %v2717
      %2750 = vst.msk [vmem:[#allocation3 + $0xe0] sm:$0xff] %vm569, %v2718
      %2751 = vst.msk [vmem:[#allocation3 + $0xe8] sm:$0xff] %vm569, %v2719
      %2752 = vst.msk [vmem:[#allocation3 + $0xf0] sm:$0xff] %vm569, %v2720
      %2753 = vst.msk [vmem:[#allocation3 + $0xf8] sm:$0xff] %vm569, %v2721
      %2754 = vst.msk [vmem:[#allocation3 + $0x100] sm:$0xff] %vm569, %v2722
      %v2755 = vld [vmem:[#allocation2 + $0x100] sm:$0xff]
      %v2756 = vld [vmem:[#allocation2 + $0x108] sm:$0xff]
      %v2757 = vld [vmem:[#allocation2 + $0x110] sm:$0xff]
      %v2758 = vld [vmem:[#allocation2 + $0x118] sm:$0xff]
      %v2759 = vld [vmem:[#allocation2 + $0x120] sm:$0xff]
      %v2760 = vld [vmem:[#allocation2 + $0x128] sm:$0xff]
      %v2761 = vld [vmem:[#allocation2 + $0x130] sm:$0xff]
      %v2762 = vld [vmem:[#allocation2 + $0x138] sm:$0xff]
      %v2763 = vld [vmem:[#allocation2 + $0x140] sm:$0xff]
      %v2764 = vld [vmem:[#allocation2 + $0x148] sm:$0xff]
      %v2765 = vld [vmem:[#allocation2 + $0x150] sm:$0xff]
      %v2766 = vld [vmem:[#allocation2 + $0x158] sm:$0xff]
      %v2767 = vld [vmem:[#allocation2 + $0x160] sm:$0xff]
      %v2768 = vld [vmem:[#allocation2 + $0x168] sm:$0xff]
      %v2769 = vld [vmem:[#allocation2 + $0x170] sm:$0xff]
      %v2770 = vld [vmem:[#allocation2 + $0x178] sm:$0xff]
      %v2771 = vld [vmem:[#allocation2 + $0x180] sm:$0xff]
      %v2772 = vld [vmem:[#allocation2 + $0x188] sm:$0xff]
      %v2773 = vld [vmem:[#allocation2 + $0x190] sm:$0xff]
      %v2774 = vld [vmem:[#allocation2 + $0x198] sm:$0xff]
      %v2775 = vld [vmem:[#allocation2 + $0x1a0] sm:$0xff]
      %v2776 = vld [vmem:[#allocation2 + $0x1a8] sm:$0xff]
      %v2777 = vld [vmem:[#allocation2 + $0x1b0] sm:$0xff]
      %v2778 = vld [vmem:[#allocation2 + $0x1b8] sm:$0xff]
      %v2779 = vld [vmem:[#allocation2 + $0x1c0] sm:$0xff]
      %v2780 = vld [vmem:[#allocation2 + $0x1c8] sm:$0xff]
      %v2781 = vld [vmem:[#allocation2 + $0x1d0] sm:$0xff]
      %v2782 = vld [vmem:[#allocation2 + $0x1d8] sm:$0xff]
      %v2783 = vld [vmem:[#allocation2 + $0x1e0] sm:$0xff]
      %v2784 = vld [vmem:[#allocation2 + $0x1e8] sm:$0xff]
      %v2785 = vld [vmem:[#allocation2 + $0x1f0] sm:$0xff]
      %v2786 = vld [vmem:[#allocation2 + $0x1f8] sm:$0xff]
      %v2787 = vld [vmem:[#allocation2 + $0x200] sm:$0xff]
      %v2788 = vld [vmem:[#allocation2 + $0x208] sm:$0xff]
      %v2789 = vpack.c.bf16 %v2756, %v2755
      %v2790 = vpack.c.bf16 %v2758, %v2757
      %v2791 = vpack.c.bf16 %v2760, %v2759
      %v2792 = vpack.c.bf16 %v2762, %v2761
      %v2793 = vpack.c.bf16 %v2764, %v2763
      %v2794 = vpack.c.bf16 %v2766, %v2765
      %v2795 = vpack.c.bf16 %v2768, %v2767
      %v2796 = vpack.c.bf16 %v2770, %v2769
      %v2797 = vpack.c.bf16 %v2772, %v2771
      %v2798 = vpack.c.bf16 %v2774, %v2773
      %v2799 = vpack.c.bf16 %v2776, %v2775
      %v2800 = vpack.c.bf16 %v2778, %v2777
      %v2801 = vpack.c.bf16 %v2780, %v2779
      %v2802 = vpack.c.bf16 %v2782, %v2781
      %v2803 = vpack.c.bf16 %v2784, %v2783
      %v2804 = vpack.c.bf16 %v2786, %v2785
      %v2805 = vpack.c.bf16 %v2787, %v2787
      %v2806 = vpack.c.bf16 %v2757, %v2756
      %v2807 = vpack.c.bf16 %v2759, %v2758
      %v2808 = vpack.c.bf16 %v2761, %v2760
      %v2809 = vpack.c.bf16 %v2763, %v2762
      %v2810 = vpack.c.bf16 %v2765, %v2764
      %v2811 = vpack.c.bf16 %v2767, %v2766
      %v2812 = vpack.c.bf16 %v2769, %v2768
      %v2813 = vpack.c.bf16 %v2771, %v2770
      %v2814 = vpack.c.bf16 %v2773, %v2772
      %v2815 = vpack.c.bf16 %v2775, %v2774
      %v2816 = vpack.c.bf16 %v2777, %v2776
      %v2817 = vpack.c.bf16 %v2779, %v2778
      %v2818 = vpack.c.bf16 %v2781, %v2780
      %v2819 = vpack.c.bf16 %v2783, %v2782
      %v2820 = vpack.c.bf16 %v2785, %v2784
      %v2821 = vpack.c.bf16 %v2787, %v2786
      %v2822 = vpack.c.bf16 %v2788, %v2788
      %v2824 = vshrl.u32 %v2789, 16
      %v2826 = vshll.u32 %v2789, 16
      %v2828 = vrot.slane %v2826, 1
      %v2829 = vor.u32 %v2824, %v2828
      %v2831 = vshll.u32 %v2790, 16
      %v2833 = vrot.slane %v2831, 1
      %v2834 = vsel %vm1467, %v2829, %v2833
      %v2835 = vshrl.u32 %v2790, 16
      %v2837 = vor.u32 %v2835, %v2833
      %v2839 = vshll.u32 %v2791, 16
      %v2841 = vrot.slane %v2839, 1
      %v2842 = vsel %vm1467, %v2837, %v2841
      %v2843 = vshrl.u32 %v2791, 16
      %v2845 = vor.u32 %v2843, %v2841
      %v2847 = vshll.u32 %v2792, 16
      %v2849 = vrot.slane %v2847, 1
      %v2850 = vsel %vm1467, %v2845, %v2849
      %v2851 = vshrl.u32 %v2792, 16
      %v2853 = vor.u32 %v2851, %v2849
      %v2855 = vshll.u32 %v2793, 16
      %v2857 = vrot.slane %v2855, 1
      %v2858 = vsel %vm1467, %v2853, %v2857
      %v2859 = vshrl.u32 %v2793, 16
      %v2861 = vor.u32 %v2859, %v2857
      %v2863 = vshll.u32 %v2794, 16
      %v2865 = vrot.slane %v2863, 1
      %v2866 = vsel %vm1467, %v2861, %v2865
      %v2867 = vshrl.u32 %v2794, 16
      %v2869 = vor.u32 %v2867, %v2865
      %v2871 = vshll.u32 %v2795, 16
      %v2873 = vrot.slane %v2871, 1
      %v2874 = vsel %vm1467, %v2869, %v2873
      %v2875 = vshrl.u32 %v2795, 16
      %v2877 = vor.u32 %v2875, %v2873
      %v2879 = vshll.u32 %v2796, 16
      %v2881 = vrot.slane %v2879, 1
      %v2882 = vsel %vm1467, %v2877, %v2881
      %v2883 = vshrl.u32 %v2796, 16
      %v2885 = vor.u32 %v2883, %v2881
      %v2887 = vshll.u32 %v2797, 16
      %v2889 = vrot.slane %v2887, 1
      %v2890 = vsel %vm1467, %v2885, %v2889
      %v2891 = vshrl.u32 %v2797, 16
      %v2893 = vor.u32 %v2891, %v2889
      %v2895 = vshll.u32 %v2798, 16
      %v2897 = vrot.slane %v2895, 1
      %v2898 = vsel %vm1467, %v2893, %v2897
      %v2899 = vshrl.u32 %v2798, 16
      %v2901 = vor.u32 %v2899, %v2897
      %v2903 = vshll.u32 %v2799, 16
      %v2905 = vrot.slane %v2903, 1
      %v2906 = vsel %vm1467, %v2901, %v2905
      %v2907 = vshrl.u32 %v2799, 16
      %v2909 = vor.u32 %v2907, %v2905
      %v2911 = vshll.u32 %v2800, 16
      %v2913 = vrot.slane %v2911, 1
      %v2914 = vsel %vm1467, %v2909, %v2913
      %v2915 = vshrl.u32 %v2800, 16
      %v2917 = vor.u32 %v2915, %v2913
      %v2919 = vshll.u32 %v2801, 16
      %v2921 = vrot.slane %v2919, 1
      %v2922 = vsel %vm1467, %v2917, %v2921
      %v2923 = vshrl.u32 %v2801, 16
      %v2925 = vor.u32 %v2923, %v2921
      %v2927 = vshll.u32 %v2802, 16
      %v2929 = vrot.slane %v2927, 1
      %v2930 = vsel %vm1467, %v2925, %v2929
      %v2931 = vshrl.u32 %v2802, 16
      %v2933 = vor.u32 %v2931, %v2929
      %v2935 = vshll.u32 %v2803, 16
      %v2937 = vrot.slane %v2935, 1
      %v2938 = vsel %vm1467, %v2933, %v2937
      %v2939 = vshrl.u32 %v2803, 16
      %v2941 = vor.u32 %v2939, %v2937
      %v2943 = vshll.u32 %v2804, 16
      %v2945 = vrot.slane %v2943, 1
      %v2946 = vsel %vm1467, %v2941, %v2945
      %v2947 = vshrl.u32 %v2804, 16
      %v2949 = vor.u32 %v2947, %v2945
      %v2951 = vshll.u32 %v2805, 16
      %v2953 = vrot.slane %v2951, 1
      %v2954 = vsel %vm1467, %v2949, %v2953
      %v2955 = vshrl.u32 %v2805, 16
      %v2957 = vor.u32 %v2955, %v2953
      %2958 = vrot.lane.b32.xlu0 %v2834, 64
      %v2959 = vpop.permute.xlu0 %2958
      %2960 = vrot.lane.b32.xlu0 %v2842, 64
      %v2961 = vpop.permute.xlu0 %2960
      %2962 = vrot.lane.b32.xlu0 %v2850, 64
      %v2963 = vpop.permute.xlu0 %2962
      %2964 = vrot.lane.b32.xlu0 %v2858, 64
      %v2965 = vpop.permute.xlu0 %2964
      %2966 = vrot.lane.b32.xlu0 %v2866, 64
      %v2967 = vpop.permute.xlu0 %2966
      %2968 = vrot.lane.b32.xlu0 %v2874, 64
      %v2969 = vpop.permute.xlu0 %2968
      %2970 = vrot.lane.b32.xlu0 %v2882, 64
      %v2971 = vpop.permute.xlu0 %2970
      %2972 = vrot.lane.b32.xlu0 %v2890, 64
      %v2973 = vpop.permute.xlu0 %2972
      %2974 = vrot.lane.b32.xlu0 %v2898, 64
      %v2975 = vpop.permute.xlu0 %2974
      %2976 = vrot.lane.b32.xlu0 %v2906, 64
      %v2977 = vpop.permute.xlu0 %2976
      %2978 = vrot.lane.b32.xlu0 %v2914, 64
      %v2979 = vpop.permute.xlu0 %2978
      %2980 = vrot.lane.b32.xlu0 %v2922, 64
      %v2981 = vpop.permute.xlu0 %2980
      %2982 = vrot.lane.b32.xlu0 %v2930, 64
      %v2983 = vpop.permute.xlu0 %2982
      %2984 = vrot.lane.b32.xlu0 %v2938, 64
      %v2985 = vpop.permute.xlu0 %2984
      %2986 = vrot.lane.b32.xlu0 %v2946, 64
      %v2987 = vpop.permute.xlu0 %2986
      %2988 = vrot.lane.b32.xlu0 %v2954, 64
      %v2989 = vpop.permute.xlu0 %2988
      %2990 = vrot.lane.b32.xlu0 %v2957, 64
      %v2991 = vpop.permute.xlu0 %2990
      %v3008 = vrot.slane %v2806, 5
      %v3009 = vrot.slane %v2807, 5
      %v3010 = vsel %vm1653, %v3008, %v3009
      %v3011 = vrot.slane %v2808, 5
      %v3012 = vsel %vm1653, %v3009, %v3011
      %v3013 = vrot.slane %v2809, 5
      %v3014 = vsel %vm1653, %v3011, %v3013
      %v3015 = vrot.slane %v2810, 5
      %v3016 = vsel %vm1653, %v3013, %v3015
      %v3017 = vrot.slane %v2811, 5
      %v3018 = vsel %vm1653, %v3015, %v3017
      %v3019 = vrot.slane %v2812, 5
      %v3020 = vsel %vm1653, %v3017, %v3019
      %v3021 = vrot.slane %v2813, 5
      %v3022 = vsel %vm1653, %v3019, %v3021
      %v3023 = vrot.slane %v2814, 5
      %v3024 = vsel %vm1653, %v3021, %v3023
      %v3025 = vrot.slane %v2815, 5
      %v3026 = vsel %vm1653, %v3023, %v3025
      %v3027 = vrot.slane %v2816, 5
      %v3028 = vsel %vm1653, %v3025, %v3027
      %v3029 = vrot.slane %v2817, 5
      %v3030 = vsel %vm1653, %v3027, %v3029
      %v3031 = vrot.slane %v2818, 5
      %v3032 = vsel %vm1653, %v3029, %v3031
      %v3033 = vrot.slane %v2819, 5
      %v3034 = vsel %vm1653, %v3031, %v3033
      %v3035 = vrot.slane %v2820, 5
      %v3036 = vsel %vm1653, %v3033, %v3035
      %v3037 = vrot.slane %v2821, 5
      %v3038 = vsel %vm1653, %v3035, %v3037
      %v3040 = vshrl.u32 %v2806, 16
      %v3042 = vrot.slane %v3040, 5
      %v3043 = vshll.u32 %v2806, 16
      %v3045 = vrot.slane %v3043, 6
      %v3046 = vor.u32 %v3042, %v3045
      %v3048 = vshrl.u32 %v2807, 16
      %v3050 = vrot.slane %v3048, 5
      %v3051 = vshll.u32 %v2807, 16
      %v3053 = vrot.slane %v3051, 6
      %v3054 = vor.u32 %v3050, %v3053
      %v3055 = vsel %vm1685, %v3046, %v3054
      %v3057 = vshrl.u32 %v2808, 16
      %v3059 = vrot.slane %v3057, 5
      %v3060 = vshll.u32 %v2808, 16
      %v3062 = vrot.slane %v3060, 6
      %v3063 = vor.u32 %v3059, %v3062
      %v3064 = vsel %vm1685, %v3054, %v3063
      %v3066 = vshrl.u32 %v2809, 16
      %v3068 = vrot.slane %v3066, 5
      %v3069 = vshll.u32 %v2809, 16
      %v3071 = vrot.slane %v3069, 6
      %v3072 = vor.u32 %v3068, %v3071
      %v3073 = vsel %vm1685, %v3063, %v3072
      %v3075 = vshrl.u32 %v2810, 16
      %v3077 = vrot.slane %v3075, 5
      %v3078 = vshll.u32 %v2810, 16
      %v3080 = vrot.slane %v3078, 6
      %v3081 = vor.u32 %v3077, %v3080
      %v3082 = vsel %vm1685, %v3072, %v3081
      %v3084 = vshrl.u32 %v2811, 16
      %v3086 = vrot.slane %v3084, 5
      %v3087 = vshll.u32 %v2811, 16
      %v3089 = vrot.slane %v3087, 6
      %v3090 = vor.u32 %v3086, %v3089
      %v3091 = vsel %vm1685, %v3081, %v3090
      %v3093 = vshrl.u32 %v2812, 16
      %v3095 = vrot.slane %v3093, 5
      %v3096 = vshll.u32 %v2812, 16
      %v3098 = vrot.slane %v3096, 6
      %v3099 = vor.u32 %v3095, %v3098
      %v3100 = vsel %vm1685, %v3090, %v3099
      %v3102 = vshrl.u32 %v2813, 16
      %v3104 = vrot.slane %v3102, 5
      %v3105 = vshll.u32 %v2813, 16
      %v3107 = vrot.slane %v3105, 6
      %v3108 = vor.u32 %v3104, %v3107
      %v3109 = vsel %vm1685, %v3099, %v3108
      %v3111 = vshrl.u32 %v2814, 16
      %v3113 = vrot.slane %v3111, 5
      %v3114 = vshll.u32 %v2814, 16
      %v3116 = vrot.slane %v3114, 6
      %v3117 = vor.u32 %v3113, %v3116
      %v3118 = vsel %vm1685, %v3108, %v3117
      %v3120 = vshrl.u32 %v2815, 16
      %v3122 = vrot.slane %v3120, 5
      %v3123 = vshll.u32 %v2815, 16
      %v3125 = vrot.slane %v3123, 6
      %v3126 = vor.u32 %v3122, %v3125
      %v3127 = vsel %vm1685, %v3117, %v3126
      %v3129 = vshrl.u32 %v2816, 16
      %v3131 = vrot.slane %v3129, 5
      %v3132 = vshll.u32 %v2816, 16
      %v3134 = vrot.slane %v3132, 6
      %v3135 = vor.u32 %v3131, %v3134
      %v3136 = vsel %vm1685, %v3126, %v3135
      %v3138 = vshrl.u32 %v2817, 16
      %v3140 = vrot.slane %v3138, 5
      %v3141 = vshll.u32 %v2817, 16
      %v3143 = vrot.slane %v3141, 6
      %v3144 = vor.u32 %v3140, %v3143
      %v3145 = vsel %vm1685, %v3135, %v3144
      %v3147 = vshrl.u32 %v2818, 16
      %v3149 = vrot.slane %v3147, 5
      %v3150 = vshll.u32 %v2818, 16
      %v3152 = vrot.slane %v3150, 6
      %v3153 = vor.u32 %v3149, %v3152
      %v3154 = vsel %vm1685, %v3144, %v3153
      %v3156 = vshrl.u32 %v2819, 16
      %v3158 = vrot.slane %v3156, 5
      %v3159 = vshll.u32 %v2819, 16
      %v3161 = vrot.slane %v3159, 6
      %v3162 = vor.u32 %v3158, %v3161
      %v3163 = vsel %vm1685, %v3153, %v3162
      %v3165 = vshrl.u32 %v2820, 16
      %v3167 = vrot.slane %v3165, 5
      %v3168 = vshll.u32 %v2820, 16
      %v3170 = vrot.slane %v3168, 6
      %v3171 = vor.u32 %v3167, %v3170
      %v3172 = vsel %vm1685, %v3162, %v3171
      %v3174 = vshrl.u32 %v2821, 16
      %v3176 = vrot.slane %v3174, 5
      %v3177 = vshll.u32 %v2821, 16
      %v3179 = vrot.slane %v3177, 6
      %v3180 = vor.u32 %v3176, %v3179
      %v3181 = vsel %vm1685, %v3171, %v3180
      %v3183 = vshll.u32 %v2822, 16
      %v3185 = vrot.slane %v3183, 6
      %v3186 = vsel %vm1685, %v3180, %v3185
      %3187 = vrot.lane.b32.xlu0 %v3046, 64
      %v3188 = vpop.permute.xlu0 %3187
      %3189 = vrot.lane.b32.xlu0 %v3055, 64
      %v3190 = vpop.permute.xlu0 %3189
      %3191 = vrot.lane.b32.xlu0 %v3064, 64
      %v3192 = vpop.permute.xlu0 %3191
      %3193 = vrot.lane.b32.xlu0 %v3073, 64
      %v3194 = vpop.permute.xlu0 %3193
      %3195 = vrot.lane.b32.xlu0 %v3082, 64
      %v3196 = vpop.permute.xlu0 %3195
      %3197 = vrot.lane.b32.xlu0 %v3091, 64
      %v3198 = vpop.permute.xlu0 %3197
      %3199 = vrot.lane.b32.xlu0 %v3100, 64
      %v3200 = vpop.permute.xlu0 %3199
      %3201 = vrot.lane.b32.xlu0 %v3109, 64
      %v3202 = vpop.permute.xlu0 %3201
      %3203 = vrot.lane.b32.xlu0 %v3118, 64
      %v3204 = vpop.permute.xlu0 %3203
      %3205 = vrot.lane.b32.xlu0 %v3127, 64
      %v3206 = vpop.permute.xlu0 %3205
      %3207 = vrot.lane.b32.xlu0 %v3136, 64
      %v3208 = vpop.permute.xlu0 %3207
      %3209 = vrot.lane.b32.xlu0 %v3145, 64
      %v3210 = vpop.permute.xlu0 %3209
      %3211 = vrot.lane.b32.xlu0 %v3154, 64
      %v3212 = vpop.permute.xlu0 %3211
      %3213 = vrot.lane.b32.xlu0 %v3163, 64
      %v3214 = vpop.permute.xlu0 %3213
      %3215 = vrot.lane.b32.xlu0 %v3172, 64
      %v3216 = vpop.permute.xlu0 %3215
      %3217 = vrot.lane.b32.xlu0 %v3181, 64
      %v3218 = vpop.permute.xlu0 %3217
      %3219 = vrot.lane.b32.xlu0 %v3186, 64
      %v3220 = vpop.permute.xlu0 %3219
      %v3222 = vrot.slane %v2806, 6
      %v3223 = vrot.slane %v2807, 6
      %v3224 = vsel %vm1869, %v3222, %v3223
      %v3225 = vrot.slane %v2808, 6
      %v3226 = vsel %vm1869, %v3223, %v3225
      %v3227 = vrot.slane %v2809, 6
      %v3228 = vsel %vm1869, %v3225, %v3227
      %v3229 = vrot.slane %v2810, 6
      %v3230 = vsel %vm1869, %v3227, %v3229
      %v3231 = vrot.slane %v2811, 6
      %v3232 = vsel %vm1869, %v3229, %v3231
      %v3233 = vrot.slane %v2812, 6
      %v3234 = vsel %vm1869, %v3231, %v3233
      %v3235 = vrot.slane %v2813, 6
      %v3236 = vsel %vm1869, %v3233, %v3235
      %v3237 = vrot.slane %v2814, 6
      %v3238 = vsel %vm1869, %v3235, %v3237
      %v3239 = vrot.slane %v2815, 6
      %v3240 = vsel %vm1869, %v3237, %v3239
      %v3241 = vrot.slane %v2816, 6
      %v3242 = vsel %vm1869, %v3239, %v3241
      %v3243 = vrot.slane %v2817, 6
      %v3244 = vsel %vm1869, %v3241, %v3243
      %v3245 = vrot.slane %v2818, 6
      %v3246 = vsel %vm1869, %v3243, %v3245
      %v3247 = vrot.slane %v2819, 6
      %v3248 = vsel %vm1869, %v3245, %v3247
      %v3249 = vrot.slane %v2820, 6
      %v3250 = vsel %vm1869, %v3247, %v3249
      %v3251 = vrot.slane %v2821, 6
      %v3252 = vsel %vm1869, %v3249, %v3251
      %v3253 = vrot.slane %v2822, 6
      %v3254 = vsel %vm1869, %v3251, %v3253
      %v3256 = vsel %vm569, %v2789, %v2959
      %v3258 = vsel %vm569, %v2790, %v2961
      %v3260 = vsel %vm569, %v2791, %v2963
      %v3262 = vsel %vm569, %v2792, %v2965
      %v3264 = vsel %vm569, %v2793, %v2967
      %v3266 = vsel %vm569, %v2794, %v2969
      %v3268 = vsel %vm569, %v2795, %v2971
      %v3270 = vsel %vm569, %v2796, %v2973
      %v3272 = vsel %vm569, %v2797, %v2975
      %v3274 = vsel %vm569, %v2798, %v2977
      %v3276 = vsel %vm569, %v2799, %v2979
      %v3278 = vsel %vm569, %v2800, %v2981
      %v3280 = vsel %vm569, %v2801, %v2983
      %v3282 = vsel %vm569, %v2802, %v2985
      %v3284 = vsel %vm569, %v2803, %v2987
      %v3286 = vsel %vm569, %v2804, %v2989
      %v3288 = vsel %vm569, %v2805, %v2991
      %v3291 = vsel %vm569, %v3008, %v3188
      %v3294 = vsel %vm569, %v3010, %v3190
      %v3297 = vsel %vm569, %v3012, %v3192
      %v3300 = vsel %vm569, %v3014, %v3194
      %v3303 = vsel %vm569, %v3016, %v3196
      %v3306 = vsel %vm569, %v3018, %v3198
      %v3309 = vsel %vm569, %v3020, %v3200
      %v3312 = vsel %vm569, %v3022, %v3202
      %v3315 = vsel %vm569, %v3024, %v3204
      %v3318 = vsel %vm569, %v3026, %v3206
      %v3321 = vsel %vm569, %v3028, %v3208
      %v3324 = vsel %vm569, %v3030, %v3210
      %v3327 = vsel %vm569, %v3032, %v3212
      %v3330 = vsel %vm569, %v3034, %v3214
      %v3333 = vsel %vm569, %v3036, %v3216
      %v3336 = vsel %vm569, %v3038, %v3218
      %v3339 = vsel %vm569, %v3037, %v3220
      %v3340 = vld [vmem:[%s5] sm:$0xf]
      %v3341 = vld [vmem:[%s5 + $0x4] sm:$0xf]
      %v3342 = vld [vmem:[%s5 + $0x8] sm:$0xf]
      %v3343 = vld [vmem:[%s5 + $0xc] sm:$0xf]
      %v3344 = vld [vmem:[%s5 + $0x10] sm:$0xf]
      %v3345 = vld [vmem:[%s5 + $0x14] sm:$0xf]
      %v3346 = vld [vmem:[%s5 + $0x18] sm:$0xf]
      %v3347 = vld [vmem:[%s5 + $0x1c] sm:$0xf]
      %v3348 = vld [vmem:[%s5 + $0x20] sm:$0xf]
      %v3349 = vld [vmem:[%s5 + $0x24] sm:$0xf]
      %v3350 = vld [vmem:[%s5 + $0x28] sm:$0xf]
      %v3351 = vld [vmem:[%s5 + $0x2c] sm:$0xf]
      %v3352 = vld [vmem:[%s5 + $0x30] sm:$0xf]
      %v3353 = vld [vmem:[%s5 + $0x34] sm:$0xf]
      %v3354 = vld [vmem:[%s5 + $0x38] sm:$0xf]
      %v3355 = vld [vmem:[%s5 + $0x3c] sm:$0xf]
      %v3356 = vld [vmem:[%s5 + $0x40] sm:$0xf]
      %v3357 = vld [vmem:[%s5 + $0x44] sm:$0xf]
      %v3358 = vld [vmem:[%s5 + $0x48] sm:$0xf]
      %v3359 = vld [vmem:[%s5 + $0x4c] sm:$0xf]
      %v3360 = vld [vmem:[%s5 + $0x50] sm:$0xf]
      %v3361 = vld [vmem:[%s5 + $0x54] sm:$0xf]
      %v3362 = vld [vmem:[%s5 + $0x58] sm:$0xf]
      %v3363 = vld [vmem:[%s5 + $0x5c] sm:$0xf]
      %v3364 = vld [vmem:[%s5 + $0x60] sm:$0xf]
      %v3365 = vld [vmem:[%s5 + $0x64] sm:$0xf]
      %v3366 = vld [vmem:[%s5 + $0x68] sm:$0xf]
      %v3367 = vld [vmem:[%s5 + $0x6c] sm:$0xf]
      %v3368 = vld [vmem:[%s5 + $0x70] sm:$0xf]
      %v3369 = vld [vmem:[%s5 + $0x74] sm:$0xf]
      %v3370 = vld [vmem:[%s5 + $0x78] sm:$0xf]
      %v3371 = vld [vmem:[%s5 + $0x7c] sm:$0xf]
      %v3372 = vld [vmem:[%s5 + $0x80] sm:$0xf]
      %v3373 = vld [vmem:[%s5 + $0x84] sm:$0xf]
      %v3374 = vld [vmem:[%s5 + $0x88] sm:$0xf]
      %v3375 = vld [vmem:[%s5 + $0x8c] sm:$0xf]
      %v3376 = vld [vmem:[%s5 + $0x90] sm:$0xf]
      %v3377 = vld [vmem:[%s5 + $0x94] sm:$0xf]
      %v3378 = vld [vmem:[%s5 + $0x98] sm:$0xf]
      %v3379 = vld [vmem:[%s5 + $0x9c] sm:$0xf]
      %v3380 = vld [vmem:[%s6] sm:$0x1]
      %v3382 = vlaneseq
      %v3383 = vshrl.u32 %v3382, 7
      %v3384 = vsub.s32 0, %v3383
      %v3385 = vrot.slane %v3380, %v3384
      %v3421 = vrot.slane %v3256, 3
      %v3422 = vrot.slane %v3258, 3
      %v3423 = vsel %vm2069, %v3421, %v3422
      %v3424 = vrot.slane %v3291, 3
      %v3425 = vrot.slane %v3294, 3
      %v3426 = vsel %vm2069, %v3424, %v3425
      %v3427 = vrot.slane %v3222, 3
      %v3428 = vrot.slane %v3224, 3
      %v3429 = vsel %vm2069, %v3427, %v3428
      %v3430 = vrot.slane %v3260, 3
      %v3431 = vsel %vm2069, %v3422, %v3430
      %v3432 = vrot.slane %v3297, 3
      %v3433 = vsel %vm2069, %v3425, %v3432
      %v3434 = vrot.slane %v3226, 3
      %v3435 = vsel %vm2069, %v3428, %v3434
      %v3436 = vrot.slane %v3262, 3
      %v3437 = vsel %vm2069, %v3430, %v3436
      %v3438 = vrot.slane %v3300, 3
      %v3439 = vsel %vm2069, %v3432, %v3438
      %v3440 = vrot.slane %v3228, 3
      %v3441 = vsel %vm2069, %v3434, %v3440
      %v3442 = vrot.slane %v3264, 3
      %v3443 = vsel %vm2069, %v3436, %v3442
      %v3444 = vrot.slane %v3303, 3
      %v3445 = vsel %vm2069, %v3438, %v3444
      %v3446 = vrot.slane %v3230, 3
      %v3447 = vsel %vm2069, %v3440, %v3446
      %v3448 = vrot.slane %v3266, 3
      %v3449 = vsel %vm2069, %v3442, %v3448
      %v3450 = vrot.slane %v3306, 3
      %v3451 = vsel %vm2069, %v3444, %v3450
      %v3452 = vrot.slane %v3232, 3
      %v3453 = vsel %vm2069, %v3446, %v3452
      %v3454 = vrot.slane %v3268, 3
      %v3455 = vsel %vm2069, %v3448, %v3454
      %v3456 = vrot.slane %v3309, 3
      %v3457 = vsel %vm2069, %v3450, %v3456
      %v3458 = vrot.slane %v3234, 3
      %v3459 = vsel %vm2069, %v3452, %v3458
      %v3460 = vrot.slane %v3270, 3
      %v3461 = vsel %vm2069, %v3454, %v3460
      %v3462 = vrot.slane %v3312, 3
      %v3463 = vsel %vm2069, %v3456, %v3462
      %v3464 = vrot.slane %v3236, 3
      %v3465 = vsel %vm2069, %v3458, %v3464
      %v3466 = vrot.slane %v3272, 3
      %v3467 = vsel %vm2069, %v3460, %v3466
      %v3468 = vrot.slane %v3315, 3
      %v3469 = vsel %vm2069, %v3462, %v3468
      %v3470 = vrot.slane %v3238, 3
      %v3471 = vsel %vm2069, %v3464, %v3470
      %v3472 = vrot.slane %v3274, 3
      %v3473 = vsel %vm2069, %v3466, %v3472
      %v3474 = vrot.slane %v3318, 3
      %v3475 = vsel %vm2069, %v3468, %v3474
      %v3476 = vrot.slane %v3240, 3
      %v3477 = vsel %vm2069, %v3470, %v3476
      %v3478 = vrot.slane %v3276, 3
      %v3479 = vsel %vm2069, %v3472, %v3478
      %v3480 = vrot.slane %v3321, 3
      %v3481 = vsel %vm2069, %v3474, %v3480
      %v3482 = vrot.slane %v3242, 3
      %v3483 = vsel %vm2069, %v3476, %v3482
      %v3484 = vrot.slane %v3278, 3
      %v3485 = vsel %vm2069, %v3478, %v3484
      %v3486 = vrot.slane %v3324, 3
      %v3487 = vsel %vm2069, %v3480, %v3486
      %v3488 = vrot.slane %v3244, 3
      %v3489 = vsel %vm2069, %v3482, %v3488
      %v3490 = vrot.slane %v3280, 3
      %v3491 = vsel %vm2069, %v3484, %v3490
      %v3492 = vrot.slane %v3327, 3
      %v3493 = vsel %vm2069, %v3486, %v3492
      %v3494 = vrot.slane %v3246, 3
      %v3495 = vsel %vm2069, %v3488, %v3494
      %v3496 = vrot.slane %v3282, 3
      %v3497 = vsel %vm2069, %v3490, %v3496
      %v3498 = vrot.slane %v3330, 3
      %v3499 = vsel %vm2069, %v3492, %v3498
      %v3500 = vrot.slane %v3248, 3
      %v3501 = vsel %vm2069, %v3494, %v3500
      %v3502 = vrot.slane %v3284, 3
      %v3503 = vsel %vm2069, %v3496, %v3502
      %v3504 = vrot.slane %v3333, 3
      %v3505 = vsel %vm2069, %v3498, %v3504
      %v3506 = vrot.slane %v3250, 3
      %v3507 = vsel %vm2069, %v3500, %v3506
      %v3508 = vrot.slane %v3286, 3
      %v3509 = vsel %vm2069, %v3502, %v3508
      %v3510 = vrot.slane %v3336, 3
      %v3511 = vsel %vm2069, %v3504, %v3510
      %v3512 = vrot.slane %v3252, 3
      %v3513 = vsel %vm2069, %v3506, %v3512
      %v3514 = vrot.slane %v3288, 3
      %v3515 = vsel %vm2069, %v3508, %v3514
      %v3516 = vrot.slane %v3339, 3
      %v3517 = vsel %vm2069, %v3510, %v3516
      %v3518 = vrot.slane %v3254, 3
      %v3519 = vsel %vm2069, %v3512, %v3518
      %v3592 = vunpack.c.l.b16 %v3340
      %v3593 = vunpack.c.l.b16 %v3341
      %v3594 = vunpack.c.l.b16 %v3342
      %v3595 = vunpack.c.l.b16 %v3343
      %v3596 = vunpack.c.l.b16 %v3344
      %v3597 = vunpack.c.l.b16 %v3345
      %v3598 = vunpack.c.l.b16 %v3346
      %v3599 = vunpack.c.l.b16 %v3347
      %v3600 = vunpack.c.l.b16 %v3348
      %v3601 = vunpack.c.l.b16 %v3349
      %v3602 = vunpack.c.l.b16 %v3350
      %v3603 = vunpack.c.l.b16 %v3351
      %v3604 = vunpack.c.l.b16 %v3352
      %v3605 = vunpack.c.l.b16 %v3353
      %v3606 = vunpack.c.l.b16 %v3354
      %v3607 = vunpack.c.l.b16 %v3355
      %v3608 = vunpack.c.l.b16 %v3356
      %v3609 = vunpack.c.l.b16 %v3357
      %v3610 = vunpack.c.l.b16 %v3358
      %v3611 = vunpack.c.l.b16 %v3359
      %v3612 = vunpack.c.l.b16 %v3360
      %v3613 = vunpack.c.l.b16 %v3361
      %v3614 = vunpack.c.l.b16 %v3362
      %v3615 = vunpack.c.l.b16 %v3363
      %v3616 = vunpack.c.l.b16 %v3364
      %v3617 = vunpack.c.l.b16 %v3365
      %v3618 = vunpack.c.l.b16 %v3366
      %v3619 = vunpack.c.l.b16 %v3367
      %v3620 = vunpack.c.l.b16 %v3368
      %v3621 = vunpack.c.l.b16 %v3369
      %v3622 = vunpack.c.l.b16 %v3370
      %v3623 = vunpack.c.l.b16 %v3371
      %v3624 = vunpack.c.l.b16 %v3372
      %v3625 = vunpack.c.l.b16 %v3373
      %v3626 = vunpack.c.l.b16 %v3374
      %v3627 = vunpack.c.l.b16 %v3375
      %v3628 = vunpack.c.l.b16 %v3376
      %v3629 = vunpack.c.l.b16 %v3377
      %v3630 = vunpack.c.l.b16 %v3378
      %v3631 = vunpack.c.l.b16 %v3379
      %v3632 = vpack.c.b16 %v3593, %v3592
      %v3633 = vpack.c.b16 %v3595, %v3594
      %v3634 = vpack.c.b16 %v3597, %v3596
      %v3635 = vpack.c.b16 %v3599, %v3598
      %v3636 = vpack.c.b16 %v3601, %v3600
      %v3637 = vpack.c.b16 %v3603, %v3602
      %v3638 = vpack.c.b16 %v3605, %v3604
      %v3639 = vpack.c.b16 %v3607, %v3606
      %v3640 = vpack.c.b16 %v3609, %v3608
      %v3641 = vpack.c.b16 %v3611, %v3610
      %v3642 = vpack.c.b16 %v3613, %v3612
      %v3643 = vpack.c.b16 %v3615, %v3614
      %v3644 = vpack.c.b16 %v3617, %v3616
      %v3645 = vpack.c.b16 %v3619, %v3618
      %v3646 = vpack.c.b16 %v3621, %v3620
      %v3647 = vpack.c.b16 %v3623, %v3622
      %v3648 = vpack.c.b16 %v3625, %v3624
      %v3649 = vpack.c.b16 %v3627, %v3626
      %v3650 = vpack.c.b16 %v3629, %v3628
      %v3651 = vpack.c.b16 %v3631, %v3630
      %v3673 = vsel %vm569, %v3429, 0
      %v3676 = vsel %vm569, %v3435, 0
      %v3679 = vsel %vm569, %v3441, 0
      %v3682 = vsel %vm569, %v3447, 0
      %v3685 = vsel %vm569, %v3453, 0
      %v3688 = vsel %vm569, %v3459, 0
      %v3691 = vsel %vm569, %v3465, 0
      %v3694 = vsel %vm569, %v3471, 0
      %v3697 = vsel %vm569, %v3477, 0
      %v3700 = vsel %vm569, %v3483, 0
      %v3703 = vsel %vm569, %v3489, 0
      %v3706 = vsel %vm569, %v3495, 0
      %v3709 = vsel %vm569, %v3501, 0
      %v3712 = vsel %vm569, %v3507, 0
      %v3715 = vsel %vm569, %v3513, 0
      %v3718 = vsel %vm569, %v3519, 0
      %3720 = vmatprep.subr.bf16.mxu0 0
      %3721 = vmatpush1.bf16.msra.mxu0 %v3632
      %3722 = vmatprep.subr.bf16.mxu0 0
      %3723 = vmatpush1.bf16.msra.mxu0 %v3633
      %3724 = vmatprep.subr.bf16.mxu0 0
      %3725 = vmatpush1.bf16.msra.mxu0 %v3634
      %3726 = vmatprep.subr.bf16.mxu0 0
      %3727 = vmatpush1.bf16.msra.mxu0 %v3635
      %3728 = vmatprep.subr.bf16.mxu0 0
      %3729 = vmatpush1.bf16.msra.mxu0 %v3636
      %3730 = vmatprep.subr.bf16.mxu0 0
      %3731 = vmatpush1.bf16.msra.mxu0 %v3637
      %3732 = vmatprep.subr.bf16.mxu0 0
      %3733 = vmatpush1.bf16.msra.mxu0 %v3638
      %3734 = vmatprep.subr.bf16.mxu0 0
      %3735 = vmatpush1.bf16.msra.mxu0 %v3639
      %3736 = vmatprep.subr.bf16.mxu0 0
      %3737 = vmatpush1.bf16.msra.mxu0 %v3640
      %3738 = vmatprep.subr.bf16.mxu0 0
      %3739 = vmatpush1.bf16.msra.mxu0 %v3641
      %3740 = vmatprep.subr.bf16.mxu0 0
      %3741 = vmatpush1.bf16.msra.mxu0 %v3642
      %3742 = vmatprep.subr.bf16.mxu0 0
      %3743 = vmatpush1.bf16.msra.mxu0 %v3643
      %3744 = vmatprep.subr.bf16.mxu0 0
      %3745 = vmatpush1.bf16.msra.mxu0 %v3644
      %3746 = vmatprep.subr.bf16.mxu0 0
      %3747 = vmatpush1.bf16.msra.mxu0 %v3645
      %3748 = vmatprep.subr.bf16.mxu0 0
      %3749 = vmatpush1.bf16.msra.mxu0 %v3646
      %3750 = vmatprep.subr.bf16.mxu0 0
      %3751 = vmatpush1.bf16.msra.mxu0 %v3647
      %3752 = vmatprep.mubr.bf16.mxu0 %v3426
      %3753 = vmatmul.mubr.bf16.gmra.mrb[0].mxu0 %v3423
      %v3754 = vpop.f32.mrb[0].mxu0
      %v3755 = vadd.f32 %v3385, %v3754
      %v3756 = vpop.f32.mrb[0].mxu0
      %v3757 = vpop.f32.mrb[0].mxu0
      %v3758 = vadd.f32 %v3385, %v3757
      %v3759 = vpop.f32.mrb[0].mxu0
      %3760 = vmatprep.mubr.bf16.mxu0 %v3433
      %3761 = vmatmul.mubr.bf16.gmra.mrb[0].mxu0 %v3431
      %v3762 = vpop.f32.mrb[0].mxu0
      %v3763 = vadd.f32 %v3385, %v3762
      %v3764 = vpop.f32.mrb[0].mxu0
      %v3765 = vpop.f32.mrb[0].mxu0
      %v3766 = vadd.f32 %v3385, %v3765
      %v3767 = vpop.f32.mrb[0].mxu0
      %3768 = vmatprep.mubr.bf16.mxu0 %v3439
      %3769 = vmatmul.mubr.bf16.gmra.mrb[0].mxu0 %v3437
      %v3770 = vpop.f32.mrb[0].mxu0
      %v3771 = vadd.f32 %v3385, %v3770
      %v3772 = vpop.f32.mrb[0].mxu0
      %v3773 = vpop.f32.mrb[0].mxu0
      %v3774 = vadd.f32 %v3385, %v3773
      %v3775 = vpop.f32.mrb[0].mxu0
      %3776 = vmatprep.mubr.bf16.mxu0 %v3445
      %3777 = vmatmul.mubr.bf16.gmra.mrb[0].mxu0 %v3443
      %v3778 = vpop.f32.mrb[0].mxu0
      %v3779 = vadd.f32 %v3385, %v3778
      %v3780 = vpop.f32.mrb[0].mxu0
      %v3781 = vpop.f32.mrb[0].mxu0
      %v3782 = vadd.f32 %v3385, %v3781
      %v3783 = vpop.f32.mrb[0].mxu0
      %3784 = vmatprep.mubr.bf16.mxu0 %v3451
      %3785 = vmatmul.mubr.bf16.gmra.mrb[0].mxu0 %v3449
      %v3786 = vpop.f32.mrb[0].mxu0
      %v3787 = vadd.f32 %v3385, %v3786
      %v3788 = vpop.f32.mrb[0].mxu0
      %v3789 = vpop.f32.mrb[0].mxu0
      %v3790 = vadd.f32 %v3385, %v3789
      %v3791 = vpop.f32.mrb[0].mxu0
      %3792 = vmatprep.mubr.bf16.mxu0 %v3457
      %3793 = vmatmul.mubr.bf16.gmra.mrb[0].mxu0 %v3455
      %v3794 = vpop.f32.mrb[0].mxu0
      %v3795 = vadd.f32 %v3385, %v3794
      %v3796 = vpop.f32.mrb[0].mxu0
      %v3797 = vpop.f32.mrb[0].mxu0
      %v3798 = vadd.f32 %v3385, %v3797
      %v3799 = vpop.f32.mrb[0].mxu0
      %3800 = vmatprep.mubr.bf16.mxu0 %v3463
      %3801 = vmatmul.mubr.bf16.gmra.mrb[0].mxu0 %v3461
      %v3802 = vpop.f32.mrb[0].mxu0
      %v3803 = vadd.f32 %v3385, %v3802
      %v3804 = vpop.f32.mrb[0].mxu0
      %v3805 = vpop.f32.mrb[0].mxu0
      %v3806 = vadd.f32 %v3385, %v3805
      %v3807 = vpop.f32.mrb[0].mxu0
      %3808 = vmatprep.mubr.bf16.mxu0 %v3469
      %3809 = vmatmul.mubr.bf16.gmra.mrb[0].mxu0 %v3467
      %v3810 = vpop.f32.mrb[0].mxu0
      %v3811 = vadd.f32 %v3385, %v3810
      %v3812 = vpop.f32.mrb[0].mxu0
      %v3813 = vpop.f32.mrb[0].mxu0
      %v3814 = vadd.f32 %v3385, %v3813
      %v3815 = vpop.f32.mrb[0].mxu0
      %3816 = vmatprep.mubr.bf16.mxu0 %v3475
      %3817 = vmatmul.mubr.bf16.gmra.mrb[0].mxu0 %v3473
      %v3818 = vpop.f32.mrb[0].mxu0
      %v3819 = vadd.f32 %v3385, %v3818
      %v3820 = vpop.f32.mrb[0].mxu0
      %v3821 = vpop.f32.mrb[0].mxu0
      %v3822 = vadd.f32 %v3385, %v3821
      %v3823 = vpop.f32.mrb[0].mxu0
      %3824 = vmatprep.mubr.bf16.mxu0 %v3481
      %3825 = vmatmul.mubr.bf16.gmra.mrb[0].mxu0 %v3479
      %v3826 = vpop.f32.mrb[0].mxu0
      %v3827 = vadd.f32 %v3385, %v3826
      %v3828 = vpop.f32.mrb[0].mxu0
      %v3829 = vpop.f32.mrb[0].mxu0
      %v3830 = vadd.f32 %v3385, %v3829
      %v3831 = vpop.f32.mrb[0].mxu0
      %3832 = vmatprep.mubr.bf16.mxu0 %v3487
      %3833 = vmatmul.mubr.bf16.gmra.mrb[0].mxu0 %v3485
      %v3834 = vpop.f32.mrb[0].mxu0
      %v3835 = vadd.f32 %v3385, %v3834
      %v3836 = vpop.f32.mrb[0].mxu0
      %v3837 = vpop.f32.mrb[0].mxu0
      %v3838 = vadd.f32 %v3385, %v3837
      %v3839 = vpop.f32.mrb[0].mxu0
      %3840 = vmatprep.mubr.bf16.mxu0 %v3493
      %3841 = vmatmul.mubr.bf16.gmra.mrb[0].mxu0 %v3491
      %v3842 = vpop.f32.mrb[0].mxu0
      %v3843 = vadd.f32 %v3385, %v3842
      %v3844 = vpop.f32.mrb[0].mxu0
      %v3845 = vpop.f32.mrb[0].mxu0
      %v3846 = vadd.f32 %v3385, %v3845
      %v3847 = vpop.f32.mrb[0].mxu0
      %3848 = vmatprep.mubr.bf16.mxu0 %v3499
      %3849 = vmatmul.mubr.bf16.gmra.mrb[0].mxu0 %v3497
      %v3850 = vpop.f32.mrb[0].mxu0
      %v3851 = vadd.f32 %v3385, %v3850
      %v3852 = vpop.f32.mrb[0].mxu0
      %v3853 = vpop.f32.mrb[0].mxu0
      %v3854 = vadd.f32 %v3385, %v3853
      %v3855 = vpop.f32.mrb[0].mxu0
      %3856 = vmatprep.mubr.bf16.mxu0 %v3505
      %3857 = vmatmul.mubr.bf16.gmra.mrb[0].mxu0 %v3503
      %v3858 = vpop.f32.mrb[0].mxu0
      %v3859 = vadd.f32 %v3385, %v3858
      %v3860 = vpop.f32.mrb[0].mxu0
      %v3861 = vpop.f32.mrb[0].mxu0
      %v3862 = vadd.f32 %v3385, %v3861
      %v3863 = vpop.f32.mrb[0].mxu0
      %3864 = vmatprep.mubr.bf16.mxu0 %v3511
      %3865 = vmatmul.mubr.bf16.gmra.mrb[0].mxu0 %v3509
      %v3866 = vpop.f32.mrb[0].mxu0
      %v3867 = vadd.f32 %v3385, %v3866
      %v3868 = vpop.f32.mrb[0].mxu0
      %v3869 = vpop.f32.mrb[0].mxu0
      %v3870 = vadd.f32 %v3385, %v3869
      %v3871 = vpop.f32.mrb[0].mxu0
      %3872 = vmatprep.mubr.bf16.mxu0 %v3517
      %3873 = vmatmul.mubr.bf16.gmra.mrb[0].mxu0 %v3515
      %v3874 = vpop.f32.mrb[0].mxu0
      %v3875 = vadd.f32 %v3385, %v3874
      %v3876 = vpop.f32.mrb[0].mxu0
      %v3877 = vpop.f32.mrb[0].mxu0
      %v3878 = vadd.f32 %v3385, %v3877
      %v3879 = vpop.f32.mrb[0].mxu0
      %3880 = vdwg.mxu0
      %3881 = vmatprep.subr.bf16.mxu0 0
      %3882 = vmatpush1.bf16.msra.mxu0 %v3648
      %3883 = vmatprep.subr.bf16.mxu0 0
      %3884 = vmatpush1.bf16.msra.mxu0 %v3649
      %3885 = vmatprep.subr.bf16.mxu0 0
      %3886 = vmatpush1.bf16.msra.mxu0 %v3650
      %3887 = vmatprep.subr.bf16.mxu0 0
      %3888 = vmatpush1.bf16.msra.mxu0 %v3651
      %3889 = vmatprep.subr.bf16.mxu0 0
      %3890 = vmatpush1.bf16.msra.mxu0 0
      %3891 = vmatprep.subr.bf16.mxu0 0
      %3892 = vmatpush1.bf16.msra.mxu0 0
      %3893 = vmatprep.subr.bf16.mxu0 0
      %3894 = vmatpush1.bf16.msra.mxu0 0
      %3895 = vmatprep.subr.bf16.mxu0 0
      %3896 = vmatpush1.bf16.msra.mxu0 0
      %3897 = vmatprep.subr.bf16.mxu0 0
      %3898 = vmatpush1.bf16.msra.mxu0 0
      %3899 = vmatprep.subr.bf16.mxu0 0
      %3900 = vmatpush1.bf16.msra.mxu0 0
      %3901 = vmatprep.subr.bf16.mxu0 0
      %3902 = vmatpush1.bf16.msra.mxu0 0
      %3903 = vmatprep.subr.bf16.mxu0 0
      %3904 = vmatpush1.bf16.msra.mxu0 0
      %3905 = vmatprep.subr.bf16.mxu0 0
      %3906 = vmatpush1.bf16.msra.mxu0 0
      %3907 = vmatprep.subr.bf16.mxu0 0
      %3908 = vmatpush1.bf16.msra.mxu0 0
      %3909 = vmatprep.subr.bf16.mxu0 0
      %3910 = vmatpush1.bf16.msra.mxu0 0
      %3911 = vmatprep.subr.bf16.mxu0 0
      %3912 = vmatpush1.bf16.msra.mxu0 0
      %3913 = vmatprep.mubr.bf16.mxu0 0
      %3914 = vmatmul.mubr.bf16.gmra.mrb[0].mxu0 %v3673
      %v3915 = vpop.f32.mrb[0].mxu0
      %v3916 = vadd.f32 %v3755, %v3915
      %v3917 = vpop.f32.mrb[0].mxu0
      %v3918 = vpop.f32.mrb[0].mxu0
      %v3919 = vadd.f32 %v3758, %v3918
      %v3920 = vpop.f32.mrb[0].mxu0
      %3921 = vmatprep.mubr.bf16.mxu0 0
      %3922 = vmatmul.mubr.bf16.gmra.mrb[0].mxu0 %v3676
      %v3923 = vpop.f32.mrb[0].mxu0
      %v3924 = vadd.f32 %v3763, %v3923
      %v3925 = vpop.f32.mrb[0].mxu0
      %v3926 = vpop.f32.mrb[0].mxu0
      %v3927 = vadd.f32 %v3766, %v3926
      %v3928 = vpop.f32.mrb[0].mxu0
      %3929 = vmatprep.mubr.bf16.mxu0 0
      %3930 = vmatmul.mubr.bf16.gmra.mrb[0].mxu0 %v3679
      %v3931 = vpop.f32.mrb[0].mxu0
      %v3932 = vadd.f32 %v3771, %v3931
      %v3933 = vpop.f32.mrb[0].mxu0
      %v3934 = vpop.f32.mrb[0].mxu0
      %v3935 = vadd.f32 %v3774, %v3934
      %v3936 = vpop.f32.mrb[0].mxu0
      %3937 = vmatprep.mubr.bf16.mxu0 0
      %3938 = vmatmul.mubr.bf16.gmra.mrb[0].mxu0 %v3682
      %v3939 = vpop.f32.mrb[0].mxu0
      %v3940 = vadd.f32 %v3779, %v3939
      %v3941 = vpop.f32.mrb[0].mxu0
      %v3942 = vpop.f32.mrb[0].mxu0
      %v3943 = vadd.f32 %v3782, %v3942
      %v3944 = vpop.f32.mrb[0].mxu0
      %3945 = vmatprep.mubr.bf16.mxu0 0
      %3946 = vmatmul.mubr.bf16.gmra.mrb[0].mxu0 %v3685
      %v3947 = vpop.f32.mrb[0].mxu0
      %v3948 = vadd.f32 %v3787, %v3947
      %v3949 = vpop.f32.mrb[0].mxu0
      %v3950 = vpop.f32.mrb[0].mxu0
      %v3951 = vadd.f32 %v3790, %v3950
      %v3952 = vpop.f32.mrb[0].mxu0
      %3953 = vmatprep.mubr.bf16.mxu0 0
      %3954 = vmatmul.mubr.bf16.gmra.mrb[0].mxu0 %v3688
      %v3955 = vpop.f32.mrb[0].mxu0
      %v3956 = vadd.f32 %v3795, %v3955
      %v3957 = vpop.f32.mrb[0].mxu0
      %v3958 = vpop.f32.mrb[0].mxu0
      %v3959 = vadd.f32 %v3798, %v3958
      %v3960 = vpop.f32.mrb[0].mxu0
      %3961 = vmatprep.mubr.bf16.mxu0 0
      %3962 = vmatmul.mubr.bf16.gmra.mrb[0].mxu0 %v3691
      %v3963 = vpop.f32.mrb[0].mxu0
      %v3964 = vadd.f32 %v3803, %v3963
      %v3965 = vpop.f32.mrb[0].mxu0
      %v3966 = vpop.f32.mrb[0].mxu0
      %v3967 = vadd.f32 %v3806, %v3966
      %v3968 = vpop.f32.mrb[0].mxu0
      %3969 = vmatprep.mubr.bf16.mxu0 0
      %3970 = vmatmul.mubr.bf16.gmra.mrb[0].mxu0 %v3694
      %v3971 = vpop.f32.mrb[0].mxu0
      %v3972 = vadd.f32 %v3811, %v3971
      %v3973 = vpop.f32.mrb[0].mxu0
      %v3974 = vpop.f32.mrb[0].mxu0
      %v3975 = vadd.f32 %v3814, %v3974
      %v3976 = vpop.f32.mrb[0].mxu0
      %3977 = vmatprep.mubr.bf16.mxu0 0
      %3978 = vmatmul.mubr.bf16.gmra.mrb[0].mxu0 %v3697
      %v3979 = vpop.f32.mrb[0].mxu0
      %v3980 = vadd.f32 %v3819, %v3979
      %v3981 = vpop.f32.mrb[0].mxu0
      %v3982 = vpop.f32.mrb[0].mxu0
      %v3983 = vadd.f32 %v3822, %v3982
      %v3984 = vpop.f32.mrb[0].mxu0
      %3985 = vmatprep.mubr.bf16.mxu0 0
      %3986 = vmatmul.mubr.bf16.gmra.mrb[0].mxu0 %v3700
      %v3987 = vpop.f32.mrb[0].mxu0
      %v3988 = vadd.f32 %v3827, %v3987
      %v3989 = vpop.f32.mrb[0].mxu0
      %v3990 = vpop.f32.mrb[0].mxu0
      %v3991 = vadd.f32 %v3830, %v3990
      %v3992 = vpop.f32.mrb[0].mxu0
      %3993 = vmatprep.mubr.bf16.mxu0 0
      %3994 = vmatmul.mubr.bf16.gmra.mrb[0].mxu0 %v3703
      %v3995 = vpop.f32.mrb[0].mxu0
      %v3996 = vadd.f32 %v3835, %v3995
      %v3997 = vpop.f32.mrb[0].mxu0
      %v3998 = vpop.f32.mrb[0].mxu0
      %v3999 = vadd.f32 %v3838, %v3998
      %v4000 = vpop.f32.mrb[0].mxu0
      %4001 = vmatprep.mubr.bf16.mxu0 0
      %4002 = vmatmul.mubr.bf16.gmra.mrb[0].mxu0 %v3706
      %v4003 = vpop.f32.mrb[0].mxu0
      %v4004 = vadd.f32 %v3843, %v4003
      %v4005 = vpop.f32.mrb[0].mxu0
      %v4006 = vpop.f32.mrb[0].mxu0
      %v4007 = vadd.f32 %v3846, %v4006
      %v4008 = vpop.f32.mrb[0].mxu0
      %4009 = vmatprep.mubr.bf16.mxu0 0
      %4010 = vmatmul.mubr.bf16.gmra.mrb[0].mxu0 %v3709
      %v4011 = vpop.f32.mrb[0].mxu0
      %v4012 = vadd.f32 %v3851, %v4011
      %v4013 = vpop.f32.mrb[0].mxu0
      %v4014 = vpop.f32.mrb[0].mxu0
      %v4015 = vadd.f32 %v3854, %v4014
      %v4016 = vpop.f32.mrb[0].mxu0
      %4017 = vmatprep.mubr.bf16.mxu0 0
      %4018 = vmatmul.mubr.bf16.gmra.mrb[0].mxu0 %v3712
      %v4019 = vpop.f32.mrb[0].mxu0
      %v4020 = vadd.f32 %v3859, %v4019
      %v4021 = vpop.f32.mrb[0].mxu0
      %v4022 = vpop.f32.mrb[0].mxu0
      %v4023 = vadd.f32 %v3862, %v4022
      %v4024 = vpop.f32.mrb[0].mxu0
      %4025 = vmatprep.mubr.bf16.mxu0 0
      %4026 = vmatmul.mubr.bf16.gmra.mrb[0].mxu0 %v3715
      %v4027 = vpop.f32.mrb[0].mxu0
      %v4028 = vadd.f32 %v3867, %v4027
      %v4029 = vpop.f32.mrb[0].mxu0
      %v4030 = vpop.f32.mrb[0].mxu0
      %v4031 = vadd.f32 %v3870, %v4030
      %v4032 = vpop.f32.mrb[0].mxu0
      %4033 = vmatprep.mubr.bf16.mxu0 0
      %4034 = vmatmul.mubr.bf16.gmra.mrb[0].mxu0 %v3718
      %v4035 = vpop.f32.mrb[0].mxu0
      %v4036 = vadd.f32 %v3875, %v4035
      %v4037 = vpop.f32.mrb[0].mxu0
      %v4038 = vpop.f32.mrb[0].mxu0
      %v4039 = vadd.f32 %v3878, %v4038
      %v4040 = vpop.f32.mrb[0].mxu0
      %4041 = vdwg.mxu0
      %v4042 = vmax.f32 %v3916, 0.0
      %v4043 = vmax.f32 %v3919, 0.0
      %v4044 = vmax.f32 %v3924, 0.0
      %v4045 = vmax.f32 %v3927, 0.0
      %v4046 = vmax.f32 %v3932, 0.0
      %v4047 = vmax.f32 %v3935, 0.0
      %v4048 = vmax.f32 %v3940, 0.0
      %v4049 = vmax.f32 %v3943, 0.0
      %v4050 = vmax.f32 %v3948, 0.0
      %v4051 = vmax.f32 %v3951, 0.0
      %v4052 = vmax.f32 %v3956, 0.0
      %v4053 = vmax.f32 %v3959, 0.0
      %v4054 = vmax.f32 %v3964, 0.0
      %v4055 = vmax.f32 %v3967, 0.0
      %v4056 = vmax.f32 %v3972, 0.0
      %v4057 = vmax.f32 %v3975, 0.0
      %v4058 = vmax.f32 %v3980, 0.0
      %v4059 = vmax.f32 %v3983, 0.0
      %v4060 = vmax.f32 %v3988, 0.0
      %v4061 = vmax.f32 %v3991, 0.0
      %v4062 = vmax.f32 %v3996, 0.0
      %v4063 = vmax.f32 %v3999, 0.0
      %v4064 = vmax.f32 %v4004, 0.0
      %v4065 = vmax.f32 %v4007, 0.0
      %v4066 = vmax.f32 %v4012, 0.0
      %v4067 = vmax.f32 %v4015, 0.0
      %v4068 = vmax.f32 %v4020, 0.0
      %v4069 = vmax.f32 %v4023, 0.0
      %v4070 = vmax.f32 %v4028, 0.0
      %v4071 = vmax.f32 %v4031, 0.0
      %v4072 = vmax.f32 %v4036, 0.0
      %v4073 = vmax.f32 %v4039, 0.0
      %4074 = vst.msk [vmem:[#allocation3 + $0x108] sm:$0xff] %vm569, %v4042
      %4075 = vst.msk [vmem:[#allocation3 + $0x110] sm:$0xff] %vm569, %v4043
      %4076 = vst.msk [vmem:[#allocation3 + $0x118] sm:$0xff] %vm569, %v4044
      %4077 = vst.msk [vmem:[#allocation3 + $0x120] sm:$0xff] %vm569, %v4045
      %4078 = vst.msk [vmem:[#allocation3 + $0x128] sm:$0xff] %vm569, %v4046
      %4079 = vst.msk [vmem:[#allocation3 + $0x130] sm:$0xff] %vm569, %v4047
      %4080 = vst.msk [vmem:[#allocation3 + $0x138] sm:$0xff] %vm569, %v4048
      %4081 = vst.msk [vmem:[#allocation3 + $0x140] sm:$0xff] %vm569, %v4049
      %4082 = vst.msk [vmem:[#allocation3 + $0x148] sm:$0xff] %vm569, %v4050
      %4083 = vst.msk [vmem:[#allocation3 + $0x150] sm:$0xff] %vm569, %v4051
      %4084 = vst.msk [vmem:[#allocation3 + $0x158] sm:$0xff] %vm569, %v4052
      %4085 = vst.msk [vmem:[#allocation3 + $0x160] sm:$0xff] %vm569, %v4053
      %4086 = vst.msk [vmem:[#allocation3 + $0x168] sm:$0xff] %vm569, %v4054
      %4087 = vst.msk [vmem:[#allocation3 + $0x170] sm:$0xff] %vm569, %v4055
      %4088 = vst.msk [vmem:[#allocation3 + $0x178] sm:$0xff] %vm569, %v4056
      %4089 = vst.msk [vmem:[#allocation3 + $0x180] sm:$0xff] %vm569, %v4057
      %4090 = vst.msk [vmem:[#allocation3 + $0x188] sm:$0xff] %vm569, %v4058
      %4091 = vst.msk [vmem:[#allocation3 + $0x190] sm:$0xff] %vm569, %v4059
      %4092 = vst.msk [vmem:[#allocation3 + $0x198] sm:$0xff] %vm569, %v4060
      %4093 = vst.msk [vmem:[#allocation3 + $0x1a0] sm:$0xff] %vm569, %v4061
      %4094 = vst.msk [vmem:[#allocation3 + $0x1a8] sm:$0xff] %vm569, %v4062
      %4095 = vst.msk [vmem:[#allocation3 + $0x1b0] sm:$0xff] %vm569, %v4063
      %4096 = vst.msk [vmem:[#allocation3 + $0x1b8] sm:$0xff] %vm569, %v4064
      %4097 = vst.msk [vmem:[#allocation3 + $0x1c0] sm:$0xff] %vm569, %v4065
      %4098 = vst.msk [vmem:[#allocation3 + $0x1c8] sm:$0xff] %vm569, %v4066
      %4099 = vst.msk [vmem:[#allocation3 + $0x1d0] sm:$0xff] %vm569, %v4067
      %4100 = vst.msk [vmem:[#allocation3 + $0x1d8] sm:$0xff] %vm569, %v4068
      %4101 = vst.msk [vmem:[#allocation3 + $0x1e0] sm:$0xff] %vm569, %v4069
      %4102 = vst.msk [vmem:[#allocation3 + $0x1e8] sm:$0xff] %vm569, %v4070
      %4103 = vst.msk [vmem:[#allocation3 + $0x1f0] sm:$0xff] %vm569, %v4071
      %4104 = vst.msk [vmem:[#allocation3 + $0x1f8] sm:$0xff] %vm569, %v4072
      %4105 = vst.msk [vmem:[#allocation3 + $0x200] sm:$0x7f] %vm1397, %v4073
      %v4106 = vld [vmem:[#allocation3] sm:$0xff]
      %v4107 = vld [vmem:[#allocation3 + $0x8] sm:$0xff]
      %v4108 = vld [vmem:[#allocation3 + $0x10] sm:$0xff]
      %v4109 = vld [vmem:[#allocation3 + $0x18] sm:$0xff]
      %v4110 = vld [vmem:[#allocation3 + $0x20] sm:$0xff]
      %v4111 = vld [vmem:[#allocation3 + $0x28] sm:$0xff]
      %v4112 = vld [vmem:[#allocation3 + $0x30] sm:$0xff]
      %v4113 = vld [vmem:[#allocation3 + $0x38] sm:$0xff]
      %v4114 = vld [vmem:[#allocation3 + $0x40] sm:$0xff]
      %v4115 = vld [vmem:[#allocation3 + $0x48] sm:$0xff]
      %v4116 = vld [vmem:[#allocation3 + $0x50] sm:$0xff]
      %v4117 = vld [vmem:[#allocation3 + $0x58] sm:$0xff]
      %v4118 = vld [vmem:[#allocation3 + $0x60] sm:$0xff]
      %v4119 = vld [vmem:[#allocation3 + $0x68] sm:$0xff]
      %v4120 = vld [vmem:[#allocation3 + $0x70] sm:$0xff]
      %v4121 = vld [vmem:[#allocation3 + $0x78] sm:$0xff]
      %v4122 = vld [vmem:[#allocation3 + $0x80] sm:$0xff]
      %v4123 = vld [vmem:[#allocation3 + $0x88] sm:$0xff]
      %v4124 = vld [vmem:[#allocation3 + $0x90] sm:$0xff]
      %v4125 = vld [vmem:[#allocation3 + $0x98] sm:$0xff]
      %v4126 = vld [vmem:[#allocation3 + $0xa0] sm:$0xff]
      %v4127 = vld [vmem:[#allocation3 + $0xa8] sm:$0xff]
      %v4128 = vld [vmem:[#allocation3 + $0xb0] sm:$0xff]
      %v4129 = vld [vmem:[#allocation3 + $0xb8] sm:$0xff]
      %v4130 = vld [vmem:[#allocation3 + $0xc0] sm:$0xff]
      %v4131 = vld [vmem:[#allocation3 + $0xc8] sm:$0xff]
      %v4132 = vld [vmem:[#allocation3 + $0xd0] sm:$0xff]
      %v4133 = vld [vmem:[#allocation3 + $0xd8] sm:$0xff]
      %v4134 = vld [vmem:[#allocation3 + $0xe0] sm:$0xff]
      %v4135 = vld [vmem:[#allocation3 + $0xe8] sm:$0xff]
      %v4136 = vld [vmem:[#allocation3 + $0xf0] sm:$0xff]
      %v4137 = vld [vmem:[#allocation3 + $0xf8] sm:$0xff]
      %v4138 = vld [vmem:[#allocation3 + $0x100] sm:$0xff]
      %v4139 = vld [vmem:[#allocation3 + $0x108] sm:$0xff]
      %v4140 = vpack.c.bf16 %v4107, %v4106
      %v4141 = vpack.c.bf16 %v4109, %v4108
      %v4142 = vpack.c.bf16 %v4111, %v4110
      %v4143 = vpack.c.bf16 %v4113, %v4112
      %v4144 = vpack.c.bf16 %v4115, %v4114
      %v4145 = vpack.c.bf16 %v4117, %v4116
      %v4146 = vpack.c.bf16 %v4119, %v4118
      %v4147 = vpack.c.bf16 %v4121, %v4120
      %v4148 = vpack.c.bf16 %v4123, %v4122
      %v4149 = vpack.c.bf16 %v4125, %v4124
      %v4150 = vpack.c.bf16 %v4127, %v4126
      %v4151 = vpack.c.bf16 %v4129, %v4128
      %v4152 = vpack.c.bf16 %v4131, %v4130
      %v4153 = vpack.c.bf16 %v4133, %v4132
      %v4154 = vpack.c.bf16 %v4135, %v4134
      %v4155 = vpack.c.bf16 %v4137, %v4136
      %v4156 = vpack.c.bf16 %v4138, %v4138
      %v4157 = vpack.c.bf16 %v4108, %v4107
      %v4158 = vpack.c.bf16 %v4110, %v4109
      %v4159 = vpack.c.bf16 %v4112, %v4111
      %v4160 = vpack.c.bf16 %v4114, %v4113
      %v4161 = vpack.c.bf16 %v4116, %v4115
      %v4162 = vpack.c.bf16 %v4118, %v4117
      %v4163 = vpack.c.bf16 %v4120, %v4119
      %v4164 = vpack.c.bf16 %v4122, %v4121
      %v4165 = vpack.c.bf16 %v4124, %v4123
      %v4166 = vpack.c.bf16 %v4126, %v4125
      %v4167 = vpack.c.bf16 %v4128, %v4127
      %v4168 = vpack.c.bf16 %v4130, %v4129
      %v4169 = vpack.c.bf16 %v4132, %v4131
      %v4170 = vpack.c.bf16 %v4134, %v4133
      %v4171 = vpack.c.bf16 %v4136, %v4135
      %v4172 = vpack.c.bf16 %v4138, %v4137
      %v4173 = vpack.c.bf16 %v4139, %v4139
      %v4175 = vshrl.u32 %v4140, 16
      %v4177 = vshll.u32 %v4140, 16
      %v4179 = vrot.slane %v4177, 1
      %v4180 = vor.u32 %v4175, %v4179
      %v4182 = vshll.u32 %v4141, 16
      %v4184 = vrot.slane %v4182, 1
      %v4185 = vsel %vm1467, %v4180, %v4184
      %v4186 = vshrl.u32 %v4141, 16
      %v4188 = vor.u32 %v4186, %v4184
      %v4190 = vshll.u32 %v4142, 16
      %v4192 = vrot.slane %v4190, 1
      %v4193 = vsel %vm1467, %v4188, %v4192
      %v4194 = vshrl.u32 %v4142, 16
      %v4196 = vor.u32 %v4194, %v4192
      %v4198 = vshll.u32 %v4143, 16
      %v4200 = vrot.slane %v4198, 1
      %v4201 = vsel %vm1467, %v4196, %v4200
      %v4202 = vshrl.u32 %v4143, 16
      %v4204 = vor.u32 %v4202, %v4200
      %v4206 = vshll.u32 %v4144, 16
      %v4208 = vrot.slane %v4206, 1
      %v4209 = vsel %vm1467, %v4204, %v4208
      %v4210 = vshrl.u32 %v4144, 16
      %v4212 = vor.u32 %v4210, %v4208
      %v4214 = vshll.u32 %v4145, 16
      %v4216 = vrot.slane %v4214, 1
      %v4217 = vsel %vm1467, %v4212, %v4216
      %v4218 = vshrl.u32 %v4145, 16
      %v4220 = vor.u32 %v4218, %v4216
      %v4222 = vshll.u32 %v4146, 16
      %v4224 = vrot.slane %v4222, 1
      %v4225 = vsel %vm1467, %v4220, %v4224
      %v4226 = vshrl.u32 %v4146, 16
      %v4228 = vor.u32 %v4226, %v4224
      %v4230 = vshll.u32 %v4147, 16
      %v4232 = vrot.slane %v4230, 1
      %v4233 = vsel %vm1467, %v4228, %v4232
      %v4234 = vshrl.u32 %v4147, 16
      %v4236 = vor.u32 %v4234, %v4232
      %v4238 = vshll.u32 %v4148, 16
      %v4240 = vrot.slane %v4238, 1
      %v4241 = vsel %vm1467, %v4236, %v4240
      %v4242 = vshrl.u32 %v4148, 16
      %v4244 = vor.u32 %v4242, %v4240
      %v4246 = vshll.u32 %v4149, 16
      %v4248 = vrot.slane %v4246, 1
      %v4249 = vsel %vm1467, %v4244, %v4248
      %v4250 = vshrl.u32 %v4149, 16
      %v4252 = vor.u32 %v4250, %v4248
      %v4254 = vshll.u32 %v4150, 16
      %v4256 = vrot.slane %v4254, 1
      %v4257 = vsel %vm1467, %v4252, %v4256
      %v4258 = vshrl.u32 %v4150, 16
      %v4260 = vor.u32 %v4258, %v4256
      %v4262 = vshll.u32 %v4151, 16
      %v4264 = vrot.slane %v4262, 1
      %v4265 = vsel %vm1467, %v4260, %v4264
      %v4266 = vshrl.u32 %v4151, 16
      %v4268 = vor.u32 %v4266, %v4264
      %v4270 = vshll.u32 %v4152, 16
      %v4272 = vrot.slane %v4270, 1
      %v4273 = vsel %vm1467, %v4268, %v4272
      %v4274 = vshrl.u32 %v4152, 16
      %v4276 = vor.u32 %v4274, %v4272
      %v4278 = vshll.u32 %v4153, 16
      %v4280 = vrot.slane %v4278, 1
      %v4281 = vsel %vm1467, %v4276, %v4280
      %v4282 = vshrl.u32 %v4153, 16
      %v4284 = vor.u32 %v4282, %v4280
      %v4286 = vshll.u32 %v4154, 16
      %v4288 = vrot.slane %v4286, 1
      %v4289 = vsel %vm1467, %v4284, %v4288
      %v4290 = vshrl.u32 %v4154, 16
      %v4292 = vor.u32 %v4290, %v4288
      %v4294 = vshll.u32 %v4155, 16
      %v4296 = vrot.slane %v4294, 1
      %v4297 = vsel %vm1467, %v4292, %v4296
      %v4298 = vshrl.u32 %v4155, 16
      %v4300 = vor.u32 %v4298, %v4296
      %v4302 = vshll.u32 %v4156, 16
      %v4304 = vrot.slane %v4302, 1
      %v4305 = vsel %vm1467, %v4300, %v4304
      %v4306 = vshrl.u32 %v4156, 16
      %v4308 = vor.u32 %v4306, %v4304
      %4309 = vrot.lane.b32.xlu0 %v4185, 64
      %v4310 = vpop.permute.xlu0 %4309
      %4311 = vrot.lane.b32.xlu0 %v4193, 64
      %v4312 = vpop.permute.xlu0 %4311
      %4313 = vrot.lane.b32.xlu0 %v4201, 64
      %v4314 = vpop.permute.xlu0 %4313
      %4315 = vrot.lane.b32.xlu0 %v4209, 64
      %v4316 = vpop.permute.xlu0 %4315
      %4317 = vrot.lane.b32.xlu0 %v4217, 64
      %v4318 = vpop.permute.xlu0 %4317
      %4319 = vrot.lane.b32.xlu0 %v4225, 64
      %v4320 = vpop.permute.xlu0 %4319
      %4321 = vrot.lane.b32.xlu0 %v4233, 64
      %v4322 = vpop.permute.xlu0 %4321
      %4323 = vrot.lane.b32.xlu0 %v4241, 64
      %v4324 = vpop.permute.xlu0 %4323
      %4325 = vrot.lane.b32.xlu0 %v4249, 64
      %v4326 = vpop.permute.xlu0 %4325
      %4327 = vrot.lane.b32.xlu0 %v4257, 64
      %v4328 = vpop.permute.xlu0 %4327
      %4329 = vrot.lane.b32.xlu0 %v4265, 64
      %v4330 = vpop.permute.xlu0 %4329
      %4331 = vrot.lane.b32.xlu0 %v4273, 64
      %v4332 = vpop.permute.xlu0 %4331
      %4333 = vrot.lane.b32.xlu0 %v4281, 64
      %v4334 = vpop.permute.xlu0 %4333
      %4335 = vrot.lane.b32.xlu0 %v4289, 64
      %v4336 = vpop.permute.xlu0 %4335
      %4337 = vrot.lane.b32.xlu0 %v4297, 64
      %v4338 = vpop.permute.xlu0 %4337
      %4339 = vrot.lane.b32.xlu0 %v4305, 64
      %v4340 = vpop.permute.xlu0 %4339
      %4341 = vrot.lane.b32.xlu0 %v4308, 64
      %v4342 = vpop.permute.xlu0 %4341
      %v4359 = vrot.slane %v4157, 5
      %v4360 = vrot.slane %v4158, 5
      %v4361 = vsel %vm1653, %v4359, %v4360
      %v4362 = vrot.slane %v4159, 5
      %v4363 = vsel %vm1653, %v4360, %v4362
      %v4364 = vrot.slane %v4160, 5
      %v4365 = vsel %vm1653, %v4362, %v4364
      %v4366 = vrot.slane %v4161, 5
      %v4367 = vsel %vm1653, %v4364, %v4366
      %v4368 = vrot.slane %v4162, 5
      %v4369 = vsel %vm1653, %v4366, %v4368
      %v4370 = vrot.slane %v4163, 5
      %v4371 = vsel %vm1653, %v4368, %v4370
      %v4372 = vrot.slane %v4164, 5
      %v4373 = vsel %vm1653, %v4370, %v4372
      %v4374 = vrot.slane %v4165, 5
      %v4375 = vsel %vm1653, %v4372, %v4374
      %v4376 = vrot.slane %v4166, 5
      %v4377 = vsel %vm1653, %v4374, %v4376
      %v4378 = vrot.slane %v4167, 5
      %v4379 = vsel %vm1653, %v4376, %v4378
      %v4380 = vrot.slane %v4168, 5
      %v4381 = vsel %vm1653, %v4378, %v4380
      %v4382 = vrot.slane %v4169, 5
      %v4383 = vsel %vm1653, %v4380, %v4382
      %v4384 = vrot.slane %v4170, 5
      %v4385 = vsel %vm1653, %v4382, %v4384
      %v4386 = vrot.slane %v4171, 5
      %v4387 = vsel %vm1653, %v4384, %v4386
      %v4388 = vrot.slane %v4172, 5
      %v4389 = vsel %vm1653, %v4386, %v4388
      %v4391 = vshrl.u32 %v4157, 16
      %v4393 = vrot.slane %v4391, 5
      %v4394 = vshll.u32 %v4157, 16
      %v4396 = vrot.slane %v4394, 6
      %v4397 = vor.u32 %v4393, %v4396
      %v4399 = vshrl.u32 %v4158, 16
      %v4401 = vrot.slane %v4399, 5
      %v4402 = vshll.u32 %v4158, 16
      %v4404 = vrot.slane %v4402, 6
      %v4405 = vor.u32 %v4401, %v4404
      %v4406 = vsel %vm1685, %v4397, %v4405
      %v4408 = vshrl.u32 %v4159, 16
      %v4410 = vrot.slane %v4408, 5
      %v4411 = vshll.u32 %v4159, 16
      %v4413 = vrot.slane %v4411, 6
      %v4414 = vor.u32 %v4410, %v4413
      %v4415 = vsel %vm1685, %v4405, %v4414
      %v4417 = vshrl.u32 %v4160, 16
      %v4419 = vrot.slane %v4417, 5
      %v4420 = vshll.u32 %v4160, 16
      %v4422 = vrot.slane %v4420, 6
      %v4423 = vor.u32 %v4419, %v4422
      %v4424 = vsel %vm1685, %v4414, %v4423
      %v4426 = vshrl.u32 %v4161, 16
      %v4428 = vrot.slane %v4426, 5
      %v4429 = vshll.u32 %v4161, 16
      %v4431 = vrot.slane %v4429, 6
      %v4432 = vor.u32 %v4428, %v4431
      %v4433 = vsel %vm1685, %v4423, %v4432
      %v4435 = vshrl.u32 %v4162, 16
      %v4437 = vrot.slane %v4435, 5
      %v4438 = vshll.u32 %v4162, 16
      %v4440 = vrot.slane %v4438, 6
      %v4441 = vor.u32 %v4437, %v4440
      %v4442 = vsel %vm1685, %v4432, %v4441
      %v4444 = vshrl.u32 %v4163, 16
      %v4446 = vrot.slane %v4444, 5
      %v4447 = vshll.u32 %v4163, 16
      %v4449 = vrot.slane %v4447, 6
      %v4450 = vor.u32 %v4446, %v4449
      %v4451 = vsel %vm1685, %v4441, %v4450
      %v4453 = vshrl.u32 %v4164, 16
      %v4455 = vrot.slane %v4453, 5
      %v4456 = vshll.u32 %v4164, 16
      %v4458 = vrot.slane %v4456, 6
      %v4459 = vor.u32 %v4455, %v4458
      %v4460 = vsel %vm1685, %v4450, %v4459
      %v4462 = vshrl.u32 %v4165, 16
      %v4464 = vrot.slane %v4462, 5
      %v4465 = vshll.u32 %v4165, 16
      %v4467 = vrot.slane %v4465, 6
      %v4468 = vor.u32 %v4464, %v4467
      %v4469 = vsel %vm1685, %v4459, %v4468
      %v4471 = vshrl.u32 %v4166, 16
      %v4473 = vrot.slane %v4471, 5
      %v4474 = vshll.u32 %v4166, 16
      %v4476 = vrot.slane %v4474, 6
      %v4477 = vor.u32 %v4473, %v4476
      %v4478 = vsel %vm1685, %v4468, %v4477
      %v4480 = vshrl.u32 %v4167, 16
      %v4482 = vrot.slane %v4480, 5
      %v4483 = vshll.u32 %v4167, 16
      %v4485 = vrot.slane %v4483, 6
      %v4486 = vor.u32 %v4482, %v4485
      %v4487 = vsel %vm1685, %v4477, %v4486
      %v4489 = vshrl.u32 %v4168, 16
      %v4491 = vrot.slane %v4489, 5
      %v4492 = vshll.u32 %v4168, 16
      %v4494 = vrot.slane %v4492, 6
      %v4495 = vor.u32 %v4491, %v4494
      %v4496 = vsel %vm1685, %v4486, %v4495
      %v4498 = vshrl.u32 %v4169, 16
      %v4500 = vrot.slane %v4498, 5
      %v4501 = vshll.u32 %v4169, 16
      %v4503 = vrot.slane %v4501, 6
      %v4504 = vor.u32 %v4500, %v4503
      %v4505 = vsel %vm1685, %v4495, %v4504
      %v4507 = vshrl.u32 %v4170, 16
      %v4509 = vrot.slane %v4507, 5
      %v4510 = vshll.u32 %v4170, 16
      %v4512 = vrot.slane %v4510, 6
      %v4513 = vor.u32 %v4509, %v4512
      %v4514 = vsel %vm1685, %v4504, %v4513
      %v4516 = vshrl.u32 %v4171, 16
      %v4518 = vrot.slane %v4516, 5
      %v4519 = vshll.u32 %v4171, 16
      %v4521 = vrot.slane %v4519, 6
      %v4522 = vor.u32 %v4518, %v4521
      %v4523 = vsel %vm1685, %v4513, %v4522
      %v4525 = vshrl.u32 %v4172, 16
      %v4527 = vrot.slane %v4525, 5
      %v4528 = vshll.u32 %v4172, 16
      %v4530 = vrot.slane %v4528, 6
      %v4531 = vor.u32 %v4527, %v4530
      %v4532 = vsel %vm1685, %v4522, %v4531
      %v4534 = vshll.u32 %v4173, 16
      %v4536 = vrot.slane %v4534, 6
      %v4537 = vsel %vm1685, %v4531, %v4536
      %4538 = vrot.lane.b32.xlu0 %v4397, 64
      %v4539 = vpop.permute.xlu0 %4538
      %4540 = vrot.lane.b32.xlu0 %v4406, 64
      %v4541 = vpop.permute.xlu0 %4540
      %4542 = vrot.lane.b32.xlu0 %v4415, 64
      %v4543 = vpop.permute.xlu0 %4542
      %4544 = vrot.lane.b32.xlu0 %v4424, 64
      %v4545 = vpop.permute.xlu0 %4544
      %4546 = vrot.lane.b32.xlu0 %v4433, 64
      %v4547 = vpop.permute.xlu0 %4546
      %4548 = vrot.lane.b32.xlu0 %v4442, 64
      %v4549 = vpop.permute.xlu0 %4548
      %4550 = vrot.lane.b32.xlu0 %v4451, 64
      %v4551 = vpop.permute.xlu0 %4550
      %4552 = vrot.lane.b32.xlu0 %v4460, 64
      %v4553 = vpop.permute.xlu0 %4552
      %4554 = vrot.lane.b32.xlu0 %v4469, 64
      %v4555 = vpop.permute.xlu0 %4554
      %4556 = vrot.lane.b32.xlu0 %v4478, 64
      %v4557 = vpop.permute.xlu0 %4556
      %4558 = vrot.lane.b32.xlu0 %v4487, 64
      %v4559 = vpop.permute.xlu0 %4558
      %4560 = vrot.lane.b32.xlu0 %v4496, 64
      %v4561 = vpop.permute.xlu0 %4560
      %4562 = vrot.lane.b32.xlu0 %v4505, 64
      %v4563 = vpop.permute.xlu0 %4562
      %4564 = vrot.lane.b32.xlu0 %v4514, 64
      %v4565 = vpop.permute.xlu0 %4564
      %4566 = vrot.lane.b32.xlu0 %v4523, 64
      %v4567 = vpop.permute.xlu0 %4566
      %4568 = vrot.lane.b32.xlu0 %v4532, 64
      %v4569 = vpop.permute.xlu0 %4568
      %4570 = vrot.lane.b32.xlu0 %v4537, 64
      %v4571 = vpop.permute.xlu0 %4570
      %v4573 = vrot.slane %v4157, 6
      %v4574 = vrot.slane %v4158, 6
      %v4575 = vsel %vm1869, %v4573, %v4574
      %v4576 = vrot.slane %v4159, 6
      %v4577 = vsel %vm1869, %v4574, %v4576
      %v4578 = vrot.slane %v4160, 6
      %v4579 = vsel %vm1869, %v4576, %v4578
      %v4580 = vrot.slane %v4161, 6
      %v4581 = vsel %vm1869, %v4578, %v4580
      %v4582 = vrot.slane %v4162, 6
      %v4583 = vsel %vm1869, %v4580, %v4582
      %v4584 = vrot.slane %v4163, 6
      %v4585 = vsel %vm1869, %v4582, %v4584
      %v4586 = vrot.slane %v4164, 6
      %v4587 = vsel %vm1869, %v4584, %v4586
      %v4588 = vrot.slane %v4165, 6
      %v4589 = vsel %vm1869, %v4586, %v4588
      %v4590 = vrot.slane %v4166, 6
      %v4591 = vsel %vm1869, %v4588, %v4590
      %v4592 = vrot.slane %v4167, 6
      %v4593 = vsel %vm1869, %v4590, %v4592
      %v4594 = vrot.slane %v4168, 6
      %v4595 = vsel %vm1869, %v4592, %v4594
      %v4596 = vrot.slane %v4169, 6
      %v4597 = vsel %vm1869, %v4594, %v4596
      %v4598 = vrot.slane %v4170, 6
      %v4599 = vsel %vm1869, %v4596, %v4598
      %v4600 = vrot.slane %v4171, 6
      %v4601 = vsel %vm1869, %v4598, %v4600
      %v4602 = vrot.slane %v4172, 6
      %v4603 = vsel %vm1869, %v4600, %v4602
      %v4604 = vrot.slane %v4173, 6
      %v4605 = vsel %vm1869, %v4602, %v4604
      %v4607 = vsel %vm569, %v4140, %v4310
      %v4609 = vsel %vm569, %v4141, %v4312
      %v4611 = vsel %vm569, %v4142, %v4314
      %v4613 = vsel %vm569, %v4143, %v4316
      %v4615 = vsel %vm569, %v4144, %v4318
      %v4617 = vsel %vm569, %v4145, %v4320
      %v4619 = vsel %vm569, %v4146, %v4322
      %v4621 = vsel %vm569, %v4147, %v4324
      %v4623 = vsel %vm569, %v4148, %v4326
      %v4625 = vsel %vm569, %v4149, %v4328
      %v4627 = vsel %vm569, %v4150, %v4330
      %v4629 = vsel %vm569, %v4151, %v4332
      %v4631 = vsel %vm569, %v4152, %v4334
      %v4633 = vsel %vm569, %v4153, %v4336
      %v4635 = vsel %vm569, %v4154, %v4338
      %v4637 = vsel %vm569, %v4155, %v4340
      %v4639 = vsel %vm569, %v4156, %v4342
      %v4642 = vsel %vm569, %v4359, %v4539
      %v4645 = vsel %vm569, %v4361, %v4541
      %v4648 = vsel %vm569, %v4363, %v4543
      %v4651 = vsel %vm569, %v4365, %v4545
      %v4654 = vsel %vm569, %v4367, %v4547
      %v4657 = vsel %vm569, %v4369, %v4549
      %v4660 = vsel %vm569, %v4371, %v4551
      %v4663 = vsel %vm569, %v4373, %v4553
      %v4666 = vsel %vm569, %v4375, %v4555
      %v4669 = vsel %vm569, %v4377, %v4557
      %v4672 = vsel %vm569, %v4379, %v4559
      %v4675 = vsel %vm569, %v4381, %v4561
      %v4678 = vsel %vm569, %v4383, %v4563
      %v4681 = vsel %vm569, %v4385, %v4565
      %v4684 = vsel %vm569, %v4387, %v4567
      %v4687 = vsel %vm569, %v4389, %v4569
      %v4690 = vsel %vm569, %v4388, %v4571
      %v4691 = vld [vmem:[%s8] sm:$0xf]
      %v4692 = vld [vmem:[%s8 + $0x4] sm:$0xf]
      %v4693 = vld [vmem:[%s8 + $0x8] sm:$0xf]
      %v4694 = vld [vmem:[%s8 + $0xc] sm:$0xf]
      %v4695 = vld [vmem:[%s8 + $0x10] sm:$0xf]
      %v4696 = vld [vmem:[%s8 + $0x14] sm:$0xf]
      %v4697 = vld [vmem:[%s8 + $0x18] sm:$0xf]
      %v4698 = vld [vmem:[%s8 + $0x1c] sm:$0xf]
      %v4699 = vld [vmem:[%s8 + $0x20] sm:$0xf]
      %v4700 = vld [vmem:[%s8 + $0x24] sm:$0xf]
      %v4701 = vld [vmem:[%s8 + $0x28] sm:$0xf]
      %v4702 = vld [vmem:[%s8 + $0x2c] sm:$0xf]
      %v4703 = vld [vmem:[%s8 + $0x30] sm:$0xf]
      %v4704 = vld [vmem:[%s8 + $0x34] sm:$0xf]
      %v4705 = vld [vmem:[%s8 + $0x38] sm:$0xf]
      %v4706 = vld [vmem:[%s8 + $0x3c] sm:$0xf]
      %v4707 = vld [vmem:[%s8 + $0x40] sm:$0xf]
      %v4708 = vld [vmem:[%s8 + $0x44] sm:$0xf]
      %v4709 = vld [vmem:[%s8 + $0x48] sm:$0xf]
      %v4710 = vld [vmem:[%s8 + $0x4c] sm:$0xf]
      %v4711 = vld [vmem:[%s8 + $0x50] sm:$0xf]
      %v4712 = vld [vmem:[%s8 + $0x54] sm:$0xf]
      %v4713 = vld [vmem:[%s8 + $0x58] sm:$0xf]
      %v4714 = vld [vmem:[%s8 + $0x5c] sm:$0xf]
      %v4715 = vld [vmem:[%s8 + $0x60] sm:$0xf]
      %v4716 = vld [vmem:[%s8 + $0x64] sm:$0xf]
      %v4717 = vld [vmem:[%s8 + $0x68] sm:$0xf]
      %v4718 = vld [vmem:[%s8 + $0x6c] sm:$0xf]
      %v4719 = vld [vmem:[%s8 + $0x70] sm:$0xf]
      %v4720 = vld [vmem:[%s8 + $0x74] sm:$0xf]
      %v4721 = vld [vmem:[%s8 + $0x78] sm:$0xf]
      %v4722 = vld [vmem:[%s8 + $0x7c] sm:$0xf]
      %v4723 = vld [vmem:[%s8 + $0x80] sm:$0xf]
      %v4724 = vld [vmem:[%s8 + $0x84] sm:$0xf]
      %v4725 = vld [vmem:[%s8 + $0x88] sm:$0xf]
      %v4726 = vld [vmem:[%s8 + $0x8c] sm:$0xf]
      %v4727 = vld [vmem:[%s8 + $0x90] sm:$0xf]
      %v4728 = vld [vmem:[%s8 + $0x94] sm:$0xf]
      %v4729 = vld [vmem:[%s8 + $0x98] sm:$0xf]
      %v4730 = vld [vmem:[%s8 + $0x9c] sm:$0xf]
      %v4731 = vld [vmem:[%s9] sm:$0x1]
      %v4733 = vlaneseq
      %v4734 = vshrl.u32 %v4733, 7
      %v4735 = vsub.s32 0, %v4734
      %v4736 = vrot.slane %v4731, %v4735
      %v4772 = vrot.slane %v4607, 3
      %v4773 = vrot.slane %v4609, 3
      %v4774 = vsel %vm2069, %v4772, %v4773
      %v4775 = vrot.slane %v4642, 3
      %v4776 = vrot.slane %v4645, 3
      %v4777 = vsel %vm2069, %v4775, %v4776
      %v4778 = vrot.slane %v4573, 3
      %v4779 = vrot.slane %v4575, 3
      %v4780 = vsel %vm2069, %v4778, %v4779
      %v4781 = vrot.slane %v4611, 3
      %v4782 = vsel %vm2069, %v4773, %v4781
      %v4783 = vrot.slane %v4648, 3
      %v4784 = vsel %vm2069, %v4776, %v4783
      %v4785 = vrot.slane %v4577, 3
      %v4786 = vsel %vm2069, %v4779, %v4785
      %v4787 = vrot.slane %v4613, 3
      %v4788 = vsel %vm2069, %v4781, %v4787
      %v4789 = vrot.slane %v4651, 3
      %v4790 = vsel %vm2069, %v4783, %v4789
      %v4791 = vrot.slane %v4579, 3
      %v4792 = vsel %vm2069, %v4785, %v4791
      %v4793 = vrot.slane %v4615, 3
      %v4794 = vsel %vm2069, %v4787, %v4793
      %v4795 = vrot.slane %v4654, 3
      %v4796 = vsel %vm2069, %v4789, %v4795
      %v4797 = vrot.slane %v4581, 3
      %v4798 = vsel %vm2069, %v4791, %v4797
      %v4799 = vrot.slane %v4617, 3
      %v4800 = vsel %vm2069, %v4793, %v4799
      %v4801 = vrot.slane %v4657, 3
      %v4802 = vsel %vm2069, %v4795, %v4801
      %v4803 = vrot.slane %v4583, 3
      %v4804 = vsel %vm2069, %v4797, %v4803
      %v4805 = vrot.slane %v4619, 3
      %v4806 = vsel %vm2069, %v4799, %v4805
      %v4807 = vrot.slane %v4660, 3
      %v4808 = vsel %vm2069, %v4801, %v4807
      %v4809 = vrot.slane %v4585, 3
      %v4810 = vsel %vm2069, %v4803, %v4809
      %v4811 = vrot.slane %v4621, 3
      %v4812 = vsel %vm2069, %v4805, %v4811
      %v4813 = vrot.slane %v4663, 3
      %v4814 = vsel %vm2069, %v4807, %v4813
      %v4815 = vrot.slane %v4587, 3
      %v4816 = vsel %vm2069, %v4809, %v4815
      %v4817 = vrot.slane %v4623, 3
      %v4818 = vsel %vm2069, %v4811, %v4817
      %v4819 = vrot.slane %v4666, 3
      %v4820 = vsel %vm2069, %v4813, %v4819
      %v4821 = vrot.slane %v4589, 3
      %v4822 = vsel %vm2069, %v4815, %v4821
      %v4823 = vrot.slane %v4625, 3
      %v4824 = vsel %vm2069, %v4817, %v4823
      %v4825 = vrot.slane %v4669, 3
      %v4826 = vsel %vm2069, %v4819, %v4825
      %v4827 = vrot.slane %v4591, 3
      %v4828 = vsel %vm2069, %v4821, %v4827
      %v4829 = vrot.slane %v4627, 3
      %v4830 = vsel %vm2069, %v4823, %v4829
      %v4831 = vrot.slane %v4672, 3
      %v4832 = vsel %vm2069, %v4825, %v4831
      %v4833 = vrot.slane %v4593, 3
      %v4834 = vsel %vm2069, %v4827, %v4833
      %v4835 = vrot.slane %v4629, 3
      %v4836 = vsel %vm2069, %v4829, %v4835
      %v4837 = vrot.slane %v4675, 3
      %v4838 = vsel %vm2069, %v4831, %v4837
      %v4839 = vrot.slane %v4595, 3
      %v4840 = vsel %vm2069, %v4833, %v4839
      %v4841 = vrot.slane %v4631, 3
      %v4842 = vsel %vm2069, %v4835, %v4841
      %v4843 = vrot.slane %v4678, 3
      %v4844 = vsel %vm2069, %v4837, %v4843
      %v4845 = vrot.slane %v4597, 3
      %v4846 = vsel %vm2069, %v4839, %v4845
      %v4847 = vrot.slane %v4633, 3
      %v4848 = vsel %vm2069, %v4841, %v4847
      %v4849 = vrot.slane %v4681, 3
      %v4850 = vsel %vm2069, %v4843, %v4849
      %v4851 = vrot.slane %v4599, 3
      %v4852 = vsel %vm2069, %v4845, %v4851
      %v4853 = vrot.slane %v4635, 3
      %v4854 = vsel %vm2069, %v4847, %v4853
      %v4855 = vrot.slane %v4684, 3
      %v4856 = vsel %vm2069, %v4849, %v4855
      %v4857 = vrot.slane %v4601, 3
      %v4858 = vsel %vm2069, %v4851, %v4857
      %v4859 = vrot.slane %v4637, 3
      %v4860 = vsel %vm2069, %v4853, %v4859
      %v4861 = vrot.slane %v4687, 3
      %v4862 = vsel %vm2069, %v4855, %v4861
      %v4863 = vrot.slane %v4603, 3
      %v4864 = vsel %vm2069, %v4857, %v4863
      %v4865 = vrot.slane %v4639, 3
      %v4866 = vsel %vm2069, %v4859, %v4865
      %v4867 = vrot.slane %v4690, 3
      %v4868 = vsel %vm2069, %v4861, %v4867
      %v4869 = vrot.slane %v4605, 3
      %v4870 = vsel %vm2069, %v4863, %v4869
      %v4943 = vunpack.c.l.b16 %v4691
      %v4944 = vunpack.c.l.b16 %v4692
      %v4945 = vunpack.c.l.b16 %v4693
      %v4946 = vunpack.c.l.b16 %v4694
      %v4947 = vunpack.c.l.b16 %v4695
      %v4948 = vunpack.c.l.b16 %v4696
      %v4949 = vunpack.c.l.b16 %v4697
      %v4950 = vunpack.c.l.b16 %v4698
      %v4951 = vunpack.c.l.b16 %v4699
      %v4952 = vunpack.c.l.b16 %v4700
      %v4953 = vunpack.c.l.b16 %v4701
      %v4954 = vunpack.c.l.b16 %v4702
      %v4955 = vunpack.c.l.b16 %v4703
      %v4956 = vunpack.c.l.b16 %v4704
      %v4957 = vunpack.c.l.b16 %v4705
      %v4958 = vunpack.c.l.b16 %v4706
      %v4959 = vunpack.c.l.b16 %v4707
      %v4960 = vunpack.c.l.b16 %v4708
      %v4961 = vunpack.c.l.b16 %v4709
      %v4962 = vunpack.c.l.b16 %v4710
      %v4963 = vunpack.c.l.b16 %v4711
      %v4964 = vunpack.c.l.b16 %v4712
      %v4965 = vunpack.c.l.b16 %v4713
      %v4966 = vunpack.c.l.b16 %v4714
      %v4967 = vunpack.c.l.b16 %v4715
      %v4968 = vunpack.c.l.b16 %v4716
      %v4969 = vunpack.c.l.b16 %v4717
      %v4970 = vunpack.c.l.b16 %v4718
      %v4971 = vunpack.c.l.b16 %v4719
      %v4972 = vunpack.c.l.b16 %v4720
      %v4973 = vunpack.c.l.b16 %v4721
      %v4974 = vunpack.c.l.b16 %v4722
      %v4975 = vunpack.c.l.b16 %v4723
      %v4976 = vunpack.c.l.b16 %v4724
      %v4977 = vunpack.c.l.b16 %v4725
      %v4978 = vunpack.c.l.b16 %v4726
      %v4979 = vunpack.c.l.b16 %v4727
      %v4980 = vunpack.c.l.b16 %v4728
      %v4981 = vunpack.c.l.b16 %v4729
      %v4982 = vunpack.c.l.b16 %v4730
      %v4983 = vpack.c.b16 %v4944, %v4943
      %v4984 = vpack.c.b16 %v4946, %v4945
      %v4985 = vpack.c.b16 %v4948, %v4947
      %v4986 = vpack.c.b16 %v4950, %v4949
      %v4987 = vpack.c.b16 %v4952, %v4951
      %v4988 = vpack.c.b16 %v4954, %v4953
      %v4989 = vpack.c.b16 %v4956, %v4955
      %v4990 = vpack.c.b16 %v4958, %v4957
      %v4991 = vpack.c.b16 %v4960, %v4959
      %v4992 = vpack.c.b16 %v4962, %v4961
      %v4993 = vpack.c.b16 %v4964, %v4963
      %v4994 = vpack.c.b16 %v4966, %v4965
      %v4995 = vpack.c.b16 %v4968, %v4967
      %v4996 = vpack.c.b16 %v4970, %v4969
      %v4997 = vpack.c.b16 %v4972, %v4971
      %v4998 = vpack.c.b16 %v4974, %v4973
      %v4999 = vpack.c.b16 %v4976, %v4975
      %v5000 = vpack.c.b16 %v4978, %v4977
      %v5001 = vpack.c.b16 %v4980, %v4979
      %v5002 = vpack.c.b16 %v4982, %v4981
      %v5024 = vsel %vm569, %v4780, 0
      %v5027 = vsel %vm569, %v4786, 0
      %v5030 = vsel %vm569, %v4792, 0
      %v5033 = vsel %vm569, %v4798, 0
      %v5036 = vsel %vm569, %v4804, 0
      %v5039 = vsel %vm569, %v4810, 0
      %v5042 = vsel %vm569, %v4816, 0
      %v5045 = vsel %vm569, %v4822, 0
      %v5048 = vsel %vm569, %v4828, 0
      %v5051 = vsel %vm569, %v4834, 0
      %v5054 = vsel %vm569, %v4840, 0
      %v5057 = vsel %vm569, %v4846, 0
      %v5060 = vsel %vm569, %v4852, 0
      %v5063 = vsel %vm569, %v4858, 0
      %v5066 = vsel %vm569, %v4864, 0
      %v5069 = vsel %vm569, %v4870, 0
      %5071 = vmatprep.subr.bf16.mxu0 0
      %5072 = vmatpush1.bf16.msra.mxu0 %v4983
      %5073 = vmatprep.subr.bf16.mxu0 0
      %5074 = vmatpush1.bf16.msra.mxu0 %v4984
      %5075 = vmatprep.subr.bf16.mxu0 0
      %5076 = vmatpush1.bf16.msra.mxu0 %v4985
      %5077 = vmatprep.subr.bf16.mxu0 0
      %5078 = vmatpush1.bf16.msra.mxu0 %v4986
      %5079 = vmatprep.subr.bf16.mxu0 0
      %5080 = vmatpush1.bf16.msra.mxu0 %v4987
      %5081 = vmatprep.subr.bf16.mxu0 0
      %5082 = vmatpush1.bf16.msra.mxu0 %v4988
      %5083 = vmatprep.subr.bf16.mxu0 0
      %5084 = vmatpush1.bf16.msra.mxu0 %v4989
      %5085 = vmatprep.subr.bf16.mxu0 0
      %5086 = vmatpush1.bf16.msra.mxu0 %v4990
      %5087 = vmatprep.subr.bf16.mxu0 0
      %5088 = vmatpush1.bf16.msra.mxu0 %v4991
      %5089 = vmatprep.subr.bf16.mxu0 0
      %5090 = vmatpush1.bf16.msra.mxu0 %v4992
      %5091 = vmatprep.subr.bf16.mxu0 0
      %5092 = vmatpush1.bf16.msra.mxu0 %v4993
      %5093 = vmatprep.subr.bf16.mxu0 0
      %5094 = vmatpush1.bf16.msra.mxu0 %v4994
      %5095 = vmatprep.subr.bf16.mxu0 0
      %5096 = vmatpush1.bf16.msra.mxu0 %v4995
      %5097 = vmatprep.subr.bf16.mxu0 0
      %5098 = vmatpush1.bf16.msra.mxu0 %v4996
      %5099 = vmatprep.subr.bf16.mxu0 0
      %5100 = vmatpush1.bf16.msra.mxu0 %v4997
      %5101 = vmatprep.subr.bf16.mxu0 0
      %5102 = vmatpush1.bf16.msra.mxu0 %v4998
      %5103 = vmatprep.mubr.bf16.mxu0 %v4777
      %5104 = vmatmul.mubr.bf16.gmra.mrb[0].mxu0 %v4774
      %v5105 = vpop.f32.mrb[0].mxu0
      %v5106 = vadd.f32 %v4736, %v5105
      %v5107 = vpop.f32.mrb[0].mxu0
      %v5108 = vpop.f32.mrb[0].mxu0
      %v5109 = vadd.f32 %v4736, %v5108
      %v5110 = vpop.f32.mrb[0].mxu0
      %5111 = vmatprep.mubr.bf16.mxu0 %v4784
      %5112 = vmatmul.mubr.bf16.gmra.mrb[0].mxu0 %v4782
      %v5113 = vpop.f32.mrb[0].mxu0
      %v5114 = vadd.f32 %v4736, %v5113
      %v5115 = vpop.f32.mrb[0].mxu0
      %v5116 = vpop.f32.mrb[0].mxu0
      %v5117 = vadd.f32 %v4736, %v5116
      %v5118 = vpop.f32.mrb[0].mxu0
      %5119 = vmatprep.mubr.bf16.mxu0 %v4790
      %5120 = vmatmul.mubr.bf16.gmra.mrb[0].mxu0 %v4788
      %v5121 = vpop.f32.mrb[0].mxu0
      %v5122 = vadd.f32 %v4736, %v5121
      %v5123 = vpop.f32.mrb[0].mxu0
      %v5124 = vpop.f32.mrb[0].mxu0
      %v5125 = vadd.f32 %v4736, %v5124
      %v5126 = vpop.f32.mrb[0].mxu0
      %5127 = vmatprep.mubr.bf16.mxu0 %v4796
      %5128 = vmatmul.mubr.bf16.gmra.mrb[0].mxu0 %v4794
      %v5129 = vpop.f32.mrb[0].mxu0
      %v5130 = vadd.f32 %v4736, %v5129
      %v5131 = vpop.f32.mrb[0].mxu0
      %v5132 = vpop.f32.mrb[0].mxu0
      %v5133 = vadd.f32 %v4736, %v5132
      %v5134 = vpop.f32.mrb[0].mxu0
      %5135 = vmatprep.mubr.bf16.mxu0 %v4802
      %5136 = vmatmul.mubr.bf16.gmra.mrb[0].mxu0 %v4800
      %v5137 = vpop.f32.mrb[0].mxu0
      %v5138 = vadd.f32 %v4736, %v5137
      %v5139 = vpop.f32.mrb[0].mxu0
      %v5140 = vpop.f32.mrb[0].mxu0
      %v5141 = vadd.f32 %v4736, %v5140
      %v5142 = vpop.f32.mrb[0].mxu0
      %5143 = vmatprep.mubr.bf16.mxu0 %v4808
      %5144 = vmatmul.mubr.bf16.gmra.mrb[0].mxu0 %v4806
      %v5145 = vpop.f32.mrb[0].mxu0
      %v5146 = vadd.f32 %v4736, %v5145
      %v5147 = vpop.f32.mrb[0].mxu0
      %v5148 = vpop.f32.mrb[0].mxu0
      %v5149 = vadd.f32 %v4736, %v5148
      %v5150 = vpop.f32.mrb[0].mxu0
      %5151 = vmatprep.mubr.bf16.mxu0 %v4814
      %5152 = vmatmul.mubr.bf16.gmra.mrb[0].mxu0 %v4812
      %v5153 = vpop.f32.mrb[0].mxu0
      %v5154 = vadd.f32 %v4736, %v5153
      %v5155 = vpop.f32.mrb[0].mxu0
      %v5156 = vpop.f32.mrb[0].mxu0
      %v5157 = vadd.f32 %v4736, %v5156
      %v5158 = vpop.f32.mrb[0].mxu0
      %5159 = vmatprep.mubr.bf16.mxu0 %v4820
      %5160 = vmatmul.mubr.bf16.gmra.mrb[0].mxu0 %v4818
      %v5161 = vpop.f32.mrb[0].mxu0
      %v5162 = vadd.f32 %v4736, %v5161
      %v5163 = vpop.f32.mrb[0].mxu0
      %v5164 = vpop.f32.mrb[0].mxu0
      %v5165 = vadd.f32 %v4736, %v5164
      %v5166 = vpop.f32.mrb[0].mxu0
      %5167 = vmatprep.mubr.bf16.mxu0 %v4826
      %5168 = vmatmul.mubr.bf16.gmra.mrb[0].mxu0 %v4824
      %v5169 = vpop.f32.mrb[0].mxu0
      %v5170 = vadd.f32 %v4736, %v5169
      %v5171 = vpop.f32.mrb[0].mxu0
      %v5172 = vpop.f32.mrb[0].mxu0
      %v5173 = vadd.f32 %v4736, %v5172
      %v5174 = vpop.f32.mrb[0].mxu0
      %5175 = vmatprep.mubr.bf16.mxu0 %v4832
      %5176 = vmatmul.mubr.bf16.gmra.mrb[0].mxu0 %v4830
      %v5177 = vpop.f32.mrb[0].mxu0
      %v5178 = vadd.f32 %v4736, %v5177
      %v5179 = vpop.f32.mrb[0].mxu0
      %v5180 = vpop.f32.mrb[0].mxu0
      %v5181 = vadd.f32 %v4736, %v5180
      %v5182 = vpop.f32.mrb[0].mxu0
      %5183 = vmatprep.mubr.bf16.mxu0 %v4838
      %5184 = vmatmul.mubr.bf16.gmra.mrb[0].mxu0 %v4836
      %v5185 = vpop.f32.mrb[0].mxu0
      %v5186 = vadd.f32 %v4736, %v5185
      %v5187 = vpop.f32.mrb[0].mxu0
      %v5188 = vpop.f32.mrb[0].mxu0
      %v5189 = vadd.f32 %v4736, %v5188
      %v5190 = vpop.f32.mrb[0].mxu0
      %5191 = vmatprep.mubr.bf16.mxu0 %v4844
      %5192 = vmatmul.mubr.bf16.gmra.mrb[0].mxu0 %v4842
      %v5193 = vpop.f32.mrb[0].mxu0
      %v5194 = vadd.f32 %v4736, %v5193
      %v5195 = vpop.f32.mrb[0].mxu0
      %v5196 = vpop.f32.mrb[0].mxu0
      %v5197 = vadd.f32 %v4736, %v5196
      %v5198 = vpop.f32.mrb[0].mxu0
      %5199 = vmatprep.mubr.bf16.mxu0 %v4850
      %5200 = vmatmul.mubr.bf16.gmra.mrb[0].mxu0 %v4848
      %v5201 = vpop.f32.mrb[0].mxu0
      %v5202 = vadd.f32 %v4736, %v5201
      %v5203 = vpop.f32.mrb[0].mxu0
      %v5204 = vpop.f32.mrb[0].mxu0
      %v5205 = vadd.f32 %v4736, %v5204
      %v5206 = vpop.f32.mrb[0].mxu0
      %5207 = vmatprep.mubr.bf16.mxu0 %v4856
      %5208 = vmatmul.mubr.bf16.gmra.mrb[0].mxu0 %v4854
      %v5209 = vpop.f32.mrb[0].mxu0
      %v5210 = vadd.f32 %v4736, %v5209
      %v5211 = vpop.f32.mrb[0].mxu0
      %v5212 = vpop.f32.mrb[0].mxu0
      %v5213 = vadd.f32 %v4736, %v5212
      %v5214 = vpop.f32.mrb[0].mxu0
      %5215 = vmatprep.mubr.bf16.mxu0 %v4862
      %5216 = vmatmul.mubr.bf16.gmra.mrb[0].mxu0 %v4860
      %v5217 = vpop.f32.mrb[0].mxu0
      %v5218 = vadd.f32 %v4736, %v5217
      %v5219 = vpop.f32.mrb[0].mxu0
      %v5220 = vpop.f32.mrb[0].mxu0
      %v5221 = vadd.f32 %v4736, %v5220
      %v5222 = vpop.f32.mrb[0].mxu0
      %5223 = vmatprep.mubr.bf16.mxu0 %v4868
      %5224 = vmatmul.mubr.bf16.gmra.mrb[0].mxu0 %v4866
      %v5225 = vpop.f32.mrb[0].mxu0
      %v5226 = vadd.f32 %v4736, %v5225
      %v5227 = vpop.f32.mrb[0].mxu0
      %v5228 = vpop.f32.mrb[0].mxu0
      %v5229 = vadd.f32 %v4736, %v5228
      %v5230 = vpop.f32.mrb[0].mxu0
      %5231 = vdwg.mxu0
      %5232 = vmatprep.subr.bf16.mxu0 0
      %5233 = vmatpush1.bf16.msra.mxu0 %v4999
      %5234 = vmatprep.subr.bf16.mxu0 0
      %5235 = vmatpush1.bf16.msra.mxu0 %v5000
      %5236 = vmatprep.subr.bf16.mxu0 0
      %5237 = vmatpush1.bf16.msra.mxu0 %v5001
      %5238 = vmatprep.subr.bf16.mxu0 0
      %5239 = vmatpush1.bf16.msra.mxu0 %v5002
      %5240 = vmatprep.subr.bf16.mxu0 0
      %5241 = vmatpush1.bf16.msra.mxu0 0
      %5242 = vmatprep.subr.bf16.mxu0 0
      %5243 = vmatpush1.bf16.msra.mxu0 0
      %5244 = vmatprep.subr.bf16.mxu0 0
      %5245 = vmatpush1.bf16.msra.mxu0 0
      %5246 = vmatprep.subr.bf16.mxu0 0
      %5247 = vmatpush1.bf16.msra.mxu0 0
      %5248 = vmatprep.subr.bf16.mxu0 0
      %5249 = vmatpush1.bf16.msra.mxu0 0
      %5250 = vmatprep.subr.bf16.mxu0 0
      %5251 = vmatpush1.bf16.msra.mxu0 0
      %5252 = vmatprep.subr.bf16.mxu0 0
      %5253 = vmatpush1.bf16.msra.mxu0 0
      %5254 = vmatprep.subr.bf16.mxu0 0
      %5255 = vmatpush1.bf16.msra.mxu0 0
      %5256 = vmatprep.subr.bf16.mxu0 0
      %5257 = vmatpush1.bf16.msra.mxu0 0
      %5258 = vmatprep.subr.bf16.mxu0 0
      %5259 = vmatpush1.bf16.msra.mxu0 0
      %5260 = vmatprep.subr.bf16.mxu0 0
      %5261 = vmatpush1.bf16.msra.mxu0 0
      %5262 = vmatprep.subr.bf16.mxu0 0
      %5263 = vmatpush1.bf16.msra.mxu0 0
      %5264 = vmatprep.mubr.bf16.mxu0 0
      %5265 = vmatmul.mubr.bf16.gmra.mrb[0].mxu0 %v5024
      %v5266 = vpop.f32.mrb[0].mxu0
      %v5267 = vadd.f32 %v5106, %v5266
      %v5268 = vpop.f32.mrb[0].mxu0
      %v5269 = vpop.f32.mrb[0].mxu0
      %v5270 = vadd.f32 %v5109, %v5269
      %v5271 = vpop.f32.mrb[0].mxu0
      %5272 = vmatprep.mubr.bf16.mxu0 0
      %5273 = vmatmul.mubr.bf16.gmra.mrb[0].mxu0 %v5027
      %v5274 = vpop.f32.mrb[0].mxu0
      %v5275 = vadd.f32 %v5114, %v5274
      %v5276 = vpop.f32.mrb[0].mxu0
      %v5277 = vpop.f32.mrb[0].mxu0
      %v5278 = vadd.f32 %v5117, %v5277
      %v5279 = vpop.f32.mrb[0].mxu0
      %5280 = vmatprep.mubr.bf16.mxu0 0
      %5281 = vmatmul.mubr.bf16.gmra.mrb[0].mxu0 %v5030
      %v5282 = vpop.f32.mrb[0].mxu0
      %v5283 = vadd.f32 %v5122, %v5282
      %v5284 = vpop.f32.mrb[0].mxu0
      %v5285 = vpop.f32.mrb[0].mxu0
      %v5286 = vadd.f32 %v5125, %v5285
      %v5287 = vpop.f32.mrb[0].mxu0
      %5288 = vmatprep.mubr.bf16.mxu0 0
      %5289 = vmatmul.mubr.bf16.gmra.mrb[0].mxu0 %v5033
      %v5290 = vpop.f32.mrb[0].mxu0
      %v5291 = vadd.f32 %v5130, %v5290
      %v5292 = vpop.f32.mrb[0].mxu0
      %v5293 = vpop.f32.mrb[0].mxu0
      %v5294 = vadd.f32 %v5133, %v5293
      %v5295 = vpop.f32.mrb[0].mxu0
      %5296 = vmatprep.mubr.bf16.mxu0 0
      %5297 = vmatmul.mubr.bf16.gmra.mrb[0].mxu0 %v5036
      %v5298 = vpop.f32.mrb[0].mxu0
      %v5299 = vadd.f32 %v5138, %v5298
      %v5300 = vpop.f32.mrb[0].mxu0
      %v5301 = vpop.f32.mrb[0].mxu0
      %v5302 = vadd.f32 %v5141, %v5301
      %v5303 = vpop.f32.mrb[0].mxu0
      %5304 = vmatprep.mubr.bf16.mxu0 0
      %5305 = vmatmul.mubr.bf16.gmra.mrb[0].mxu0 %v5039
      %v5306 = vpop.f32.mrb[0].mxu0
      %v5307 = vadd.f32 %v5146, %v5306
      %v5308 = vpop.f32.mrb[0].mxu0
      %v5309 = vpop.f32.mrb[0].mxu0
      %v5310 = vadd.f32 %v5149, %v5309
      %v5311 = vpop.f32.mrb[0].mxu0
      %5312 = vmatprep.mubr.bf16.mxu0 0
      %5313 = vmatmul.mubr.bf16.gmra.mrb[0].mxu0 %v5042
      %v5314 = vpop.f32.mrb[0].mxu0
      %v5315 = vadd.f32 %v5154, %v5314
      %v5316 = vpop.f32.mrb[0].mxu0
      %v5317 = vpop.f32.mrb[0].mxu0
      %v5318 = vadd.f32 %v5157, %v5317
      %v5319 = vpop.f32.mrb[0].mxu0
      %5320 = vmatprep.mubr.bf16.mxu0 0
      %5321 = vmatmul.mubr.bf16.gmra.mrb[0].mxu0 %v5045
      %v5322 = vpop.f32.mrb[0].mxu0
      %v5323 = vadd.f32 %v5162, %v5322
      %v5324 = vpop.f32.mrb[0].mxu0
      %v5325 = vpop.f32.mrb[0].mxu0
      %v5326 = vadd.f32 %v5165, %v5325
      %v5327 = vpop.f32.mrb[0].mxu0
      %5328 = vmatprep.mubr.bf16.mxu0 0
      %5329 = vmatmul.mubr.bf16.gmra.mrb[0].mxu0 %v5048
      %v5330 = vpop.f32.mrb[0].mxu0
      %v5331 = vadd.f32 %v5170, %v5330
      %v5332 = vpop.f32.mrb[0].mxu0
      %v5333 = vpop.f32.mrb[0].mxu0
      %v5334 = vadd.f32 %v5173, %v5333
      %v5335 = vpop.f32.mrb[0].mxu0
      %5336 = vmatprep.mubr.bf16.mxu0 0
      %5337 = vmatmul.mubr.bf16.gmra.mrb[0].mxu0 %v5051
      %v5338 = vpop.f32.mrb[0].mxu0
      %v5339 = vadd.f32 %v5178, %v5338
      %v5340 = vpop.f32.mrb[0].mxu0
      %v5341 = vpop.f32.mrb[0].mxu0
      %v5342 = vadd.f32 %v5181, %v5341
      %v5343 = vpop.f32.mrb[0].mxu0
      %5344 = vmatprep.mubr.bf16.mxu0 0
      %5345 = vmatmul.mubr.bf16.gmra.mrb[0].mxu0 %v5054
      %v5346 = vpop.f32.mrb[0].mxu0
      %v5347 = vadd.f32 %v5186, %v5346
      %v5348 = vpop.f32.mrb[0].mxu0
      %v5349 = vpop.f32.mrb[0].mxu0
      %v5350 = vadd.f32 %v5189, %v5349
      %v5351 = vpop.f32.mrb[0].mxu0
      %5352 = vmatprep.mubr.bf16.mxu0 0
      %5353 = vmatmul.mubr.bf16.gmra.mrb[0].mxu0 %v5057
      %v5354 = vpop.f32.mrb[0].mxu0
      %v5355 = vadd.f32 %v5194, %v5354
      %v5356 = vpop.f32.mrb[0].mxu0
      %v5357 = vpop.f32.mrb[0].mxu0
      %v5358 = vadd.f32 %v5197, %v5357
      %v5359 = vpop.f32.mrb[0].mxu0
      %5360 = vmatprep.mubr.bf16.mxu0 0
      %5361 = vmatmul.mubr.bf16.gmra.mrb[0].mxu0 %v5060
      %v5362 = vpop.f32.mrb[0].mxu0
      %v5363 = vadd.f32 %v5202, %v5362
      %v5364 = vpop.f32.mrb[0].mxu0
      %v5365 = vpop.f32.mrb[0].mxu0
      %v5366 = vadd.f32 %v5205, %v5365
      %v5367 = vpop.f32.mrb[0].mxu0
      %5368 = vmatprep.mubr.bf16.mxu0 0
      %5369 = vmatmul.mubr.bf16.gmra.mrb[0].mxu0 %v5063
      %v5370 = vpop.f32.mrb[0].mxu0
      %v5371 = vadd.f32 %v5210, %v5370
      %v5372 = vpop.f32.mrb[0].mxu0
      %v5373 = vpop.f32.mrb[0].mxu0
      %v5374 = vadd.f32 %v5213, %v5373
      %v5375 = vpop.f32.mrb[0].mxu0
      %5376 = vmatprep.mubr.bf16.mxu0 0
      %5377 = vmatmul.mubr.bf16.gmra.mrb[0].mxu0 %v5066
      %v5378 = vpop.f32.mrb[0].mxu0
      %v5379 = vadd.f32 %v5218, %v5378
      %v5380 = vpop.f32.mrb[0].mxu0
      %v5381 = vpop.f32.mrb[0].mxu0
      %v5382 = vadd.f32 %v5221, %v5381
      %v5383 = vpop.f32.mrb[0].mxu0
      %5384 = vmatprep.mubr.bf16.mxu0 0
      %5385 = vmatmul.mubr.bf16.gmra.mrb[0].mxu0 %v5069
      %v5386 = vpop.f32.mrb[0].mxu0
      %v5387 = vadd.f32 %v5226, %v5386
      %v5388 = vpop.f32.mrb[0].mxu0
      %v5389 = vpop.f32.mrb[0].mxu0
      %v5390 = vadd.f32 %v5229, %v5389
      %v5391 = vpop.f32.mrb[0].mxu0
      %5392 = vdwg.mxu0
      %v5393 = vmax.f32 %v5267, 0.0
      %v5394 = vmax.f32 %v5270, 0.0
      %v5395 = vmax.f32 %v5275, 0.0
      %v5396 = vmax.f32 %v5278, 0.0
      %v5397 = vmax.f32 %v5283, 0.0
      %v5398 = vmax.f32 %v5286, 0.0
      %v5399 = vmax.f32 %v5291, 0.0
      %v5400 = vmax.f32 %v5294, 0.0
      %v5401 = vmax.f32 %v5299, 0.0
      %v5402 = vmax.f32 %v5302, 0.0
      %v5403 = vmax.f32 %v5307, 0.0
      %v5404 = vmax.f32 %v5310, 0.0
      %v5405 = vmax.f32 %v5315, 0.0
      %v5406 = vmax.f32 %v5318, 0.0
      %v5407 = vmax.f32 %v5323, 0.0
      %v5408 = vmax.f32 %v5326, 0.0
      %v5409 = vmax.f32 %v5331, 0.0
      %v5410 = vmax.f32 %v5334, 0.0
      %v5411 = vmax.f32 %v5339, 0.0
      %v5412 = vmax.f32 %v5342, 0.0
      %v5413 = vmax.f32 %v5347, 0.0
      %v5414 = vmax.f32 %v5350, 0.0
      %v5415 = vmax.f32 %v5355, 0.0
      %v5416 = vmax.f32 %v5358, 0.0
      %v5417 = vmax.f32 %v5363, 0.0
      %v5418 = vmax.f32 %v5366, 0.0
      %v5419 = vmax.f32 %v5371, 0.0
      %v5420 = vmax.f32 %v5374, 0.0
      %v5421 = vmax.f32 %v5379, 0.0
      %v5422 = vmax.f32 %v5382, 0.0
      %v5423 = vmax.f32 %v5387, 0.0
      %v5424 = vmax.f32 %v5390, 0.0
      %v5425 = vld [vmem:[%s10] sm:$0x1]
      %v5427 = vlaneseq
      %v5428 = vshrl.u32 %v5427, 7
      %v5429 = vsub.s32 0, %v5428
      %v5430 = vrot.slane %v5425, %v5429
      %v5432 = vmul.f32 %v5393, %v5430
      %v5433 = vmul.f32 %v5394, %v5430
      %v5434 = vmul.f32 %v5395, %v5430
      %v5435 = vmul.f32 %v5396, %v5430
      %v5436 = vmul.f32 %v5397, %v5430
      %v5437 = vmul.f32 %v5398, %v5430
      %v5438 = vmul.f32 %v5399, %v5430
      %v5439 = vmul.f32 %v5400, %v5430
      %v5440 = vmul.f32 %v5401, %v5430
      %v5441 = vmul.f32 %v5402, %v5430
      %v5442 = vmul.f32 %v5403, %v5430
      %v5443 = vmul.f32 %v5404, %v5430
      %v5444 = vmul.f32 %v5405, %v5430
      %v5445 = vmul.f32 %v5406, %v5430
      %v5446 = vmul.f32 %v5407, %v5430
      %v5447 = vmul.f32 %v5408, %v5430
      %v5448 = vmul.f32 %v5409, %v5430
      %v5449 = vmul.f32 %v5410, %v5430
      %v5450 = vmul.f32 %v5411, %v5430
      %v5451 = vmul.f32 %v5412, %v5430
      %v5452 = vmul.f32 %v5413, %v5430
      %v5453 = vmul.f32 %v5414, %v5430
      %v5454 = vmul.f32 %v5415, %v5430
      %v5455 = vmul.f32 %v5416, %v5430
      %v5456 = vmul.f32 %v5417, %v5430
      %v5457 = vmul.f32 %v5418, %v5430
      %v5458 = vmul.f32 %v5419, %v5430
      %v5459 = vmul.f32 %v5420, %v5430
      %v5460 = vmul.f32 %v5421, %v5430
      %v5461 = vmul.f32 %v5422, %v5430
      %v5462 = vmul.f32 %v5423, %v5430
      %v5463 = vmul.f32 %v5424, %v5430
      %v5464 = vld [vmem:[%s11] sm:$0x1]
      %v5466 = vlaneseq
      %v5467 = vshrl.u32 %v5466, 7
      %v5468 = vsub.s32 0, %v5467
      %v5469 = vrot.slane %v5464, %v5468
      %v5471 = vadd.f32 %v5432, %v5469
      %v5472 = vadd.f32 %v5433, %v5469
      %v5473 = vadd.f32 %v5434, %v5469
      %v5474 = vadd.f32 %v5435, %v5469
      %v5475 = vadd.f32 %v5436, %v5469
      %v5476 = vadd.f32 %v5437, %v5469
      %v5477 = vadd.f32 %v5438, %v5469
      %v5478 = vadd.f32 %v5439, %v5469
      %v5479 = vadd.f32 %v5440, %v5469
      %v5480 = vadd.f32 %v5441, %v5469
      %v5481 = vadd.f32 %v5442, %v5469
      %v5482 = vadd.f32 %v5443, %v5469
      %v5483 = vadd.f32 %v5444, %v5469
      %v5484 = vadd.f32 %v5445, %v5469
      %v5485 = vadd.f32 %v5446, %v5469
      %v5486 = vadd.f32 %v5447, %v5469
      %v5487 = vadd.f32 %v5448, %v5469
      %v5488 = vadd.f32 %v5449, %v5469
      %v5489 = vadd.f32 %v5450, %v5469
      %v5490 = vadd.f32 %v5451, %v5469
      %v5491 = vadd.f32 %v5452, %v5469
      %v5492 = vadd.f32 %v5453, %v5469
      %v5493 = vadd.f32 %v5454, %v5469
      %v5494 = vadd.f32 %v5455, %v5469
      %v5495 = vadd.f32 %v5456, %v5469
      %v5496 = vadd.f32 %v5457, %v5469
      %v5497 = vadd.f32 %v5458, %v5469
      %v5498 = vadd.f32 %v5459, %v5469
      %v5499 = vadd.f32 %v5460, %v5469
      %v5500 = vadd.f32 %v5461, %v5469
      %v5501 = vadd.f32 %v5462, %v5469
      %v5502 = vadd.f32 %v5463, %v5469
      %v5503 = vsel %vm569, %v5471, -inf
      %v5504 = vsel %vm569, %v5472, -inf
      %v5505 = vsel %vm569, %v5473, -inf
      %v5506 = vsel %vm569, %v5474, -inf
      %v5507 = vsel %vm569, %v5475, -inf
      %v5508 = vmax.f32 %v5503, %v5507
      %v5509 = vsel %vm569, %v5476, -inf
      %v5510 = vmax.f32 %v5504, %v5509
      %v5511 = vsel %vm569, %v5477, -inf
      %v5512 = vmax.f32 %v5505, %v5511
      %v5513 = vsel %vm569, %v5478, -inf
      %v5514 = vmax.f32 %v5506, %v5513
      %v5515 = vsel %vm569, %v5479, -inf
      %v5516 = vmax.f32 %v5508, %v5515
      %v5517 = vsel %vm569, %v5480, -inf
      %v5518 = vmax.f32 %v5510, %v5517
      %v5519 = vsel %vm569, %v5481, -inf
      %v5520 = vmax.f32 %v5512, %v5519
      %v5521 = vsel %vm569, %v5482, -inf
      %v5522 = vmax.f32 %v5514, %v5521
      %v5523 = vsel %vm569, %v5483, -inf
      %v5524 = vmax.f32 %v5516, %v5523
      %v5525 = vsel %vm569, %v5484, -inf
      %v5526 = vmax.f32 %v5518, %v5525
      %v5527 = vsel %vm569, %v5485, -inf
      %v5528 = vmax.f32 %v5520, %v5527
      %v5529 = vsel %vm569, %v5486, -inf
      %v5530 = vmax.f32 %v5522, %v5529
      %v5531 = vsel %vm569, %v5487, -inf
      %v5532 = vmax.f32 %v5524, %v5531
      %v5533 = vsel %vm569, %v5488, -inf
      %v5534 = vmax.f32 %v5526, %v5533
      %v5535 = vsel %vm569, %v5489, -inf
      %v5536 = vmax.f32 %v5528, %v5535
      %v5537 = vsel %vm569, %v5490, -inf
      %v5538 = vmax.f32 %v5530, %v5537
      %v5539 = vsel %vm569, %v5491, -inf
      %v5540 = vmax.f32 %v5532, %v5539
      %v5541 = vsel %vm569, %v5492, -inf
      %v5542 = vmax.f32 %v5534, %v5541
      %v5543 = vsel %vm569, %v5493, -inf
      %v5544 = vmax.f32 %v5536, %v5543
      %v5545 = vsel %vm569, %v5494, -inf
      %v5546 = vmax.f32 %v5538, %v5545
      %v5547 = vsel %vm569, %v5495, -inf
      %v5548 = vmax.f32 %v5540, %v5547
      %v5549 = vsel %vm569, %v5496, -inf
      %v5550 = vmax.f32 %v5542, %v5549
      %v5551 = vsel %vm569, %v5497, -inf
      %v5552 = vmax.f32 %v5544, %v5551
      %v5553 = vsel %vm569, %v5498, -inf
      %v5554 = vmax.f32 %v5546, %v5553
      %v5555 = vsel %vm569, %v5499, -inf
      %v5556 = vmax.f32 %v5548, %v5555
      %v5557 = vsel %vm569, %v5500, -inf
      %v5558 = vmax.f32 %v5550, %v5557
      %v5559 = vsel %vm569, %v5501, -inf
      %v5560 = vmax.f32 %v5552, %v5559
      %v5561 = vsel %vm569, %v5502, -inf
      %v5562 = vmax.f32 %v5554, %v5561
      %v5563 = vmax.f32 %v5556, %v5558
      %v5564 = vmax.f32 %v5560, %v5562
      %v5565 = vmax.f32 %v5563, %v5564
      %v5566 = vrot.slane %v5565, 4
      %v5567 = vmax.f32 %v5565, %v5566
      %v5568 = vrot.slane %v5567, 2
      %v5569 = vmax.f32 %v5567, %v5568
      %v5570 = vrot.slane %v5569, 1
      %v5571 = vmax.f32 %v5569, %v5570
      %v5572 = vld [vmem:[#allocation3 + $0x100] sm:$0xff]
      %v5573 = vld [vmem:[#allocation3 + $0x108] sm:$0xff]
      %v5574 = vld [vmem:[#allocation3 + $0x110] sm:$0xff]
      %v5575 = vld [vmem:[#allocation3 + $0x118] sm:$0xff]
      %v5576 = vld [vmem:[#allocation3 + $0x120] sm:$0xff]
      %v5577 = vld [vmem:[#allocation3 + $0x128] sm:$0xff]
      %v5578 = vld [vmem:[#allocation3 + $0x130] sm:$0xff]
      %v5579 = vld [vmem:[#allocation3 + $0x138] sm:$0xff]
      %v5580 = vld [vmem:[#allocation3 + $0x140] sm:$0xff]
      %v5581 = vld [vmem:[#allocation3 + $0x148] sm:$0xff]
      %v5582 = vld [vmem:[#allocation3 + $0x150] sm:$0xff]
      %v5583 = vld [vmem:[#allocation3 + $0x158] sm:$0xff]
      %v5584 = vld [vmem:[#allocation3 + $0x160] sm:$0xff]
      %v5585 = vld [vmem:[#allocation3 + $0x168] sm:$0xff]
      %v5586 = vld [vmem:[#allocation3 + $0x170] sm:$0xff]
      %v5587 = vld [vmem:[#allocation3 + $0x178] sm:$0xff]
      %v5588 = vld [vmem:[#allocation3 + $0x180] sm:$0xff]
      %v5589 = vld [vmem:[#allocation3 + $0x188] sm:$0xff]
      %v5590 = vld [vmem:[#allocation3 + $0x190] sm:$0xff]
      %v5591 = vld [vmem:[#allocation3 + $0x198] sm:$0xff]
      %v5592 = vld [vmem:[#allocation3 + $0x1a0] sm:$0xff]
      %v5593 = vld [vmem:[#allocation3 + $0x1a8] sm:$0xff]
      %v5594 = vld [vmem:[#allocation3 + $0x1b0] sm:$0xff]
      %v5595 = vld [vmem:[#allocation3 + $0x1b8] sm:$0xff]
      %v5596 = vld [vmem:[#allocation3 + $0x1c0] sm:$0xff]
      %v5597 = vld [vmem:[#allocation3 + $0x1c8] sm:$0xff]
      %v5598 = vld [vmem:[#allocation3 + $0x1d0] sm:$0xff]
      %v5599 = vld [vmem:[#allocation3 + $0x1d8] sm:$0xff]
      %v5600 = vld [vmem:[#allocation3 + $0x1e0] sm:$0xff]
      %v5601 = vld [vmem:[#allocation3 + $0x1e8] sm:$0xff]
      %v5602 = vld [vmem:[#allocation3 + $0x1f0] sm:$0xff]
      %v5603 = vld [vmem:[#allocation3 + $0x1f8] sm:$0xff]
      %v5604 = vld [vmem:[#allocation3 + $0x200] sm:$0xff]
      %v5605 = vld [vmem:[#allocation3 + $0x208] sm:$0xff]
      %v5606 = vpack.c.bf16 %v5573, %v5572
      %v5607 = vpack.c.bf16 %v5575, %v5574
      %v5608 = vpack.c.bf16 %v5577, %v5576
      %v5609 = vpack.c.bf16 %v5579, %v5578
      %v5610 = vpack.c.bf16 %v5581, %v5580
      %v5611 = vpack.c.bf16 %v5583, %v5582
      %v5612 = vpack.c.bf16 %v5585, %v5584
      %v5613 = vpack.c.bf16 %v5587, %v5586
      %v5614 = vpack.c.bf16 %v5589, %v5588
      %v5615 = vpack.c.bf16 %v5591, %v5590
      %v5616 = vpack.c.bf16 %v5593, %v5592
      %v5617 = vpack.c.bf16 %v5595, %v5594
      %v5618 = vpack.c.bf16 %v5597, %v5596
      %v5619 = vpack.c.bf16 %v5599, %v5598
      %v5620 = vpack.c.bf16 %v5601, %v5600
      %v5621 = vpack.c.bf16 %v5603, %v5602
      %v5622 = vpack.c.bf16 %v5604, %v5604
      %v5623 = vpack.c.bf16 %v5574, %v5573
      %v5624 = vpack.c.bf16 %v5576, %v5575
      %v5625 = vpack.c.bf16 %v5578, %v5577
      %v5626 = vpack.c.bf16 %v5580, %v5579
      %v5627 = vpack.c.bf16 %v5582, %v5581
      %v5628 = vpack.c.bf16 %v5584, %v5583
      %v5629 = vpack.c.bf16 %v5586, %v5585
      %v5630 = vpack.c.bf16 %v5588, %v5587
      %v5631 = vpack.c.bf16 %v5590, %v5589
      %v5632 = vpack.c.bf16 %v5592, %v5591
      %v5633 = vpack.c.bf16 %v5594, %v5593
      %v5634 = vpack.c.bf16 %v5596, %v5595
      %v5635 = vpack.c.bf16 %v5598, %v5597
      %v5636 = vpack.c.bf16 %v5600, %v5599
      %v5637 = vpack.c.bf16 %v5602, %v5601
      %v5638 = vpack.c.bf16 %v5604, %v5603
      %v5639 = vpack.c.bf16 %v5605, %v5605
      %v5641 = vshrl.u32 %v5606, 16
      %v5643 = vshll.u32 %v5606, 16
      %v5645 = vrot.slane %v5643, 1
      %v5646 = vor.u32 %v5641, %v5645
      %v5648 = vshll.u32 %v5607, 16
      %v5650 = vrot.slane %v5648, 1
      %v5651 = vsel %vm1467, %v5646, %v5650
      %v5652 = vshrl.u32 %v5607, 16
      %v5654 = vor.u32 %v5652, %v5650
      %v5656 = vshll.u32 %v5608, 16
      %v5658 = vrot.slane %v5656, 1
      %v5659 = vsel %vm1467, %v5654, %v5658
      %v5660 = vshrl.u32 %v5608, 16
      %v5662 = vor.u32 %v5660, %v5658
      %v5664 = vshll.u32 %v5609, 16
      %v5666 = vrot.slane %v5664, 1
      %v5667 = vsel %vm1467, %v5662, %v5666
      %v5668 = vshrl.u32 %v5609, 16
      %v5670 = vor.u32 %v5668, %v5666
      %v5672 = vshll.u32 %v5610, 16
      %v5674 = vrot.slane %v5672, 1
      %v5675 = vsel %vm1467, %v5670, %v5674
      %v5676 = vshrl.u32 %v5610, 16
      %v5678 = vor.u32 %v5676, %v5674
      %v5680 = vshll.u32 %v5611, 16
      %v5682 = vrot.slane %v5680, 1
      %v5683 = vsel %vm1467, %v5678, %v5682
      %v5684 = vshrl.u32 %v5611, 16
      %v5686 = vor.u32 %v5684, %v5682
      %v5688 = vshll.u32 %v5612, 16
      %v5690 = vrot.slane %v5688, 1
      %v5691 = vsel %vm1467, %v5686, %v5690
      %v5692 = vshrl.u32 %v5612, 16
      %v5694 = vor.u32 %v5692, %v5690
      %v5696 = vshll.u32 %v5613, 16
      %v5698 = vrot.slane %v5696, 1
      %v5699 = vsel %vm1467, %v5694, %v5698
      %v5700 = vshrl.u32 %v5613, 16
      %v5702 = vor.u32 %v5700, %v5698
      %v5704 = vshll.u32 %v5614, 16
      %v5706 = vrot.slane %v5704, 1
      %v5707 = vsel %vm1467, %v5702, %v5706
      %v5708 = vshrl.u32 %v5614, 16
      %v5710 = vor.u32 %v5708, %v5706
      %v5712 = vshll.u32 %v5615, 16
      %v5714 = vrot.slane %v5712, 1
      %v5715 = vsel %vm1467, %v5710, %v5714
      %v5716 = vshrl.u32 %v5615, 16
      %v5718 = vor.u32 %v5716, %v5714
      %v5720 = vshll.u32 %v5616, 16
      %v5722 = vrot.slane %v5720, 1
      %v5723 = vsel %vm1467, %v5718, %v5722
      %v5724 = vshrl.u32 %v5616, 16
      %v5726 = vor.u32 %v5724, %v5722
      %v5728 = vshll.u32 %v5617, 16
      %v5730 = vrot.slane %v5728, 1
      %v5731 = vsel %vm1467, %v5726, %v5730
      %v5732 = vshrl.u32 %v5617, 16
      %v5734 = vor.u32 %v5732, %v5730
      %v5736 = vshll.u32 %v5618, 16
      %v5738 = vrot.slane %v5736, 1
      %v5739 = vsel %vm1467, %v5734, %v5738
      %v5740 = vshrl.u32 %v5618, 16
      %v5742 = vor.u32 %v5740, %v5738
      %v5744 = vshll.u32 %v5619, 16
      %v5746 = vrot.slane %v5744, 1
      %v5747 = vsel %vm1467, %v5742, %v5746
      %v5748 = vshrl.u32 %v5619, 16
      %v5750 = vor.u32 %v5748, %v5746
      %v5752 = vshll.u32 %v5620, 16
      %v5754 = vrot.slane %v5752, 1
      %v5755 = vsel %vm1467, %v5750, %v5754
      %v5756 = vshrl.u32 %v5620, 16
      %v5758 = vor.u32 %v5756, %v5754
      %v5760 = vshll.u32 %v5621, 16
      %v5762 = vrot.slane %v5760, 1
      %v5763 = vsel %vm1467, %v5758, %v5762
      %v5764 = vshrl.u32 %v5621, 16
      %v5766 = vor.u32 %v5764, %v5762
      %v5768 = vshll.u32 %v5622, 16
      %v5770 = vrot.slane %v5768, 1
      %v5771 = vsel %vm1467, %v5766, %v5770
      %v5772 = vshrl.u32 %v5622, 16
      %v5774 = vor.u32 %v5772, %v5770
      %5775 = vrot.lane.b32.xlu0 %v5651, 64
      %v5776 = vpop.permute.xlu0 %5775
      %5777 = vrot.lane.b32.xlu0 %v5659, 64
      %v5778 = vpop.permute.xlu0 %5777
      %5779 = vrot.lane.b32.xlu0 %v5667, 64
      %v5780 = vpop.permute.xlu0 %5779
      %5781 = vrot.lane.b32.xlu0 %v5675, 64
      %v5782 = vpop.permute.xlu0 %5781
      %5783 = vrot.lane.b32.xlu0 %v5683, 64
      %v5784 = vpop.permute.xlu0 %5783
      %5785 = vrot.lane.b32.xlu0 %v5691, 64
      %v5786 = vpop.permute.xlu0 %5785
      %5787 = vrot.lane.b32.xlu0 %v5699, 64
      %v5788 = vpop.permute.xlu0 %5787
      %5789 = vrot.lane.b32.xlu0 %v5707, 64
      %v5790 = vpop.permute.xlu0 %5789
      %5791 = vrot.lane.b32.xlu0 %v5715, 64
      %v5792 = vpop.permute.xlu0 %5791
      %5793 = vrot.lane.b32.xlu0 %v5723, 64
      %v5794 = vpop.permute.xlu0 %5793
      %5795 = vrot.lane.b32.xlu0 %v5731, 64
      %v5796 = vpop.permute.xlu0 %5795
      %5797 = vrot.lane.b32.xlu0 %v5739, 64
      %v5798 = vpop.permute.xlu0 %5797
      %5799 = vrot.lane.b32.xlu0 %v5747, 64
      %v5800 = vpop.permute.xlu0 %5799
      %5801 = vrot.lane.b32.xlu0 %v5755, 64
      %v5802 = vpop.permute.xlu0 %5801
      %5803 = vrot.lane.b32.xlu0 %v5763, 64
      %v5804 = vpop.permute.xlu0 %5803
      %5805 = vrot.lane.b32.xlu0 %v5771, 64
      %v5806 = vpop.permute.xlu0 %5805
      %5807 = vrot.lane.b32.xlu0 %v5774, 64
      %v5808 = vpop.permute.xlu0 %5807
      %v5825 = vrot.slane %v5623, 5
      %v5826 = vrot.slane %v5624, 5
      %v5827 = vsel %vm1653, %v5825, %v5826
      %v5828 = vrot.slane %v5625, 5
      %v5829 = vsel %vm1653, %v5826, %v5828
      %v5830 = vrot.slane %v5626, 5
      %v5831 = vsel %vm1653, %v5828, %v5830
      %v5832 = vrot.slane %v5627, 5
      %v5833 = vsel %vm1653, %v5830, %v5832
      %v5834 = vrot.slane %v5628, 5
      %v5835 = vsel %vm1653, %v5832, %v5834
      %v5836 = vrot.slane %v5629, 5
      %v5837 = vsel %vm1653, %v5834, %v5836
      %v5838 = vrot.slane %v5630, 5
      %v5839 = vsel %vm1653, %v5836, %v5838
      %v5840 = vrot.slane %v5631, 5
      %v5841 = vsel %vm1653, %v5838, %v5840
      %v5842 = vrot.slane %v5632, 5
      %v5843 = vsel %vm1653, %v5840, %v5842
      %v5844 = vrot.slane %v5633, 5
      %v5845 = vsel %vm1653, %v5842, %v5844
      %v5846 = vrot.slane %v5634, 5
      %v5847 = vsel %vm1653, %v5844, %v5846
      %v5848 = vrot.slane %v5635, 5
      %v5849 = vsel %vm1653, %v5846, %v5848
      %v5850 = vrot.slane %v5636, 5
      %v5851 = vsel %vm1653, %v5848, %v5850
      %v5852 = vrot.slane %v5637, 5
      %v5853 = vsel %vm1653, %v5850, %v5852
      %v5854 = vrot.slane %v5638, 5
      %v5855 = vsel %vm1653, %v5852, %v5854
      %v5857 = vshrl.u32 %v5623, 16
      %v5859 = vrot.slane %v5857, 5
      %v5860 = vshll.u32 %v5623, 16
      %v5862 = vrot.slane %v5860, 6
      %v5863 = vor.u32 %v5859, %v5862
      %v5865 = vshrl.u32 %v5624, 16
      %v5867 = vrot.slane %v5865, 5
      %v5868 = vshll.u32 %v5624, 16
      %v5870 = vrot.slane %v5868, 6
      %v5871 = vor.u32 %v5867, %v5870
      %v5872 = vsel %vm1685, %v5863, %v5871
      %v5874 = vshrl.u32 %v5625, 16
      %v5876 = vrot.slane %v5874, 5
      %v5877 = vshll.u32 %v5625, 16
      %v5879 = vrot.slane %v5877, 6
      %v5880 = vor.u32 %v5876, %v5879
      %v5881 = vsel %vm1685, %v5871, %v5880
      %v5883 = vshrl.u32 %v5626, 16
      %v5885 = vrot.slane %v5883, 5
      %v5886 = vshll.u32 %v5626, 16
      %v5888 = vrot.slane %v5886, 6
      %v5889 = vor.u32 %v5885, %v5888
      %v5890 = vsel %vm1685, %v5880, %v5889
      %v5892 = vshrl.u32 %v5627, 16
      %v5894 = vrot.slane %v5892, 5
      %v5895 = vshll.u32 %v5627, 16
      %v5897 = vrot.slane %v5895, 6
      %v5898 = vor.u32 %v5894, %v5897
      %v5899 = vsel %vm1685, %v5889, %v5898
      %v5901 = vshrl.u32 %v5628, 16
      %v5903 = vrot.slane %v5901, 5
      %v5904 = vshll.u32 %v5628, 16
      %v5906 = vrot.slane %v5904, 6
      %v5907 = vor.u32 %v5903, %v5906
      %v5908 = vsel %vm1685, %v5898, %v5907
      %v5910 = vshrl.u32 %v5629, 16
      %v5912 = vrot.slane %v5910, 5
      %v5913 = vshll.u32 %v5629, 16
      %v5915 = vrot.slane %v5913, 6
      %v5916 = vor.u32 %v5912, %v5915
      %v5917 = vsel %vm1685, %v5907, %v5916
      %v5919 = vshrl.u32 %v5630, 16
      %v5921 = vrot.slane %v5919, 5
      %v5922 = vshll.u32 %v5630, 16
      %v5924 = vrot.slane %v5922, 6
      %v5925 = vor.u32 %v5921, %v5924
      %v5926 = vsel %vm1685, %v5916, %v5925
      %v5928 = vshrl.u32 %v5631, 16
      %v5930 = vrot.slane %v5928, 5
      %v5931 = vshll.u32 %v5631, 16
      %v5933 = vrot.slane %v5931, 6
      %v5934 = vor.u32 %v5930, %v5933
      %v5935 = vsel %vm1685, %v5925, %v5934
      %v5937 = vshrl.u32 %v5632, 16
      %v5939 = vrot.slane %v5937, 5
      %v5940 = vshll.u32 %v5632, 16
      %v5942 = vrot.slane %v5940, 6
      %v5943 = vor.u32 %v5939, %v5942
      %v5944 = vsel %vm1685, %v5934, %v5943
      %v5946 = vshrl.u32 %v5633, 16
      %v5948 = vrot.slane %v5946, 5
      %v5949 = vshll.u32 %v5633, 16
      %v5951 = vrot.slane %v5949, 6
      %v5952 = vor.u32 %v5948, %v5951
      %v5953 = vsel %vm1685, %v5943, %v5952
      %v5955 = vshrl.u32 %v5634, 16
      %v5957 = vrot.slane %v5955, 5
      %v5958 = vshll.u32 %v5634, 16
      %v5960 = vrot.slane %v5958, 6
      %v5961 = vor.u32 %v5957, %v5960
      %v5962 = vsel %vm1685, %v5952, %v5961
      %v5964 = vshrl.u32 %v5635, 16
      %v5966 = vrot.slane %v5964, 5
      %v5967 = vshll.u32 %v5635, 16
      %v5969 = vrot.slane %v5967, 6
      %v5970 = vor.u32 %v5966, %v5969
      %v5971 = vsel %vm1685, %v5961, %v5970
      %v5973 = vshrl.u32 %v5636, 16
      %v5975 = vrot.slane %v5973, 5
      %v5976 = vshll.u32 %v5636, 16
      %v5978 = vrot.slane %v5976, 6
      %v5979 = vor.u32 %v5975, %v5978
      %v5980 = vsel %vm1685, %v5970, %v5979
      %v5982 = vshrl.u32 %v5637, 16
      %v5984 = vrot.slane %v5982, 5
      %v5985 = vshll.u32 %v5637, 16
      %v5987 = vrot.slane %v5985, 6
      %v5988 = vor.u32 %v5984, %v5987
      %v5989 = vsel %vm1685, %v5979, %v5988
      %v5991 = vshrl.u32 %v5638, 16
      %v5993 = vrot.slane %v5991, 5
      %v5994 = vshll.u32 %v5638, 16
      %v5996 = vrot.slane %v5994, 6
      %v5997 = vor.u32 %v5993, %v5996
      %v5998 = vsel %vm1685, %v5988, %v5997
      %v6000 = vshll.u32 %v5639, 16
      %v6002 = vrot.slane %v6000, 6
      %v6003 = vsel %vm1685, %v5997, %v6002
      %6004 = vrot.lane.b32.xlu0 %v5863, 64
      %v6005 = vpop.permute.xlu0 %6004
      %6006 = vrot.lane.b32.xlu0 %v5872, 64
      %v6007 = vpop.permute.xlu0 %6006
      %6008 = vrot.lane.b32.xlu0 %v5881, 64
      %v6009 = vpop.permute.xlu0 %6008
      %6010 = vrot.lane.b32.xlu0 %v5890, 64
      %v6011 = vpop.permute.xlu0 %6010
      %6012 = vrot.lane.b32.xlu0 %v5899, 64
      %v6013 = vpop.permute.xlu0 %6012
      %6014 = vrot.lane.b32.xlu0 %v5908, 64
      %v6015 = vpop.permute.xlu0 %6014
      %6016 = vrot.lane.b32.xlu0 %v5917, 64
      %v6017 = vpop.permute.xlu0 %6016
      %6018 = vrot.lane.b32.xlu0 %v5926, 64
      %v6019 = vpop.permute.xlu0 %6018
      %6020 = vrot.lane.b32.xlu0 %v5935, 64
      %v6021 = vpop.permute.xlu0 %6020
      %6022 = vrot.lane.b32.xlu0 %v5944, 64
      %v6023 = vpop.permute.xlu0 %6022
      %6024 = vrot.lane.b32.xlu0 %v5953, 64
      %v6025 = vpop.permute.xlu0 %6024
      %6026 = vrot.lane.b32.xlu0 %v5962, 64
      %v6027 = vpop.permute.xlu0 %6026
      %6028 = vrot.lane.b32.xlu0 %v5971, 64
      %v6029 = vpop.permute.xlu0 %6028
      %6030 = vrot.lane.b32.xlu0 %v5980, 64
      %v6031 = vpop.permute.xlu0 %6030
      %6032 = vrot.lane.b32.xlu0 %v5989, 64
      %v6033 = vpop.permute.xlu0 %6032
      %6034 = vrot.lane.b32.xlu0 %v5998, 64
      %v6035 = vpop.permute.xlu0 %6034
      %6036 = vrot.lane.b32.xlu0 %v6003, 64
      %v6037 = vpop.permute.xlu0 %6036
      %v6039 = vrot.slane %v5623, 6
      %v6040 = vrot.slane %v5624, 6
      %v6041 = vsel %vm1869, %v6039, %v6040
      %v6042 = vrot.slane %v5625, 6
      %v6043 = vsel %vm1869, %v6040, %v6042
      %v6044 = vrot.slane %v5626, 6
      %v6045 = vsel %vm1869, %v6042, %v6044
      %v6046 = vrot.slane %v5627, 6
      %v6047 = vsel %vm1869, %v6044, %v6046
      %v6048 = vrot.slane %v5628, 6
      %v6049 = vsel %vm1869, %v6046, %v6048
      %v6050 = vrot.slane %v5629, 6
      %v6051 = vsel %vm1869, %v6048, %v6050
      %v6052 = vrot.slane %v5630, 6
      %v6053 = vsel %vm1869, %v6050, %v6052
      %v6054 = vrot.slane %v5631, 6
      %v6055 = vsel %vm1869, %v6052, %v6054
      %v6056 = vrot.slane %v5632, 6
      %v6057 = vsel %vm1869, %v6054, %v6056
      %v6058 = vrot.slane %v5633, 6
      %v6059 = vsel %vm1869, %v6056, %v6058
      %v6060 = vrot.slane %v5634, 6
      %v6061 = vsel %vm1869, %v6058, %v6060
      %v6062 = vrot.slane %v5635, 6
      %v6063 = vsel %vm1869, %v6060, %v6062
      %v6064 = vrot.slane %v5636, 6
      %v6065 = vsel %vm1869, %v6062, %v6064
      %v6066 = vrot.slane %v5637, 6
      %v6067 = vsel %vm1869, %v6064, %v6066
      %v6068 = vrot.slane %v5638, 6
      %v6069 = vsel %vm1869, %v6066, %v6068
      %v6070 = vrot.slane %v5639, 6
      %v6071 = vsel %vm1869, %v6068, %v6070
      %v6073 = vsel %vm569, %v5606, %v5776
      %v6075 = vsel %vm569, %v5607, %v5778
      %v6077 = vsel %vm569, %v5608, %v5780
      %v6079 = vsel %vm569, %v5609, %v5782
      %v6081 = vsel %vm569, %v5610, %v5784
      %v6083 = vsel %vm569, %v5611, %v5786
      %v6085 = vsel %vm569, %v5612, %v5788
      %v6087 = vsel %vm569, %v5613, %v5790
      %v6089 = vsel %vm569, %v5614, %v5792
      %v6091 = vsel %vm569, %v5615, %v5794
      %v6093 = vsel %vm569, %v5616, %v5796
      %v6095 = vsel %vm569, %v5617, %v5798
      %v6097 = vsel %vm569, %v5618, %v5800
      %v6099 = vsel %vm569, %v5619, %v5802
      %v6101 = vsel %vm569, %v5620, %v5804
      %v6103 = vsel %vm569, %v5621, %v5806
      %v6105 = vsel %vm569, %v5622, %v5808
      %v6108 = vsel %vm569, %v5825, %v6005
      %v6111 = vsel %vm569, %v5827, %v6007
      %v6114 = vsel %vm569, %v5829, %v6009
      %v6117 = vsel %vm569, %v5831, %v6011
      %v6120 = vsel %vm569, %v5833, %v6013
      %v6123 = vsel %vm569, %v5835, %v6015
      %v6126 = vsel %vm569, %v5837, %v6017
      %v6129 = vsel %vm569, %v5839, %v6019
      %v6132 = vsel %vm569, %v5841, %v6021
      %v6135 = vsel %vm569, %v5843, %v6023
      %v6138 = vsel %vm569, %v5845, %v6025
      %v6141 = vsel %vm569, %v5847, %v6027
      %v6144 = vsel %vm569, %v5849, %v6029
      %v6147 = vsel %vm569, %v5851, %v6031
      %v6150 = vsel %vm569, %v5853, %v6033
      %v6153 = vsel %vm569, %v5855, %v6035
      %v6156 = vsel %vm569, %v5854, %v6037
      %v6191 = vrot.slane %v6073, 3
      %v6192 = vrot.slane %v6075, 3
      %v6193 = vsel %vm2069, %v6191, %v6192
      %v6194 = vrot.slane %v6108, 3
      %v6195 = vrot.slane %v6111, 3
      %v6196 = vsel %vm2069, %v6194, %v6195
      %v6197 = vrot.slane %v6039, 3
      %v6198 = vrot.slane %v6041, 3
      %v6199 = vsel %vm2069, %v6197, %v6198
      %v6200 = vrot.slane %v6077, 3
      %v6201 = vsel %vm2069, %v6192, %v6200
      %v6202 = vrot.slane %v6114, 3
      %v6203 = vsel %vm2069, %v6195, %v6202
      %v6204 = vrot.slane %v6043, 3
      %v6205 = vsel %vm2069, %v6198, %v6204
      %v6206 = vrot.slane %v6079, 3
      %v6207 = vsel %vm2069, %v6200, %v6206
      %v6208 = vrot.slane %v6117, 3
      %v6209 = vsel %vm2069, %v6202, %v6208
      %v6210 = vrot.slane %v6045, 3
      %v6211 = vsel %vm2069, %v6204, %v6210
      %v6212 = vrot.slane %v6081, 3
      %v6213 = vsel %vm2069, %v6206, %v6212
      %v6214 = vrot.slane %v6120, 3
      %v6215 = vsel %vm2069, %v6208, %v6214
      %v6216 = vrot.slane %v6047, 3
      %v6217 = vsel %vm2069, %v6210, %v6216
      %v6218 = vrot.slane %v6083, 3
      %v6219 = vsel %vm2069, %v6212, %v6218
      %v6220 = vrot.slane %v6123, 3
      %v6221 = vsel %vm2069, %v6214, %v6220
      %v6222 = vrot.slane %v6049, 3
      %v6223 = vsel %vm2069, %v6216, %v6222
      %v6224 = vrot.slane %v6085, 3
      %v6225 = vsel %vm2069, %v6218, %v6224
      %v6226 = vrot.slane %v6126, 3
      %v6227 = vsel %vm2069, %v6220, %v6226
      %v6228 = vrot.slane %v6051, 3
      %v6229 = vsel %vm2069, %v6222, %v6228
      %v6230 = vrot.slane %v6087, 3
      %v6231 = vsel %vm2069, %v6224, %v6230
      %v6232 = vrot.slane %v6129, 3
      %v6233 = vsel %vm2069, %v6226, %v6232
      %v6234 = vrot.slane %v6053, 3
      %v6235 = vsel %vm2069, %v6228, %v6234
      %v6236 = vrot.slane %v6089, 3
      %v6237 = vsel %vm2069, %v6230, %v6236
      %v6238 = vrot.slane %v6132, 3
      %v6239 = vsel %vm2069, %v6232, %v6238
      %v6240 = vrot.slane %v6055, 3
      %v6241 = vsel %vm2069, %v6234, %v6240
      %v6242 = vrot.slane %v6091, 3
      %v6243 = vsel %vm2069, %v6236, %v6242
      %v6244 = vrot.slane %v6135, 3
      %v6245 = vsel %vm2069, %v6238, %v6244
      %v6246 = vrot.slane %v6057, 3
      %v6247 = vsel %vm2069, %v6240, %v6246
      %v6248 = vrot.slane %v6093, 3
      %v6249 = vsel %vm2069, %v6242, %v6248
      %v6250 = vrot.slane %v6138, 3
      %v6251 = vsel %vm2069, %v6244, %v6250
      %v6252 = vrot.slane %v6059, 3
      %v6253 = vsel %vm2069, %v6246, %v6252
      %v6254 = vrot.slane %v6095, 3
      %v6255 = vsel %vm2069, %v6248, %v6254
      %v6256 = vrot.slane %v6141, 3
      %v6257 = vsel %vm2069, %v6250, %v6256
      %v6258 = vrot.slane %v6061, 3
      %v6259 = vsel %vm2069, %v6252, %v6258
      %v6260 = vrot.slane %v6097, 3
      %v6261 = vsel %vm2069, %v6254, %v6260
      %v6262 = vrot.slane %v6144, 3
      %v6263 = vsel %vm2069, %v6256, %v6262
      %v6264 = vrot.slane %v6063, 3
      %v6265 = vsel %vm2069, %v6258, %v6264
      %v6266 = vrot.slane %v6099, 3
      %v6267 = vsel %vm2069, %v6260, %v6266
      %v6268 = vrot.slane %v6147, 3
      %v6269 = vsel %vm2069, %v6262, %v6268
      %v6270 = vrot.slane %v6065, 3
      %v6271 = vsel %vm2069, %v6264, %v6270
      %v6272 = vrot.slane %v6101, 3
      %v6273 = vsel %vm2069, %v6266, %v6272
      %v6274 = vrot.slane %v6150, 3
      %v6275 = vsel %vm2069, %v6268, %v6274
      %v6276 = vrot.slane %v6067, 3
      %v6277 = vsel %vm2069, %v6270, %v6276
      %v6278 = vrot.slane %v6103, 3
      %v6279 = vsel %vm2069, %v6272, %v6278
      %v6280 = vrot.slane %v6153, 3
      %v6281 = vsel %vm2069, %v6274, %v6280
      %v6282 = vrot.slane %v6069, 3
      %v6283 = vsel %vm2069, %v6276, %v6282
      %v6284 = vrot.slane %v6105, 3
      %v6285 = vsel %vm2069, %v6278, %v6284
      %v6286 = vrot.slane %v6156, 3
      %v6287 = vsel %vm2069, %v6280, %v6286
      %v6288 = vrot.slane %v6071, 3
      %v6289 = vsel %vm2069, %v6282, %v6288
      %v6323 = vsel %vm569, %v6199, 0
      %v6326 = vsel %vm569, %v6205, 0
      %v6329 = vsel %vm569, %v6211, 0
      %v6332 = vsel %vm569, %v6217, 0
      %v6335 = vsel %vm569, %v6223, 0
      %v6338 = vsel %vm569, %v6229, 0
      %v6341 = vsel %vm569, %v6235, 0
      %v6344 = vsel %vm569, %v6241, 0
      %v6347 = vsel %vm569, %v6247, 0
      %v6350 = vsel %vm569, %v6253, 0
      %v6353 = vsel %vm569, %v6259, 0
      %v6356 = vsel %vm569, %v6265, 0
      %v6359 = vsel %vm569, %v6271, 0
      %v6362 = vsel %vm569, %v6277, 0
      %v6365 = vsel %vm569, %v6283, 0
      %v6368 = vsel %vm569, %v6289, 0
      %6370 = vmatprep.subr.bf16.mxu0 0
      %6371 = vmatpush1.bf16.msra.mxu0 %v4983
      %6372 = vmatprep.subr.bf16.mxu0 0
      %6373 = vmatpush1.bf16.msra.mxu0 %v4984
      %6374 = vmatprep.subr.bf16.mxu0 0
      %6375 = vmatpush1.bf16.msra.mxu0 %v4985
      %6376 = vmatprep.subr.bf16.mxu0 0
      %6377 = vmatpush1.bf16.msra.mxu0 %v4986
      %6378 = vmatprep.subr.bf16.mxu0 0
      %6379 = vmatpush1.bf16.msra.mxu0 %v4987
      %6380 = vmatprep.subr.bf16.mxu0 0
      %6381 = vmatpush1.bf16.msra.mxu0 %v4988
      %6382 = vmatprep.subr.bf16.mxu0 0
      %6383 = vmatpush1.bf16.msra.mxu0 %v4989
      %6384 = vmatprep.subr.bf16.mxu0 0
      %6385 = vmatpush1.bf16.msra.mxu0 %v4990
      %6386 = vmatprep.subr.bf16.mxu0 0
      %6387 = vmatpush1.bf16.msra.mxu0 %v4991
      %6388 = vmatprep.subr.bf16.mxu0 0
      %6389 = vmatpush1.bf16.msra.mxu0 %v4992
      %6390 = vmatprep.subr.bf16.mxu0 0
      %6391 = vmatpush1.bf16.msra.mxu0 %v4993
      %6392 = vmatprep.subr.bf16.mxu0 0
      %6393 = vmatpush1.bf16.msra.mxu0 %v4994
      %6394 = vmatprep.subr.bf16.mxu0 0
      %6395 = vmatpush1.bf16.msra.mxu0 %v4995
      %6396 = vmatprep.subr.bf16.mxu0 0
      %6397 = vmatpush1.bf16.msra.mxu0 %v4996
      %6398 = vmatprep.subr.bf16.mxu0 0
      %6399 = vmatpush1.bf16.msra.mxu0 %v4997
      %6400 = vmatprep.subr.bf16.mxu0 0
      %6401 = vmatpush1.bf16.msra.mxu0 %v4998
      %6402 = vmatprep.mubr.bf16.mxu0 %v6196
      %6403 = vmatmul.mubr.bf16.gmra.mrb[0].mxu0 %v6193
      %v6404 = vpop.f32.mrb[0].mxu0
      %v6405 = vadd.f32 %v4736, %v6404
      %v6406 = vpop.f32.mrb[0].mxu0
      %v6407 = vpop.f32.mrb[0].mxu0
      %v6408 = vadd.f32 %v4736, %v6407
      %v6409 = vpop.f32.mrb[0].mxu0
      %6410 = vmatprep.mubr.bf16.mxu0 %v6203
      %6411 = vmatmul.mubr.bf16.gmra.mrb[0].mxu0 %v6201
      %v6412 = vpop.f32.mrb[0].mxu0
      %v6413 = vadd.f32 %v4736, %v6412
      %v6414 = vpop.f32.mrb[0].mxu0
      %v6415 = vpop.f32.mrb[0].mxu0
      %v6416 = vadd.f32 %v4736, %v6415
      %v6417 = vpop.f32.mrb[0].mxu0
      %6418 = vmatprep.mubr.bf16.mxu0 %v6209
      %6419 = vmatmul.mubr.bf16.gmra.mrb[0].mxu0 %v6207
      %v6420 = vpop.f32.mrb[0].mxu0
      %v6421 = vadd.f32 %v4736, %v6420
      %v6422 = vpop.f32.mrb[0].mxu0
      %v6423 = vpop.f32.mrb[0].mxu0
      %v6424 = vadd.f32 %v4736, %v6423
      %v6425 = vpop.f32.mrb[0].mxu0
      %6426 = vmatprep.mubr.bf16.mxu0 %v6215
      %6427 = vmatmul.mubr.bf16.gmra.mrb[0].mxu0 %v6213
      %v6428 = vpop.f32.mrb[0].mxu0
      %v6429 = vadd.f32 %v4736, %v6428
      %v6430 = vpop.f32.mrb[0].mxu0
      %v6431 = vpop.f32.mrb[0].mxu0
      %v6432 = vadd.f32 %v4736, %v6431
      %v6433 = vpop.f32.mrb[0].mxu0
      %6434 = vmatprep.mubr.bf16.mxu0 %v6221
      %6435 = vmatmul.mubr.bf16.gmra.mrb[0].mxu0 %v6219
      %v6436 = vpop.f32.mrb[0].mxu0
      %v6437 = vadd.f32 %v4736, %v6436
      %v6438 = vpop.f32.mrb[0].mxu0
      %v6439 = vpop.f32.mrb[0].mxu0
      %v6440 = vadd.f32 %v4736, %v6439
      %v6441 = vpop.f32.mrb[0].mxu0
      %6442 = vmatprep.mubr.bf16.mxu0 %v6227
      %6443 = vmatmul.mubr.bf16.gmra.mrb[0].mxu0 %v6225
      %v6444 = vpop.f32.mrb[0].mxu0
      %v6445 = vadd.f32 %v4736, %v6444
      %v6446 = vpop.f32.mrb[0].mxu0
      %v6447 = vpop.f32.mrb[0].mxu0
      %v6448 = vadd.f32 %v4736, %v6447
      %v6449 = vpop.f32.mrb[0].mxu0
      %6450 = vmatprep.mubr.bf16.mxu0 %v6233
      %6451 = vmatmul.mubr.bf16.gmra.mrb[0].mxu0 %v6231
      %v6452 = vpop.f32.mrb[0].mxu0
      %v6453 = vadd.f32 %v4736, %v6452
      %v6454 = vpop.f32.mrb[0].mxu0
      %v6455 = vpop.f32.mrb[0].mxu0
      %v6456 = vadd.f32 %v4736, %v6455
      %v6457 = vpop.f32.mrb[0].mxu0
      %6458 = vmatprep.mubr.bf16.mxu0 %v6239
      %6459 = vmatmul.mubr.bf16.gmra.mrb[0].mxu0 %v6237
      %v6460 = vpop.f32.mrb[0].mxu0
      %v6461 = vadd.f32 %v4736, %v6460
      %v6462 = vpop.f32.mrb[0].mxu0
      %v6463 = vpop.f32.mrb[0].mxu0
      %v6464 = vadd.f32 %v4736, %v6463
      %v6465 = vpop.f32.mrb[0].mxu0
      %6466 = vmatprep.mubr.bf16.mxu0 %v6245
      %6467 = vmatmul.mubr.bf16.gmra.mrb[0].mxu0 %v6243
      %v6468 = vpop.f32.mrb[0].mxu0
      %v6469 = vadd.f32 %v4736, %v6468
      %v6470 = vpop.f32.mrb[0].mxu0
      %v6471 = vpop.f32.mrb[0].mxu0
      %v6472 = vadd.f32 %v4736, %v6471
      %v6473 = vpop.f32.mrb[0].mxu0
      %6474 = vmatprep.mubr.bf16.mxu0 %v6251
      %6475 = vmatmul.mubr.bf16.gmra.mrb[0].mxu0 %v6249
      %v6476 = vpop.f32.mrb[0].mxu0
      %v6477 = vadd.f32 %v4736, %v6476
      %v6478 = vpop.f32.mrb[0].mxu0
      %v6479 = vpop.f32.mrb[0].mxu0
      %v6480 = vadd.f32 %v4736, %v6479
      %v6481 = vpop.f32.mrb[0].mxu0
      %6482 = vmatprep.mubr.bf16.mxu0 %v6257
      %6483 = vmatmul.mubr.bf16.gmra.mrb[0].mxu0 %v6255
      %v6484 = vpop.f32.mrb[0].mxu0
      %v6485 = vadd.f32 %v4736, %v6484
      %v6486 = vpop.f32.mrb[0].mxu0
      %v6487 = vpop.f32.mrb[0].mxu0
      %v6488 = vadd.f32 %v4736, %v6487
      %v6489 = vpop.f32.mrb[0].mxu0
      %6490 = vmatprep.mubr.bf16.mxu0 %v6263
      %6491 = vmatmul.mubr.bf16.gmra.mrb[0].mxu0 %v6261
      %v6492 = vpop.f32.mrb[0].mxu0
      %v6493 = vadd.f32 %v4736, %v6492
      %v6494 = vpop.f32.mrb[0].mxu0
      %v6495 = vpop.f32.mrb[0].mxu0
      %v6496 = vadd.f32 %v4736, %v6495
      %v6497 = vpop.f32.mrb[0].mxu0
      %6498 = vmatprep.mubr.bf16.mxu0 %v6269
      %6499 = vmatmul.mubr.bf16.gmra.mrb[0].mxu0 %v6267
      %v6500 = vpop.f32.mrb[0].mxu0
      %v6501 = vadd.f32 %v4736, %v6500
      %v6502 = vpop.f32.mrb[0].mxu0
      %v6503 = vpop.f32.mrb[0].mxu0
      %v6504 = vadd.f32 %v4736, %v6503
      %v6505 = vpop.f32.mrb[0].mxu0
      %6506 = vmatprep.mubr.bf16.mxu0 %v6275
      %6507 = vmatmul.mubr.bf16.gmra.mrb[0].mxu0 %v6273
      %v6508 = vpop.f32.mrb[0].mxu0
      %v6509 = vadd.f32 %v4736, %v6508
      %v6510 = vpop.f32.mrb[0].mxu0
      %v6511 = vpop.f32.mrb[0].mxu0
      %v6512 = vadd.f32 %v4736, %v6511
      %v6513 = vpop.f32.mrb[0].mxu0
      %6514 = vmatprep.mubr.bf16.mxu0 %v6281
      %6515 = vmatmul.mubr.bf16.gmra.mrb[0].mxu0 %v6279
      %v6516 = vpop.f32.mrb[0].mxu0
      %v6517 = vadd.f32 %v4736, %v6516
      %v6518 = vpop.f32.mrb[0].mxu0
      %v6519 = vpop.f32.mrb[0].mxu0
      %v6520 = vadd.f32 %v4736, %v6519
      %v6521 = vpop.f32.mrb[0].mxu0
      %6522 = vmatprep.mubr.bf16.mxu0 %v6287
      %6523 = vmatmul.mubr.bf16.gmra.mrb[0].mxu0 %v6285
      %v6524 = vpop.f32.mrb[0].mxu0
      %v6525 = vadd.f32 %v4736, %v6524
      %v6526 = vpop.f32.mrb[0].mxu0
      %v6527 = vpop.f32.mrb[0].mxu0
      %v6528 = vadd.f32 %v4736, %v6527
      %v6529 = vpop.f32.mrb[0].mxu0
      %6530 = vdwg.mxu0
      %6531 = vmatprep.subr.bf16.mxu0 0
      %6532 = vmatpush1.bf16.msra.mxu0 %v4999
      %6533 = vmatprep.subr.bf16.mxu0 0
      %6534 = vmatpush1.bf16.msra.mxu0 %v5000
      %6535 = vmatprep.subr.bf16.mxu0 0
      %6536 = vmatpush1.bf16.msra.mxu0 %v5001
      %6537 = vmatprep.subr.bf16.mxu0 0
      %6538 = vmatpush1.bf16.msra.mxu0 %v5002
      %6539 = vmatprep.subr.bf16.mxu0 0
      %6540 = vmatpush1.bf16.msra.mxu0 0
      %6541 = vmatprep.subr.bf16.mxu0 0
      %6542 = vmatpush1.bf16.msra.mxu0 0
      %6543 = vmatprep.subr.bf16.mxu0 0
      %6544 = vmatpush1.bf16.msra.mxu0 0
      %6545 = vmatprep.subr.bf16.mxu0 0
      %6546 = vmatpush1.bf16.msra.mxu0 0
      %6547 = vmatprep.subr.bf16.mxu0 0
      %6548 = vmatpush1.bf16.msra.mxu0 0
      %6549 = vmatprep.subr.bf16.mxu0 0
      %6550 = vmatpush1.bf16.msra.mxu0 0
      %6551 = vmatprep.subr.bf16.mxu0 0
      %6552 = vmatpush1.bf16.msra.mxu0 0
      %6553 = vmatprep.subr.bf16.mxu0 0
      %6554 = vmatpush1.bf16.msra.mxu0 0
      %6555 = vmatprep.subr.bf16.mxu0 0
      %6556 = vmatpush1.bf16.msra.mxu0 0
      %6557 = vmatprep.subr.bf16.mxu0 0
      %6558 = vmatpush1.bf16.msra.mxu0 0
      %6559 = vmatprep.subr.bf16.mxu0 0
      %6560 = vmatpush1.bf16.msra.mxu0 0
      %6561 = vmatprep.subr.bf16.mxu0 0
      %6562 = vmatpush1.bf16.msra.mxu0 0
      %6563 = vmatprep.mubr.bf16.mxu0 0
      %6564 = vmatmul.mubr.bf16.gmra.mrb[0].mxu0 %v6323
      %v6565 = vpop.f32.mrb[0].mxu0
      %v6566 = vadd.f32 %v6405, %v6565
      %v6567 = vpop.f32.mrb[0].mxu0
      %v6568 = vpop.f32.mrb[0].mxu0
      %v6569 = vadd.f32 %v6408, %v6568
      %v6570 = vpop.f32.mrb[0].mxu0
      %6571 = vmatprep.mubr.bf16.mxu0 0
      %6572 = vmatmul.mubr.bf16.gmra.mrb[0].mxu0 %v6326
      %v6573 = vpop.f32.mrb[0].mxu0
      %v6574 = vadd.f32 %v6413, %v6573
      %v6575 = vpop.f32.mrb[0].mxu0
      %v6576 = vpop.f32.mrb[0].mxu0
      %v6577 = vadd.f32 %v6416, %v6576
      %v6578 = vpop.f32.mrb[0].mxu0
      %6579 = vmatprep.mubr.bf16.mxu0 0
      %6580 = vmatmul.mubr.bf16.gmra.mrb[0].mxu0 %v6329
      %v6581 = vpop.f32.mrb[0].mxu0
      %v6582 = vadd.f32 %v6421, %v6581
      %v6583 = vpop.f32.mrb[0].mxu0
      %v6584 = vpop.f32.mrb[0].mxu0
      %v6585 = vadd.f32 %v6424, %v6584
      %v6586 = vpop.f32.mrb[0].mxu0
      %6587 = vmatprep.mubr.bf16.mxu0 0
      %6588 = vmatmul.mubr.bf16.gmra.mrb[0].mxu0 %v6332
      %v6589 = vpop.f32.mrb[0].mxu0
      %v6590 = vadd.f32 %v6429, %v6589
      %v6591 = vpop.f32.mrb[0].mxu0
      %v6592 = vpop.f32.mrb[0].mxu0
      %v6593 = vadd.f32 %v6432, %v6592
      %v6594 = vpop.f32.mrb[0].mxu0
      %6595 = vmatprep.mubr.bf16.mxu0 0
      %6596 = vmatmul.mubr.bf16.gmra.mrb[0].mxu0 %v6335
      %v6597 = vpop.f32.mrb[0].mxu0
      %v6598 = vadd.f32 %v6437, %v6597
      %v6599 = vpop.f32.mrb[0].mxu0
      %v6600 = vpop.f32.mrb[0].mxu0
      %v6601 = vadd.f32 %v6440, %v6600
      %v6602 = vpop.f32.mrb[0].mxu0
      %6603 = vmatprep.mubr.bf16.mxu0 0
      %6604 = vmatmul.mubr.bf16.gmra.mrb[0].mxu0 %v6338
      %v6605 = vpop.f32.mrb[0].mxu0
      %v6606 = vadd.f32 %v6445, %v6605
      %v6607 = vpop.f32.mrb[0].mxu0
      %v6608 = vpop.f32.mrb[0].mxu0
      %v6609 = vadd.f32 %v6448, %v6608
      %v6610 = vpop.f32.mrb[0].mxu0
      %6611 = vmatprep.mubr.bf16.mxu0 0
      %6612 = vmatmul.mubr.bf16.gmra.mrb[0].mxu0 %v6341
      %v6613 = vpop.f32.mrb[0].mxu0
      %v6614 = vadd.f32 %v6453, %v6613
      %v6615 = vpop.f32.mrb[0].mxu0
      %v6616 = vpop.f32.mrb[0].mxu0
      %v6617 = vadd.f32 %v6456, %v6616
      %v6618 = vpop.f32.mrb[0].mxu0
      %6619 = vmatprep.mubr.bf16.mxu0 0
      %6620 = vmatmul.mubr.bf16.gmra.mrb[0].mxu0 %v6344
      %v6621 = vpop.f32.mrb[0].mxu0
      %v6622 = vadd.f32 %v6461, %v6621
      %v6623 = vpop.f32.mrb[0].mxu0
      %v6624 = vpop.f32.mrb[0].mxu0
      %v6625 = vadd.f32 %v6464, %v6624
      %v6626 = vpop.f32.mrb[0].mxu0
      %6627 = vmatprep.mubr.bf16.mxu0 0
      %6628 = vmatmul.mubr.bf16.gmra.mrb[0].mxu0 %v6347
      %v6629 = vpop.f32.mrb[0].mxu0
      %v6630 = vadd.f32 %v6469, %v6629
      %v6631 = vpop.f32.mrb[0].mxu0
      %v6632 = vpop.f32.mrb[0].mxu0
      %v6633 = vadd.f32 %v6472, %v6632
      %v6634 = vpop.f32.mrb[0].mxu0
      %6635 = vmatprep.mubr.bf16.mxu0 0
      %6636 = vmatmul.mubr.bf16.gmra.mrb[0].mxu0 %v6350
      %v6637 = vpop.f32.mrb[0].mxu0
      %v6638 = vadd.f32 %v6477, %v6637
      %v6639 = vpop.f32.mrb[0].mxu0
      %v6640 = vpop.f32.mrb[0].mxu0
      %v6641 = vadd.f32 %v6480, %v6640
      %v6642 = vpop.f32.mrb[0].mxu0
      %6643 = vmatprep.mubr.bf16.mxu0 0
      %6644 = vmatmul.mubr.bf16.gmra.mrb[0].mxu0 %v6353
      %v6645 = vpop.f32.mrb[0].mxu0
      %v6646 = vadd.f32 %v6485, %v6645
      %v6647 = vpop.f32.mrb[0].mxu0
      %v6648 = vpop.f32.mrb[0].mxu0
      %v6649 = vadd.f32 %v6488, %v6648
      %v6650 = vpop.f32.mrb[0].mxu0
      %6651 = vmatprep.mubr.bf16.mxu0 0
      %6652 = vmatmul.mubr.bf16.gmra.mrb[0].mxu0 %v6356
      %v6653 = vpop.f32.mrb[0].mxu0
      %v6654 = vadd.f32 %v6493, %v6653
      %v6655 = vpop.f32.mrb[0].mxu0
      %v6656 = vpop.f32.mrb[0].mxu0
      %v6657 = vadd.f32 %v6496, %v6656
      %v6658 = vpop.f32.mrb[0].mxu0
      %6659 = vmatprep.mubr.bf16.mxu0 0
      %6660 = vmatmul.mubr.bf16.gmra.mrb[0].mxu0 %v6359
      %v6661 = vpop.f32.mrb[0].mxu0
      %v6662 = vadd.f32 %v6501, %v6661
      %v6663 = vpop.f32.mrb[0].mxu0
      %v6664 = vpop.f32.mrb[0].mxu0
      %v6665 = vadd.f32 %v6504, %v6664
      %v6666 = vpop.f32.mrb[0].mxu0
      %6667 = vmatprep.mubr.bf16.mxu0 0
      %6668 = vmatmul.mubr.bf16.gmra.mrb[0].mxu0 %v6362
      %v6669 = vpop.f32.mrb[0].mxu0
      %v6670 = vadd.f32 %v6509, %v6669
      %v6671 = vpop.f32.mrb[0].mxu0
      %v6672 = vpop.f32.mrb[0].mxu0
      %v6673 = vadd.f32 %v6512, %v6672
      %v6674 = vpop.f32.mrb[0].mxu0
      %6675 = vmatprep.mubr.bf16.mxu0 0
      %6676 = vmatmul.mubr.bf16.gmra.mrb[0].mxu0 %v6365
      %v6677 = vpop.f32.mrb[0].mxu0
      %v6678 = vadd.f32 %v6517, %v6677
      %v6679 = vpop.f32.mrb[0].mxu0
      %v6680 = vpop.f32.mrb[0].mxu0
      %v6681 = vadd.f32 %v6520, %v6680
      %v6682 = vpop.f32.mrb[0].mxu0
      %6683 = vmatprep.mubr.bf16.mxu0 0
      %6684 = vmatmul.mubr.bf16.gmra.mrb[0].mxu0 %v6368
      %v6685 = vpop.f32.mrb[0].mxu0
      %v6686 = vadd.f32 %v6525, %v6685
      %v6687 = vpop.f32.mrb[0].mxu0
      %v6688 = vpop.f32.mrb[0].mxu0
      %v6689 = vadd.f32 %v6528, %v6688
      %v6690 = vpop.f32.mrb[0].mxu0
      %6691 = vdwg.mxu0
      %v6692 = vmax.f32 %v6566, 0.0
      %v6693 = vmax.f32 %v6569, 0.0
      %v6694 = vmax.f32 %v6574, 0.0
      %v6695 = vmax.f32 %v6577, 0.0
      %v6696 = vmax.f32 %v6582, 0.0
      %v6697 = vmax.f32 %v6585, 0.0
      %v6698 = vmax.f32 %v6590, 0.0
      %v6699 = vmax.f32 %v6593, 0.0
      %v6700 = vmax.f32 %v6598, 0.0
      %v6701 = vmax.f32 %v6601, 0.0
      %v6702 = vmax.f32 %v6606, 0.0
      %v6703 = vmax.f32 %v6609, 0.0
      %v6704 = vmax.f32 %v6614, 0.0
      %v6705 = vmax.f32 %v6617, 0.0
      %v6706 = vmax.f32 %v6622, 0.0
      %v6707 = vmax.f32 %v6625, 0.0
      %v6708 = vmax.f32 %v6630, 0.0
      %v6709 = vmax.f32 %v6633, 0.0
      %v6710 = vmax.f32 %v6638, 0.0
      %v6711 = vmax.f32 %v6641, 0.0
      %v6712 = vmax.f32 %v6646, 0.0
      %v6713 = vmax.f32 %v6649, 0.0
      %v6714 = vmax.f32 %v6654, 0.0
      %v6715 = vmax.f32 %v6657, 0.0
      %v6716 = vmax.f32 %v6662, 0.0
      %v6717 = vmax.f32 %v6665, 0.0
      %v6718 = vmax.f32 %v6670, 0.0
      %v6719 = vmax.f32 %v6673, 0.0
      %v6720 = vmax.f32 %v6678, 0.0
      %v6721 = vmax.f32 %v6681, 0.0
      %v6722 = vmax.f32 %v6686, 0.0
      %v6723 = vmax.f32 %v6689, 0.0
      %v6724 = vmul.f32 %v6692, %v5430
      %v6725 = vmul.f32 %v6693, %v5430
      %v6726 = vmul.f32 %v6694, %v5430
      %v6727 = vmul.f32 %v6695, %v5430
      %v6728 = vmul.f32 %v6696, %v5430
      %v6729 = vmul.f32 %v6697, %v5430
      %v6730 = vmul.f32 %v6698, %v5430
      %v6731 = vmul.f32 %v6699, %v5430
      %v6732 = vmul.f32 %v6700, %v5430
      %v6733 = vmul.f32 %v6701, %v5430
      %v6734 = vmul.f32 %v6702, %v5430
      %v6735 = vmul.f32 %v6703, %v5430
      %v6736 = vmul.f32 %v6704, %v5430
      %v6737 = vmul.f32 %v6705, %v5430
      %v6738 = vmul.f32 %v6706, %v5430
      %v6739 = vmul.f32 %v6707, %v5430
      %v6740 = vmul.f32 %v6708, %v5430
      %v6741 = vmul.f32 %v6709, %v5430
      %v6742 = vmul.f32 %v6710, %v5430
      %v6743 = vmul.f32 %v6711, %v5430
      %v6744 = vmul.f32 %v6712, %v5430
      %v6745 = vmul.f32 %v6713, %v5430
      %v6746 = vmul.f32 %v6714, %v5430
      %v6747 = vmul.f32 %v6715, %v5430
      %v6748 = vmul.f32 %v6716, %v5430
      %v6749 = vmul.f32 %v6717, %v5430
      %v6750 = vmul.f32 %v6718, %v5430
      %v6751 = vmul.f32 %v6719, %v5430
      %v6752 = vmul.f32 %v6720, %v5430
      %v6753 = vmul.f32 %v6721, %v5430
      %v6754 = vmul.f32 %v6722, %v5430
      %v6755 = vmul.f32 %v6723, %v5430
      %v6756 = vadd.f32 %v6724, %v5469
      %v6757 = vadd.f32 %v6725, %v5469
      %v6758 = vadd.f32 %v6726, %v5469
      %v6759 = vadd.f32 %v6727, %v5469
      %v6760 = vadd.f32 %v6728, %v5469
      %v6761 = vadd.f32 %v6729, %v5469
      %v6762 = vadd.f32 %v6730, %v5469
      %v6763 = vadd.f32 %v6731, %v5469
      %v6764 = vadd.f32 %v6732, %v5469
      %v6765 = vadd.f32 %v6733, %v5469
      %v6766 = vadd.f32 %v6734, %v5469
      %v6767 = vadd.f32 %v6735, %v5469
      %v6768 = vadd.f32 %v6736, %v5469
      %v6769 = vadd.f32 %v6737, %v5469
      %v6770 = vadd.f32 %v6738, %v5469
      %v6771 = vadd.f32 %v6739, %v5469
      %v6772 = vadd.f32 %v6740, %v5469
      %v6773 = vadd.f32 %v6741, %v5469
      %v6774 = vadd.f32 %v6742, %v5469
      %v6775 = vadd.f32 %v6743, %v5469
      %v6776 = vadd.f32 %v6744, %v5469
      %v6777 = vadd.f32 %v6745, %v5469
      %v6778 = vadd.f32 %v6746, %v5469
      %v6779 = vadd.f32 %v6747, %v5469
      %v6780 = vadd.f32 %v6748, %v5469
      %v6781 = vadd.f32 %v6749, %v5469
      %v6782 = vadd.f32 %v6750, %v5469
      %v6783 = vadd.f32 %v6751, %v5469
      %v6784 = vadd.f32 %v6752, %v5469
      %v6785 = vadd.f32 %v6753, %v5469
      %v6786 = vadd.f32 %v6754, %v5469
      %v6787 = vadd.f32 %v6755, %v5469
      %v6788 = vsel %vm569, %v6756, -inf
      %v6789 = vsel %vm569, %v6757, -inf
      %v6790 = vsel %vm569, %v6758, -inf
      %v6791 = vsel %vm569, %v6759, -inf
      %v6792 = vsel %vm569, %v6760, -inf
      %v6793 = vmax.f32 %v6788, %v6792
      %v6794 = vsel %vm569, %v6761, -inf
      %v6795 = vmax.f32 %v6789, %v6794
      %v6796 = vsel %vm569, %v6762, -inf
      %v6797 = vmax.f32 %v6790, %v6796
      %v6798 = vsel %vm569, %v6763, -inf
      %v6799 = vmax.f32 %v6791, %v6798
      %v6800 = vsel %vm569, %v6764, -inf
      %v6801 = vmax.f32 %v6793, %v6800
      %v6802 = vsel %vm569, %v6765, -inf
      %v6803 = vmax.f32 %v6795, %v6802
      %v6804 = vsel %vm569, %v6766, -inf
      %v6805 = vmax.f32 %v6797, %v6804
      %v6806 = vsel %vm569, %v6767, -inf
      %v6807 = vmax.f32 %v6799, %v6806
      %v6808 = vsel %vm569, %v6768, -inf
      %v6809 = vmax.f32 %v6801, %v6808
      %v6810 = vsel %vm569, %v6769, -inf
      %v6811 = vmax.f32 %v6803, %v6810
      %v6812 = vsel %vm569, %v6770, -inf
      %v6813 = vmax.f32 %v6805, %v6812
      %v6814 = vsel %vm569, %v6771, -inf
      %v6815 = vmax.f32 %v6807, %v6814
      %v6816 = vsel %vm569, %v6772, -inf
      %v6817 = vmax.f32 %v6809, %v6816
      %v6818 = vsel %vm569, %v6773, -inf
      %v6819 = vmax.f32 %v6811, %v6818
      %v6820 = vsel %vm569, %v6774, -inf
      %v6821 = vmax.f32 %v6813, %v6820
      %v6822 = vsel %vm569, %v6775, -inf
      %v6823 = vmax.f32 %v6815, %v6822
      %v6824 = vsel %vm569, %v6776, -inf
      %v6825 = vmax.f32 %v6817, %v6824
      %v6826 = vsel %vm569, %v6777, -inf
      %v6827 = vmax.f32 %v6819, %v6826
      %v6828 = vsel %vm569, %v6778, -inf
      %v6829 = vmax.f32 %v6821, %v6828
      %v6830 = vsel %vm569, %v6779, -inf
      %v6831 = vmax.f32 %v6823, %v6830
      %v6832 = vsel %vm569, %v6780, -inf
      %v6833 = vmax.f32 %v6825, %v6832
      %v6834 = vsel %vm569, %v6781, -inf
      %v6835 = vmax.f32 %v6827, %v6834
      %v6836 = vsel %vm569, %v6782, -inf
      %v6837 = vmax.f32 %v6829, %v6836
      %v6838 = vsel %vm569, %v6783, -inf
      %v6839 = vmax.f32 %v6831, %v6838
      %v6840 = vsel %vm569, %v6784, -inf
      %v6841 = vmax.f32 %v6833, %v6840
      %v6842 = vsel %vm569, %v6785, -inf
      %v6843 = vmax.f32 %v6835, %v6842
      %v6844 = vsel %vm569, %v6786, -inf
      %v6845 = vmax.f32 %v6837, %v6844
      %v6846 = vsel %vm1397, %v6787, -inf
      %v6847 = vmax.f32 %v6839, %v6846
      %v6848 = vmax.f32 %v6841, %v6843
      %v6849 = vmax.f32 %v6845, %v6847
      %v6850 = vmax.f32 %v6848, %v6849
      %v6851 = vrot.slane %v6850, 4
      %v6852 = vmax.f32 %v6850, %v6851
      %v6853 = vrot.slane %v6852, 2
      %v6854 = vmax.f32 %v6852, %v6853
      %v6855 = vrot.slane %v6854, 1
      %v6856 = vmax.f32 %v6854, %v6855
      %v6857 = vmax.f32 %v5571, %v6856
      %v6858 = vld [vmem:[%s12] sm:$0xff]
      %v6859 = vld [vmem:[%s12 + $0x8] sm:$0xff]
      %v6860 = vld [vmem:[%s12 + $0x10] sm:$0xff]
      %v6861 = vld [vmem:[%s12 + $0x18] sm:$0xff]
      %v6862 = vld [vmem:[%s12 + $0x20] sm:$0xff]
      %v6863 = vld [vmem:[%s12 + $0x28] sm:$0xff]
      %v6864 = vld [vmem:[%s12 + $0x30] sm:$0xff]
      %v6865 = vld [vmem:[%s12 + $0x38] sm:$0xff]
      %v6866 = vld [vmem:[%s552] sm:$0x1]
      %v6867 = vld [vmem:[%s13] sm:$0x1]
      %6869 = vset.pattern.permute.xlu0 0
      %6870 = vperm.xlu0 %6869, %v6866
      %v6871 = vpop.permute.xlu0 %6870
      %v6873 = vlaneseq
      %v6874 = vshrl.u32 %v6873, 7
      %v6875 = vsub.s32 0, %v6874
      %v6876 = vrot.slane %v6871, %v6875
      %v6877 = vmul.f32 %v6876, %v6867
      %v6879 = vsel %vm569, %v6857, 0
      %6881 = vmatprep.subr.mxu0 0.0
      %6882 = vmatpush1.msra.mxu0 %v6858
      %6883 = vmatprep.subr.mxu0 0.0
      %6884 = vmatpush1.msra.mxu0 %v6859
      %6885 = vmatprep.subr.mxu0 0.0
      %6886 = vmatpush1.msra.mxu0 %v6860
      %6887 = vmatprep.subr.mxu0 0.0
      %6888 = vmatpush1.msra.mxu0 %v6861
      %6889 = vmatprep.subr.mxu0 0.0
      %6890 = vmatpush1.msra.mxu0 %v6862
      %6891 = vmatprep.subr.mxu0 0.0
      %6892 = vmatpush1.msra.mxu0 %v6863
      %6893 = vmatprep.subr.mxu0 0.0
      %6894 = vmatpush1.msra.mxu0 %v6864
      %6895 = vmatprep.subr.mxu0 0.0
      %6896 = vmatpush1.msra.mxu0 %v6865
      %6897 = vmatprep.subr.mxu0 0.0
      %6898 = vmatpush1.msra.mxu0 0.0
      %6899 = vmatprep.subr.mxu0 0.0
      %6900 = vmatpush1.msra.mxu0 0.0
      %6901 = vmatprep.subr.mxu0 0.0
      %6902 = vmatpush1.msra.mxu0 0.0
      %6903 = vmatprep.subr.mxu0 0.0
      %6904 = vmatpush1.msra.mxu0 0.0
      %6905 = vmatprep.subr.mxu0 0.0
      %6906 = vmatpush1.msra.mxu0 0.0
      %6907 = vmatprep.subr.mxu0 0.0
      %6908 = vmatpush1.msra.mxu0 0.0
      %6909 = vmatprep.subr.mxu0 0.0
      %6910 = vmatpush1.msra.mxu0 0.0
      %6911 = vmatprep.subr.mxu0 0.0
      %6912 = vmatpush1.msra.mxu0 0.0
      %6913 = vmatprep.subr.mxu0 0.0
      %6914 = vmatpush1.msra.mxu0 0.0
      %6915 = vmatprep.subr.mxu0 0.0
      %6916 = vmatpush1.msra.mxu0 0.0
      %6917 = vmatprep.subr.mxu0 0.0
      %6918 = vmatpush1.msra.mxu0 0.0
      %6919 = vmatprep.subr.mxu0 0.0
      %6920 = vmatpush1.msra.mxu0 0.0
      %6921 = vmatprep.subr.mxu0 0.0
      %6922 = vmatpush1.msra.mxu0 0.0
      %6923 = vmatprep.subr.mxu0 0.0
      %6924 = vmatpush1.msra.mxu0 0.0
      %6925 = vmatprep.subr.mxu0 0.0
      %6926 = vmatpush1.msra.mxu0 0.0
      %6927 = vmatprep.subr.mxu0 0.0
      %6928 = vmatpush1.msra.mxu0 0.0
      %6929 = vmatprep.subr.mxu0 0.0
      %6930 = vmatpush1.msra.mxu0 0.0
      %6931 = vmatprep.subr.mxu0 0.0
      %6932 = vmatpush1.msra.mxu0 0.0
      %6933 = vmatprep.subr.mxu0 0.0
      %6934 = vmatpush1.msra.mxu0 0.0
      %6935 = vmatprep.subr.mxu0 0.0
      %6936 = vmatpush1.msra.mxu0 0.0
      %6937 = vmatprep.subr.mxu0 0.0
      %6938 = vmatpush1.msra.mxu0 0.0
      %6939 = vmatprep.subr.mxu0 0.0
      %6940 = vmatpush1.msra.mxu0 0.0
      %6941 = vmatprep.subr.mxu0 0.0
      %6942 = vmatpush1.msra.mxu0 0.0
      %6943 = vmatprep.subr.mxu0 0.0
      %6944 = vmatpush1.msra.mxu0 0.0
      %6945 = vmatprep.mubr.f32.mxu0 0.0
      %6946 = vmatmul.mubr.f32.gmra.mrb[0].mxu0 %v6879
      %v6947 = vpop.f32.mrb[0].mxu0
      %v6948 = vadd.f32 %v6877, %v6947
      %v6949 = vpop.f32.mrb[0].mxu0
      %6950 = vdwg.mxu0
      %v6951 = vld [vmem:[%s14] sm:$0x1]
      %v6952 = vadd.f32 %v6948, %v6951
      %v6953 = vmax.f32 %v6952, 0.0
      %v6954 = vld [vmem:[%s15] sm:$0x1]
      %v6955 = vmul.f32 %v6953, %v6954
      %vm6956 = vcmask 516096
      %v6957 = vsel %vm6956, %v6955, 0.0
      %6958 = vadd.xlane.f32.xlu0 %v6957
      %v6959 = vpop.xlane.xlu0 %6958
      %v6960 = vld [vmem:[#allocation4] sm:$0x1]
      %v6961 = vadd.f32 %v6959, %v6960
      %vm6962 = vcmask 0
      %6963 = vst.msk [vmem:[%s560] sm:$0x1] %vm6962, %v6961
      %p6964 = scmp.lt.s32.totalorder %s30, 1
      %s6965 = scalar_select %p6964, %s30, 1
      %s6966 = scalar_lea.vmem %s17, %s6965
      // Predicated region
      $region89: #{tpu_custom_call.1} parent=87 // pred_check
        %p6967 = pneg %p415
      $region90: #{tpu_custom_call.1} parent=87 // pred_check_branch
        %6969 = sbr.rel (%p6967) target = $region92
      $region91: #{tpu_custom_call.1} parent=87 // pred_region
        _
      $region92: #{tpu_custom_call.1} parent=87 // pred_fallthru
        _
    $region88: #{tpu_custom_call.1} parent=5 // pred_fallthru
      _
    %p6970 = scmp.le.s32.totalorder 2, %s25
    // Predicated region
    $region93: #{tpu_custom_call.1} parent=5 // pred_check
      %p6971 = pneg %p6970
    $region94: #{tpu_custom_call.1} parent=5 // pred_check_branch
      %6973 = sbr.rel (%p6971) target = $region96
    $region95: #{tpu_custom_call.1} parent=5 // pred_region
      %s6974 = ssub.s32 %s25, 2
      // Predicated region
      $region97: #{tpu_custom_call.1} parent=95 // pred_check
        %p6975 = pneg %p421
      $region98: #{tpu_custom_call.1} parent=95 // pred_check_branch
        %6977 = sbr.rel (%p6975) target = $region100
      $region99: #{tpu_custom_call.1} parent=95 // pred_region
        %p6978 = scmp.lt.s32.totalorder %s31, 1
        %s6979 = scalar_select %p6978, %s31, 1
        %s6980 = scalar_lea.vmem %s17, %s6979
      $region100: #{tpu_custom_call.1} parent=95 // pred_fallthru
        _
    $region96: #{tpu_custom_call.1} parent=5 // pred_fallthru
      _
  $region6: #{tpu_custom_call.1} parent=0 // loop_footer
    %s29 = sadd.s32 1, %s25
  $region7: #{tpu_custom_call.1} parent=0 // loop_footer_branch
    %24 = sbr.rel target = $region3
  $region8: #{tpu_custom_call.1} parent=0 // loop_exit
    _

</llo_original>
